<compile_context>
chip_gen: v5e
topology: v5e:2x2
jax: 0.10.0
libtpu: 0.0.40
codegen_flags: <defaults>
</compile_context>

<pallas_src>
import jax
import jax.numpy as jnp
import numpy as np
from jax.experimental import pallas as pl
from jax.experimental.pallas import tpu as pltpu


# ------------------------------ fused kernel -------------------------------

def _fused_forward_kernel(xt_ref, m1_ref, b1_ref, ps1_ref,
                          ts2_ref, m2_ref, b2_ref, ps2_ref,
                          ts3_ref, m3_ref, b3_ref,
                          fw_ref, fb_ref, out_ref):
    f32 = jnp.float32
    bf16 = jnp.bfloat16

    def conv_relu(lhs_fn, m_ref, b_ref):
        # out[oh, col] = sum_i lhs_i[oh, :] @ M_i[:, col]  (+ bias, ReLU)
        acc = None
        for i in range(5):
            part = jnp.dot(lhs_fn(i), m_ref[i], preferred_element_type=f32)
            acc = part if acc is None else acc + part
        return jnp.maximum(acc + b_ref[...], 0.0)

    def pool_2x2(act_bf16, ps_ref):
        # H direction: select even/odd output rows via 0/1 GEMMs, take max.
        rows_even = jnp.dot(ps_ref[0], act_bf16, preferred_element_type=f32)
        rows_odd = jnp.dot(ps_ref[1], act_bf16, preferred_element_type=f32)
        m = jnp.maximum(rows_even, rows_odd)
        # W direction: columns are ordered [even-ow | odd-ow] -> max of halves.
        half = m.shape[1] // 2
        return jnp.maximum(m[:, :half], m[:, half:]).astype(bf16)

    # conv1 + pool1  (input tap slabs prebuilt by the wrapper)
    a1 = conv_relu(lambda i: xt_ref[0, i], m1_ref, b1_ref)          # (32, 512) f32
    p1 = pool_2x2(a1.astype(bf16), ps1_ref)                          # (16, 256) bf16

    # conv2 + pool2  (row taps gathered from p1 via 0/1 selection GEMMs)
    a2 = conv_relu(
        lambda i: jnp.dot(ts2_ref[i], p1, preferred_element_type=f32).astype(bf16),
        m2_ref, b2_ref)                                              # (8, 512) f32
    p2 = pool_2x2(a2.astype(bf16), ps2_ref)                          # (4, 256) bf16

    # conv3
    a3 = conv_relu(
        lambda i: jnp.dot(ts3_ref[i], p2, preferred_element_type=f32).astype(bf16),
        m3_ref, b3_ref)                                              # (2, 16) f32

    # fc1 (weights pre-permuted to match torch.flatten order)
    fc = (jnp.dot(a3[0:1, :], fw_ref[0], preferred_element_type=f32)
          + jnp.dot(a3[1:2, :], fw_ref[1], preferred_element_type=f32)
          + fb_ref[...])                                             # (1, 8)
    out_ref[0] = fc.astype(out_ref.dtype)


# ------------------------- host-side weight prep ---------------------------

def prepare_params(params):
    """Fold im2col / stride / padding / pooling layout into constant matrices."""

    def toeplitz(wt, win):
        # wt: (Cout, Cin, 5, 5) torch OIHW.  Returns (5, win*cin, wout*cout)
        # with output columns ordered [even-ow | odd-ow], co minor.
        cout, cin, kh, kw = wt.shape
        wout = win // 2
        half = (wout // 2) * cout
        m = np.zeros((kh, win * cin, wout * cout), np.float32)
        for i in range(kh):
            for ow in range(wout):
                base = (ow % 2) * half + (ow // 2) * cout
                for j in range(kw):
                    wi = 2 * ow + j - 2            # unpadded input column
                    if 0 <= wi < win:
                        m[i, wi * cin:(wi + 1) * cin, base:base + cout] = wt[:, :, i, j].T
        return m

    def bias_cols(b, wout):
        return np.tile(b, wout).reshape(1, -1)

    def pool_sel(hout):
        s = np.zeros((2, hout // 2, hout), np.float32)
        for p in range(hout // 2):
            s[0, p, 2 * p] = 1.0
            s[1, p, 2 * p + 1] = 1.0
        return s

    def tap_sel(hin):
        # S[i, oh, h] = 1  iff  h == 2*oh + i - 2  (pad rows -> all-zero rows)
        hout = hin // 2
        s = np.zeros((5, hout, hin), np.float32)
        for i in range(5):
            for oh in range(hout):
                h = 2 * oh + i - 2
                if 0 <= h < hin:
                    s[i, oh, h] = 1.0
        return s

    w1 = np.asarray(params["conv1_w"], np.float32)
    b1 = np.asarray(params["conv1_b"], np.float32)
    w2 = np.asarray(params["conv2_w"], np.float32)
    b2 = np.asarray(params["conv2_b"], np.float32)
    w3 = np.asarray(params["conv3_w"], np.float32)
    b3 = np.asarray(params["conv3_b"], np.float32)
    wf = np.asarray(params["fc1_w"], np.float32)
    bf = np.asarray(params["fc1_b"], np.float32)

    # fc1 weights permuted so they consume conv3's (oh, ow*8+co) layout and
    # reproduce torch.flatten(NCHW) -> index co*4 + oh*2 + ow.
    fw = np.zeros((2, 16, 8), np.float32)
    for a in range(2):
        for ow in range(2):
            for co in range(8):
                fw[a, ow * 8 + co, :] = wf[:, co * 4 + a * 2 + ow]

    bf16 = jnp.bfloat16
    return {
        "m1": jnp.asarray(toeplitz(w1, 64), bf16),       # (5, 192, 512)
        "b1": jnp.asarray(bias_cols(b1, 32), jnp.float32),
        "ps1": jnp.asarray(pool_sel(32), bf16),          # (2, 16, 32)
        "ts2": jnp.asarray(tap_sel(16), bf16),           # (5, 8, 16)
        "m2": jnp.asarray(toeplitz(w2, 16), bf16),       # (5, 256, 512)
        "b2": jnp.asarray(bias_cols(b2, 8), jnp.float32),
        "ps2": jnp.asarray(pool_sel(8), bf16),           # (2, 4, 8)
        "ts3": jnp.asarray(tap_sel(4), bf16),            # (5, 2, 4)
        "m3": jnp.asarray(toeplitz(w3, 4), bf16),        # (5, 256, 16)
        "b3": jnp.asarray(bias_cols(b3, 2), jnp.float32),
        "fw": jnp.asarray(fw, jnp.float32),              # (2, 16, 8)
        "fb": jnp.asarray(bf.reshape(1, 8), jnp.float32),
    }


# --------------------------------- forward ----------------------------------

@jax.jit
def forward(prep, x_nchw):
    N = x_nchw.shape[0]
    # Build conv1's 5 row-tap slabs (N, 5, 32, 192): slab i row oh = padded row
    # 2*oh+i of the image, lanes = w*3 + c  (cheap XLA glue, done once).
    x = jnp.transpose(x_nchw, (0, 2, 3, 1)).reshape(N, 64, 64 * 3)
    xpad = jnp.pad(x, ((0, 0), (2, 2), (0, 0)))                    # (N, 68, 192)
    xt = jnp.stack([xpad[:, i:i + 64:2, :] for i in range(5)],
                   axis=1).astype(jnp.bfloat16)                    # (N, 5, 32, 192)

    def full(shape):
        return pl.BlockSpec(shape, lambda n, _s=len(shape): (0,) * _s)

    out = pl.pallas_call(
        _fused_forward_kernel,
        out_shape=jax.ShapeDtypeStruct((N, 1, 8), jnp.float32),
        grid=(N,),
        in_specs=[
            pl.BlockSpec((1, 5, 32, 192), lambda n: (n, 0, 0, 0)),  # xt
            full((5, 192, 512)), full((1, 512)), full((2, 16, 32)),
            full((5, 8, 16)), full((5, 256, 512)), full((1, 512)), full((2, 4, 8)),
            full((5, 2, 4)), full((5, 256, 16)), full((1, 16)),
            full((2, 16, 8)), full((1, 8)),
        ],
        out_specs=pl.BlockSpec((1, 1, 8), lambda n: (n, 0, 0)),
        compiler_params=pltpu.CompilerParams(
            dimension_semantics=("parallel",)),
    )(xt, prep["m1"], prep["b1"], prep["ps1"],
      prep["ts2"], prep["m2"], prep["b2"], prep["ps2"],
      prep["ts3"], prep["m3"], prep["b3"],
      prep["fw"], prep["fb"])
    return out.reshape(N, 8)


# ------------------------------ params / ref ---------------------------------

def init_params(key):
    ks = jax.random.split(key, 4)

    def conv_w(k, cout, cin):
        std = 1.0 / float(np.sqrt(5 * 5 * cin))
        return jax.random.normal(k, (cout, cin, 5, 5), jnp.float32) * std

    return {
        "conv1_w": conv_w(ks[0], 16, 3),
        "conv1_b": jnp.zeros((16,), jnp.float32),
        "conv2_w": conv_w(ks[1], 64, 16),
        "conv2_b": jnp.zeros((64,), jnp.float32),
        "conv3_w": conv_w(ks[2], 8, 64),
        "conv3_b": jnp.zeros((8,), jnp.float32),
        "fc1_w": jax.random.normal(ks[3], (8, 32), jnp.float32) * (1.0 / 32.0),
        "fc1_b": jnp.zeros((8,), jnp.float32),
    }


def _reference_forward(params, x_nchw):
    """Pure-JAX (XLA) reference for correctness checking."""
    dn = ("NCHW", "OIHW", "NCHW")

    def conv(x, w, b):
        y = jax.lax.conv_general_dilated(x, w, (2, 2), [(2, 2), (2, 2)],
                                         dimension_numbers=dn)
        return jax.nn.relu(y + b[None, :, None, None])

    def pool(x):
        return jax.lax.reduce_window(x, -jnp.inf, jax.lax.max,
                                     (1, 1, 2, 2), (1, 1, 2, 2), "VALID")

    x = pool(conv(x_nchw, params["conv1_w"], params["conv1_b"]))
    x = pool(conv(x, params["conv2_w"], params["conv2_b"]))
    x = conv(x, params["conv3_w"], params["conv3_b"])
    x = x.reshape(x.shape[0], -1)
    return x @ params["fc1_w"].T + params["fc1_b"]


# ----------------------------------- main ------------------------------------

if __name__ == "__main__":
    key = jax.random.PRNGKey(0)
    k_param, k_x = jax.random.split(key)
    params = init_params(k_param)
    prep = prepare_params(params)
    # fc1 expects flatten size 32 = 8ch * 2 * 2  =>  input spatial 64x64
    x = jax.random.normal(k_x, (2, 3, 64, 64), jnp.float32)

    out = jax.block_until_ready(forward(prep, x))
    assert out.shape == (2, 8) and out.dtype == jnp.float32

    ref = jax.block_until_ready(_reference_forward(params, x))
    np.testing.assert_allclose(np.asarray(out), np.asarray(ref),
                               rtol=2e-2, atol=2e-2)

    print("KERNEL_OK")
</pallas_src>

<mosaic_0001>
module attributes {stable_mosaic.version = 11 : i64} {
  func.func @_fused_forward_kernel(%arg0: i32, %arg1: memref<1x5x32x192xbf16, #tpu.memory_space<vmem>>, %arg2: memref<5x192x512xbf16, #tpu.memory_space<vmem>>, %arg3: memref<1x512xf32, #tpu.memory_space<vmem>>, %arg4: memref<2x16x32xbf16, #tpu.memory_space<vmem>>, %arg5: memref<5x8x16xbf16, #tpu.memory_space<vmem>>, %arg6: memref<5x256x512xbf16, #tpu.memory_space<vmem>>, %arg7: memref<1x512xf32, #tpu.memory_space<vmem>>, %arg8: memref<2x4x8xbf16, #tpu.memory_space<vmem>>, %arg9: memref<5x2x4xbf16, #tpu.memory_space<vmem>>, %arg10: memref<5x256x16xbf16, #tpu.memory_space<vmem>>, %arg11: memref<1x16xf32, #tpu.memory_space<vmem>>, %arg12: memref<2x16x8xf32, #tpu.memory_space<vmem>>, %arg13: memref<1x8xf32, #tpu.memory_space<vmem>>, %arg14: memref<1x1x8xf32, #tpu.memory_space<vmem>>) attributes {dimension_semantics = [#tpu.dimension_semantics<parallel>], iteration_bounds = array<i64: 2>, scalar_prefetch = 0 : i64, scratch_operands = 0 : i64, tpu.core_type = #tpu.core_type<tc>, window_params = [{transform_indices = @transform_0, window_bounds = array<i64: 1, 5, 32, 192>}, {pipeline_mode = #tpu.pipeline_mode<synchronous>, transform_indices = @transform_1, window_bounds = array<i64: 5, 192, 512>}, {pipeline_mode = #tpu.pipeline_mode<synchronous>, transform_indices = @transform_2, window_bounds = array<i64: 1, 512>}, {pipeline_mode = #tpu.pipeline_mode<synchronous>, transform_indices = @transform_3, window_bounds = array<i64: 2, 16, 32>}, {pipeline_mode = #tpu.pipeline_mode<synchronous>, transform_indices = @transform_4, window_bounds = array<i64: 5, 8, 16>}, {pipeline_mode = #tpu.pipeline_mode<synchronous>, transform_indices = @transform_5, window_bounds = array<i64: 5, 256, 512>}, {pipeline_mode = #tpu.pipeline_mode<synchronous>, transform_indices = @transform_6, window_bounds = array<i64: 1, 512>}, {pipeline_mode = #tpu.pipeline_mode<synchronous>, transform_indices = @transform_7, window_bounds = array<i64: 2, 4, 8>}, {pipeline_mode = #tpu.pipeline_mode<synchronous>, transform_indices = @transform_8, window_bounds = array<i64: 5, 2, 4>}, {pipeline_mode = #tpu.pipeline_mode<synchronous>, transform_indices = @transform_9, window_bounds = array<i64: 5, 256, 16>}, {pipeline_mode = #tpu.pipeline_mode<synchronous>, transform_indices = @transform_10, window_bounds = array<i64: 1, 16>}, {pipeline_mode = #tpu.pipeline_mode<synchronous>, transform_indices = @transform_11, window_bounds = array<i64: 2, 16, 8>}, {pipeline_mode = #tpu.pipeline_mode<synchronous>, transform_indices = @transform_12, window_bounds = array<i64: 1, 8>}, {transform_indices = @transform_13, window_bounds = array<i64: 1, 1, 8>}]} {
    %c0 = arith.constant 0 : index
    %c0_0 = arith.constant 0 : index
    %c0_1 = arith.constant 0 : index
    %c0_2 = arith.constant 0 : index
    %0 = vector.load %arg1[%c0, %c0_0, %c0_1, %c0_2] : memref<1x5x32x192xbf16, #tpu.memory_space<vmem>>, vector<1x1x32x192xbf16>
    %1 = vector.shape_cast %0 : vector<1x1x32x192xbf16> to vector<32x192xbf16>
    %c0_3 = arith.constant 0 : index
    %c0_4 = arith.constant 0 : index
    %c0_5 = arith.constant 0 : index
    %2 = vector.load %arg2[%c0_3, %c0_4, %c0_5] : memref<5x192x512xbf16, #tpu.memory_space<vmem>>, vector<1x192x512xbf16>
    %3 = vector.shape_cast %2 : vector<1x192x512xbf16> to vector<192x512xbf16>
    %cst = arith.constant dense<0.000000e+00> : vector<32x512xf32>
    %4 = tpu.matmul %1, %3, %cst {dimension_numbers = #tpu.dot_dimension_numbers<[1], [0], [0], [1], [0, 0, 1, 1], [], []>} : vector<32x192xbf16>, vector<192x512xbf16>, vector<32x512xf32> -> vector<32x512xf32>
    %c0_6 = arith.constant 0 : index
    %c1 = arith.constant 1 : index
    %c0_7 = arith.constant 0 : index
    %c0_8 = arith.constant 0 : index
    %5 = vector.load %arg1[%c0_6, %c1, %c0_7, %c0_8] : memref<1x5x32x192xbf16, #tpu.memory_space<vmem>>, vector<1x1x32x192xbf16>
    %6 = vector.shape_cast %5 : vector<1x1x32x192xbf16> to vector<32x192xbf16>
    %c1_9 = arith.constant 1 : index
    %c0_10 = arith.constant 0 : index
    %c0_11 = arith.constant 0 : index
    %7 = vector.load %arg2[%c1_9, %c0_10, %c0_11] : memref<5x192x512xbf16, #tpu.memory_space<vmem>>, vector<1x192x512xbf16>
    %8 = vector.shape_cast %7 : vector<1x192x512xbf16> to vector<192x512xbf16>
    %cst_12 = arith.constant dense<0.000000e+00> : vector<32x512xf32>
    %9 = tpu.matmul %6, %8, %cst_12 {dimension_numbers = #tpu.dot_dimension_numbers<[1], [0], [0], [1], [0, 0, 1, 1], [], []>} : vector<32x192xbf16>, vector<192x512xbf16>, vector<32x512xf32> -> vector<32x512xf32>
    %10 = arith.addf %4, %9 : vector<32x512xf32>
    %c0_13 = arith.constant 0 : index
    %c2 = arith.constant 2 : index
    %c0_14 = arith.constant 0 : index
    %c0_15 = arith.constant 0 : index
    %11 = vector.load %arg1[%c0_13, %c2, %c0_14, %c0_15] : memref<1x5x32x192xbf16, #tpu.memory_space<vmem>>, vector<1x1x32x192xbf16>
    %12 = vector.shape_cast %11 : vector<1x1x32x192xbf16> to vector<32x192xbf16>
    %c2_16 = arith.constant 2 : index
    %c0_17 = arith.constant 0 : index
    %c0_18 = arith.constant 0 : index
    %13 = vector.load %arg2[%c2_16, %c0_17, %c0_18] : memref<5x192x512xbf16, #tpu.memory_space<vmem>>, vector<1x192x512xbf16>
    %14 = vector.shape_cast %13 : vector<1x192x512xbf16> to vector<192x512xbf16>
    %cst_19 = arith.constant dense<0.000000e+00> : vector<32x512xf32>
    %15 = tpu.matmul %12, %14, %cst_19 {dimension_numbers = #tpu.dot_dimension_numbers<[1], [0], [0], [1], [0, 0, 1, 1], [], []>} : vector<32x192xbf16>, vector<192x512xbf16>, vector<32x512xf32> -> vector<32x512xf32>
    %16 = arith.addf %10, %15 : vector<32x512xf32>
    %c0_20 = arith.constant 0 : index
    %c3 = arith.constant 3 : index
    %c0_21 = arith.constant 0 : index
    %c0_22 = arith.constant 0 : index
    %17 = vector.load %arg1[%c0_20, %c3, %c0_21, %c0_22] : memref<1x5x32x192xbf16, #tpu.memory_space<vmem>>, vector<1x1x32x192xbf16>
    %18 = vector.shape_cast %17 : vector<1x1x32x192xbf16> to vector<32x192xbf16>
    %c3_23 = arith.constant 3 : index
    %c0_24 = arith.constant 0 : index
    %c0_25 = arith.constant 0 : index
    %19 = vector.load %arg2[%c3_23, %c0_24, %c0_25] : memref<5x192x512xbf16, #tpu.memory_space<vmem>>, vector<1x192x512xbf16>
    %20 = vector.shape_cast %19 : vector<1x192x512xbf16> to vector<192x512xbf16>
    %cst_26 = arith.constant dense<0.000000e+00> : vector<32x512xf32>
    %21 = tpu.matmul %18, %20, %cst_26 {dimension_numbers = #tpu.dot_dimension_numbers<[1], [0], [0], [1], [0, 0, 1, 1], [], []>} : vector<32x192xbf16>, vector<192x512xbf16>, vector<32x512xf32> -> vector<32x512xf32>
    %22 = arith.addf %16, %21 : vector<32x512xf32>
    %c0_27 = arith.constant 0 : index
    %c4 = arith.constant 4 : index
    %c0_28 = arith.constant 0 : index
    %c0_29 = arith.constant 0 : index
    %23 = vector.load %arg1[%c0_27, %c4, %c0_28, %c0_29] : memref<1x5x32x192xbf16, #tpu.memory_space<vmem>>, vector<1x1x32x192xbf16>
    %24 = vector.shape_cast %23 : vector<1x1x32x192xbf16> to vector<32x192xbf16>
    %c4_30 = arith.constant 4 : index
    %c0_31 = arith.constant 0 : index
    %c0_32 = arith.constant 0 : index
    %25 = vector.load %arg2[%c4_30, %c0_31, %c0_32] : memref<5x192x512xbf16, #tpu.memory_space<vmem>>, vector<1x192x512xbf16>
    %26 = vector.shape_cast %25 : vector<1x192x512xbf16> to vector<192x512xbf16>
    %cst_33 = arith.constant dense<0.000000e+00> : vector<32x512xf32>
    %27 = tpu.matmul %24, %26, %cst_33 {dimension_numbers = #tpu.dot_dimension_numbers<[1], [0], [0], [1], [0, 0, 1, 1], [], []>} : vector<32x192xbf16>, vector<192x512xbf16>, vector<32x512xf32> -> vector<32x512xf32>
    %28 = arith.addf %22, %27 : vector<32x512xf32>
    %c0_34 = arith.constant 0 : index
    %c0_35 = arith.constant 0 : index
    %29 = vector.load %arg3[%c0_34, %c0_35] : memref<1x512xf32, #tpu.memory_space<vmem>>, vector<1x512xf32>
    %30 = vector.broadcast %29 : vector<1x512xf32> to vector<32x512xf32>
    %31 = arith.addf %28, %30 : vector<32x512xf32>
    %cst_36 = arith.constant 0.000000e+00 : f32
    %32 = vector.broadcast %cst_36 : f32 to vector<32x512xf32>
    %33 = arith.maximumf %31, %32 : vector<32x512xf32>
    %34 = arith.truncf %33 : vector<32x512xf32> to vector<32x512xbf16>
    %c0_37 = arith.constant 0 : index
    %c0_38 = arith.constant 0 : index
    %c0_39 = arith.constant 0 : index
    %35 = vector.load %arg4[%c0_37, %c0_38, %c0_39] : memref<2x16x32xbf16, #tpu.memory_space<vmem>>, vector<1x16x32xbf16>
    %36 = vector.shape_cast %35 : vector<1x16x32xbf16> to vector<16x32xbf16>
    %cst_40 = arith.constant dense<0.000000e+00> : vector<16x512xf32>
    %37 = tpu.matmul %36, %34, %cst_40 {dimension_numbers = #tpu.dot_dimension_numbers<[1], [0], [0], [1], [0, 0, 1, 1], [], []>} : vector<16x32xbf16>, vector<32x512xbf16>, vector<16x512xf32> -> vector<16x512xf32>
    %c1_41 = arith.constant 1 : index
    %c0_42 = arith.constant 0 : index
    %c0_43 = arith.constant 0 : index
    %38 = vector.load %arg4[%c1_41, %c0_42, %c0_43] : memref<2x16x32xbf16, #tpu.memory_space<vmem>>, vector<1x16x32xbf16>
    %39 = vector.shape_cast %38 : vector<1x16x32xbf16> to vector<16x32xbf16>
    %cst_44 = arith.constant dense<0.000000e+00> : vector<16x512xf32>
    %40 = tpu.matmul %39, %34, %cst_44 {dimension_numbers = #tpu.dot_dimension_numbers<[1], [0], [0], [1], [0, 0, 1, 1], [], []>} : vector<16x32xbf16>, vector<32x512xbf16>, vector<16x512xf32> -> vector<16x512xf32>
    %41 = arith.maximumf %37, %40 : vector<16x512xf32>
    %42 = vector.extract_strided_slice %41 {offsets = [0, 0], sizes = [16, 256], strides = [1, 1]} : vector<16x512xf32> to vector<16x256xf32>
    %43 = vector.extract_strided_slice %41 {offsets = [0, 256], sizes = [16, 256], strides = [1, 1]} : vector<16x512xf32> to vector<16x256xf32>
    %44 = arith.maximumf %42, %43 : vector<16x256xf32>
    %45 = arith.truncf %44 : vector<16x256xf32> to vector<16x256xbf16>
    %c0_45 = arith.constant 0 : index
    %c0_46 = arith.constant 0 : index
    %c0_47 = arith.constant 0 : index
    %46 = vector.load %arg5[%c0_45, %c0_46, %c0_47] : memref<5x8x16xbf16, #tpu.memory_space<vmem>>, vector<1x8x16xbf16>
    %47 = vector.shape_cast %46 : vector<1x8x16xbf16> to vector<8x16xbf16>
    %cst_48 = arith.constant dense<0.000000e+00> : vector<8x256xf32>
    %48 = tpu.matmul %47, %45, %cst_48 {dimension_numbers = #tpu.dot_dimension_numbers<[1], [0], [0], [1], [0, 0, 1, 1], [], []>} : vector<8x16xbf16>, vector<16x256xbf16>, vector<8x256xf32> -> vector<8x256xf32>
    %49 = arith.truncf %48 : vector<8x256xf32> to vector<8x256xbf16>
    %c0_49 = arith.constant 0 : index
    %c0_50 = arith.constant 0 : index
    %c0_51 = arith.constant 0 : index
    %50 = vector.load %arg6[%c0_49, %c0_50, %c0_51] : memref<5x256x512xbf16, #tpu.memory_space<vmem>>, vector<1x256x512xbf16>
    %51 = vector.shape_cast %50 : vector<1x256x512xbf16> to vector<256x512xbf16>
    %cst_52 = arith.constant dense<0.000000e+00> : vector<8x512xf32>
    %52 = tpu.matmul %49, %51, %cst_52 {dimension_numbers = #tpu.dot_dimension_numbers<[1], [0], [0], [1], [0, 0, 1, 1], [], []>} : vector<8x256xbf16>, vector<256x512xbf16>, vector<8x512xf32> -> vector<8x512xf32>
    %c1_53 = arith.constant 1 : index
    %c0_54 = arith.constant 0 : index
    %c0_55 = arith.constant 0 : index
    %53 = vector.load %arg5[%c1_53, %c0_54, %c0_55] : memref<5x8x16xbf16, #tpu.memory_space<vmem>>, vector<1x8x16xbf16>
    %54 = vector.shape_cast %53 : vector<1x8x16xbf16> to vector<8x16xbf16>
    %cst_56 = arith.constant dense<0.000000e+00> : vector<8x256xf32>
    %55 = tpu.matmul %54, %45, %cst_56 {dimension_numbers = #tpu.dot_dimension_numbers<[1], [0], [0], [1], [0, 0, 1, 1], [], []>} : vector<8x16xbf16>, vector<16x256xbf16>, vector<8x256xf32> -> vector<8x256xf32>
    %56 = arith.truncf %55 : vector<8x256xf32> to vector<8x256xbf16>
    %c1_57 = arith.constant 1 : index
    %c0_58 = arith.constant 0 : index
    %c0_59 = arith.constant 0 : index
    %57 = vector.load %arg6[%c1_57, %c0_58, %c0_59] : memref<5x256x512xbf16, #tpu.memory_space<vmem>>, vector<1x256x512xbf16>
    %58 = vector.shape_cast %57 : vector<1x256x512xbf16> to vector<256x512xbf16>
    %cst_60 = arith.constant dense<0.000000e+00> : vector<8x512xf32>
    %59 = tpu.matmul %56, %58, %cst_60 {dimension_numbers = #tpu.dot_dimension_numbers<[1], [0], [0], [1], [0, 0, 1, 1], [], []>} : vector<8x256xbf16>, vector<256x512xbf16>, vector<8x512xf32> -> vector<8x512xf32>
    %60 = arith.addf %52, %59 : vector<8x512xf32>
    %c2_61 = arith.constant 2 : index
    %c0_62 = arith.constant 0 : index
    %c0_63 = arith.constant 0 : index
    %61 = vector.load %arg5[%c2_61, %c0_62, %c0_63] : memref<5x8x16xbf16, #tpu.memory_space<vmem>>, vector<1x8x16xbf16>
    %62 = vector.shape_cast %61 : vector<1x8x16xbf16> to vector<8x16xbf16>
    %cst_64 = arith.constant dense<0.000000e+00> : vector<8x256xf32>
    %63 = tpu.matmul %62, %45, %cst_64 {dimension_numbers = #tpu.dot_dimension_numbers<[1], [0], [0], [1], [0, 0, 1, 1], [], []>} : vector<8x16xbf16>, vector<16x256xbf16>, vector<8x256xf32> -> vector<8x256xf32>
    %64 = arith.truncf %63 : vector<8x256xf32> to vector<8x256xbf16>
    %c2_65 = arith.constant 2 : index
    %c0_66 = arith.constant 0 : index
    %c0_67 = arith.constant 0 : index
    %65 = vector.load %arg6[%c2_65, %c0_66, %c0_67] : memref<5x256x512xbf16, #tpu.memory_space<vmem>>, vector<1x256x512xbf16>
    %66 = vector.shape_cast %65 : vector<1x256x512xbf16> to vector<256x512xbf16>
    %cst_68 = arith.constant dense<0.000000e+00> : vector<8x512xf32>
    %67 = tpu.matmul %64, %66, %cst_68 {dimension_numbers = #tpu.dot_dimension_numbers<[1], [0], [0], [1], [0, 0, 1, 1], [], []>} : vector<8x256xbf16>, vector<256x512xbf16>, vector<8x512xf32> -> vector<8x512xf32>
    %68 = arith.addf %60, %67 : vector<8x512xf32>
    %c3_69 = arith.constant 3 : index
    %c0_70 = arith.constant 0 : index
    %c0_71 = arith.constant 0 : index
    %69 = vector.load %arg5[%c3_69, %c0_70, %c0_71] : memref<5x8x16xbf16, #tpu.memory_space<vmem>>, vector<1x8x16xbf16>
    %70 = vector.shape_cast %69 : vector<1x8x16xbf16> to vector<8x16xbf16>
    %cst_72 = arith.constant dense<0.000000e+00> : vector<8x256xf32>
    %71 = tpu.matmul %70, %45, %cst_72 {dimension_numbers = #tpu.dot_dimension_numbers<[1], [0], [0], [1], [0, 0, 1, 1], [], []>} : vector<8x16xbf16>, vector<16x256xbf16>, vector<8x256xf32> -> vector<8x256xf32>
    %72 = arith.truncf %71 : vector<8x256xf32> to vector<8x256xbf16>
    %c3_73 = arith.constant 3 : index
    %c0_74 = arith.constant 0 : index
    %c0_75 = arith.constant 0 : index
    %73 = vector.load %arg6[%c3_73, %c0_74, %c0_75] : memref<5x256x512xbf16, #tpu.memory_space<vmem>>, vector<1x256x512xbf16>
    %74 = vector.shape_cast %73 : vector<1x256x512xbf16> to vector<256x512xbf16>
    %cst_76 = arith.constant dense<0.000000e+00> : vector<8x512xf32>
    %75 = tpu.matmul %72, %74, %cst_76 {dimension_numbers = #tpu.dot_dimension_numbers<[1], [0], [0], [1], [0, 0, 1, 1], [], []>} : vector<8x256xbf16>, vector<256x512xbf16>, vector<8x512xf32> -> vector<8x512xf32>
    %76 = arith.addf %68, %75 : vector<8x512xf32>
    %c4_77 = arith.constant 4 : index
    %c0_78 = arith.constant 0 : index
    %c0_79 = arith.constant 0 : index
    %77 = vector.load %arg5[%c4_77, %c0_78, %c0_79] : memref<5x8x16xbf16, #tpu.memory_space<vmem>>, vector<1x8x16xbf16>
    %78 = vector.shape_cast %77 : vector<1x8x16xbf16> to vector<8x16xbf16>
    %cst_80 = arith.constant dense<0.000000e+00> : vector<8x256xf32>
    %79 = tpu.matmul %78, %45, %cst_80 {dimension_numbers = #tpu.dot_dimension_numbers<[1], [0], [0], [1], [0, 0, 1, 1], [], []>} : vector<8x16xbf16>, vector<16x256xbf16>, vector<8x256xf32> -> vector<8x256xf32>
    %80 = arith.truncf %79 : vector<8x256xf32> to vector<8x256xbf16>
    %c4_81 = arith.constant 4 : index
    %c0_82 = arith.constant 0 : index
    %c0_83 = arith.constant 0 : index
    %81 = vector.load %arg6[%c4_81, %c0_82, %c0_83] : memref<5x256x512xbf16, #tpu.memory_space<vmem>>, vector<1x256x512xbf16>
    %82 = vector.shape_cast %81 : vector<1x256x512xbf16> to vector<256x512xbf16>
    %cst_84 = arith.constant dense<0.000000e+00> : vector<8x512xf32>
    %83 = tpu.matmul %80, %82, %cst_84 {dimension_numbers = #tpu.dot_dimension_numbers<[1], [0], [0], [1], [0, 0, 1, 1], [], []>} : vector<8x256xbf16>, vector<256x512xbf16>, vector<8x512xf32> -> vector<8x512xf32>
    %84 = arith.addf %76, %83 : vector<8x512xf32>
    %c0_85 = arith.constant 0 : index
    %c0_86 = arith.constant 0 : index
    %85 = vector.load %arg7[%c0_85, %c0_86] : memref<1x512xf32, #tpu.memory_space<vmem>>, vector<1x512xf32>
    %86 = vector.broadcast %85 : vector<1x512xf32> to vector<8x512xf32>
    %87 = arith.addf %84, %86 : vector<8x512xf32>
    %cst_87 = arith.constant 0.000000e+00 : f32
    %88 = vector.broadcast %cst_87 : f32 to vector<8x512xf32>
    %89 = arith.maximumf %87, %88 : vector<8x512xf32>
    %90 = arith.truncf %89 : vector<8x512xf32> to vector<8x512xbf16>
    %c0_88 = arith.constant 0 : index
    %c0_89 = arith.constant 0 : index
    %c0_90 = arith.constant 0 : index
    %91 = vector.load %arg8[%c0_88, %c0_89, %c0_90] : memref<2x4x8xbf16, #tpu.memory_space<vmem>>, vector<1x4x8xbf16>
    %92 = vector.shape_cast %91 : vector<1x4x8xbf16> to vector<4x8xbf16>
    %cst_91 = arith.constant dense<0.000000e+00> : vector<4x512xf32>
    %93 = tpu.matmul %92, %90, %cst_91 {dimension_numbers = #tpu.dot_dimension_numbers<[1], [0], [0], [1], [0, 0, 1, 1], [], []>} : vector<4x8xbf16>, vector<8x512xbf16>, vector<4x512xf32> -> vector<4x512xf32>
    %c1_92 = arith.constant 1 : index
    %c0_93 = arith.constant 0 : index
    %c0_94 = arith.constant 0 : index
    %94 = vector.load %arg8[%c1_92, %c0_93, %c0_94] : memref<2x4x8xbf16, #tpu.memory_space<vmem>>, vector<1x4x8xbf16>
    %95 = vector.shape_cast %94 : vector<1x4x8xbf16> to vector<4x8xbf16>
    %cst_95 = arith.constant dense<0.000000e+00> : vector<4x512xf32>
    %96 = tpu.matmul %95, %90, %cst_95 {dimension_numbers = #tpu.dot_dimension_numbers<[1], [0], [0], [1], [0, 0, 1, 1], [], []>} : vector<4x8xbf16>, vector<8x512xbf16>, vector<4x512xf32> -> vector<4x512xf32>
    %97 = arith.maximumf %93, %96 : vector<4x512xf32>
    %98 = vector.extract_strided_slice %97 {offsets = [0, 0], sizes = [4, 256], strides = [1, 1]} : vector<4x512xf32> to vector<4x256xf32>
    %99 = vector.extract_strided_slice %97 {offsets = [0, 256], sizes = [4, 256], strides = [1, 1]} : vector<4x512xf32> to vector<4x256xf32>
    %100 = arith.maximumf %98, %99 : vector<4x256xf32>
    %101 = arith.truncf %100 : vector<4x256xf32> to vector<4x256xbf16>
    %c0_96 = arith.constant 0 : index
    %c0_97 = arith.constant 0 : index
    %c0_98 = arith.constant 0 : index
    %102 = vector.load %arg9[%c0_96, %c0_97, %c0_98] : memref<5x2x4xbf16, #tpu.memory_space<vmem>>, vector<1x2x4xbf16>
    %103 = vector.shape_cast %102 : vector<1x2x4xbf16> to vector<2x4xbf16>
    %cst_99 = arith.constant dense<0.000000e+00> : vector<2x256xf32>
    %104 = tpu.matmul %103, %101, %cst_99 {dimension_numbers = #tpu.dot_dimension_numbers<[1], [0], [0], [1], [0, 0, 1, 1], [], []>} : vector<2x4xbf16>, vector<4x256xbf16>, vector<2x256xf32> -> vector<2x256xf32>
    %105 = arith.truncf %104 : vector<2x256xf32> to vector<2x256xbf16>
    %c0_100 = arith.constant 0 : index
    %c0_101 = arith.constant 0 : index
    %c0_102 = arith.constant 0 : index
    %106 = vector.load %arg10[%c0_100, %c0_101, %c0_102] : memref<5x256x16xbf16, #tpu.memory_space<vmem>>, vector<1x256x16xbf16>
    %107 = vector.shape_cast %106 : vector<1x256x16xbf16> to vector<256x16xbf16>
    %cst_103 = arith.constant dense<0.000000e+00> : vector<2x16xf32>
    %108 = tpu.matmul %105, %107, %cst_103 {dimension_numbers = #tpu.dot_dimension_numbers<[1], [0], [0], [1], [0, 0, 1, 1], [], []>} : vector<2x256xbf16>, vector<256x16xbf16>, vector<2x16xf32> -> vector<2x16xf32>
    %c1_104 = arith.constant 1 : index
    %c0_105 = arith.constant 0 : index
    %c0_106 = arith.constant 0 : index
    %109 = vector.load %arg9[%c1_104, %c0_105, %c0_106] : memref<5x2x4xbf16, #tpu.memory_space<vmem>>, vector<1x2x4xbf16>
    %110 = vector.shape_cast %109 : vector<1x2x4xbf16> to vector<2x4xbf16>
    %cst_107 = arith.constant dense<0.000000e+00> : vector<2x256xf32>
    %111 = tpu.matmul %110, %101, %cst_107 {dimension_numbers = #tpu.dot_dimension_numbers<[1], [0], [0], [1], [0, 0, 1, 1], [], []>} : vector<2x4xbf16>, vector<4x256xbf16>, vector<2x256xf32> -> vector<2x256xf32>
    %112 = arith.truncf %111 : vector<2x256xf32> to vector<2x256xbf16>
    %c1_108 = arith.constant 1 : index
    %c0_109 = arith.constant 0 : index
    %c0_110 = arith.constant 0 : index
    %113 = vector.load %arg10[%c1_108, %c0_109, %c0_110] : memref<5x256x16xbf16, #tpu.memory_space<vmem>>, vector<1x256x16xbf16>
    %114 = vector.shape_cast %113 : vector<1x256x16xbf16> to vector<256x16xbf16>
    %cst_111 = arith.constant dense<0.000000e+00> : vector<2x16xf32>
    %115 = tpu.matmul %112, %114, %cst_111 {dimension_numbers = #tpu.dot_dimension_numbers<[1], [0], [0], [1], [0, 0, 1, 1], [], []>} : vector<2x256xbf16>, vector<256x16xbf16>, vector<2x16xf32> -> vector<2x16xf32>
    %116 = arith.addf %108, %115 : vector<2x16xf32>
    %c2_112 = arith.constant 2 : index
    %c0_113 = arith.constant 0 : index
    %c0_114 = arith.constant 0 : index
    %117 = vector.load %arg9[%c2_112, %c0_113, %c0_114] : memref<5x2x4xbf16, #tpu.memory_space<vmem>>, vector<1x2x4xbf16>
    %118 = vector.shape_cast %117 : vector<1x2x4xbf16> to vector<2x4xbf16>
    %cst_115 = arith.constant dense<0.000000e+00> : vector<2x256xf32>
    %119 = tpu.matmul %118, %101, %cst_115 {dimension_numbers = #tpu.dot_dimension_numbers<[1], [0], [0], [1], [0, 0, 1, 1], [], []>} : vector<2x4xbf16>, vector<4x256xbf16>, vector<2x256xf32> -> vector<2x256xf32>
    %120 = arith.truncf %119 : vector<2x256xf32> to vector<2x256xbf16>
    %c2_116 = arith.constant 2 : index
    %c0_117 = arith.constant 0 : index
    %c0_118 = arith.constant 0 : index
    %121 = vector.load %arg10[%c2_116, %c0_117, %c0_118] : memref<5x256x16xbf16, #tpu.memory_space<vmem>>, vector<1x256x16xbf16>
    %122 = vector.shape_cast %121 : vector<1x256x16xbf16> to vector<256x16xbf16>
    %cst_119 = arith.constant dense<0.000000e+00> : vector<2x16xf32>
    %123 = tpu.matmul %120, %122, %cst_119 {dimension_numbers = #tpu.dot_dimension_numbers<[1], [0], [0], [1], [0, 0, 1, 1], [], []>} : vector<2x256xbf16>, vector<256x16xbf16>, vector<2x16xf32> -> vector<2x16xf32>
    %124 = arith.addf %116, %123 : vector<2x16xf32>
    %c3_120 = arith.constant 3 : index
    %c0_121 = arith.constant 0 : index
    %c0_122 = arith.constant 0 : index
    %125 = vector.load %arg9[%c3_120, %c0_121, %c0_122] : memref<5x2x4xbf16, #tpu.memory_space<vmem>>, vector<1x2x4xbf16>
    %126 = vector.shape_cast %125 : vector<1x2x4xbf16> to vector<2x4xbf16>
    %cst_123 = arith.constant dense<0.000000e+00> : vector<2x256xf32>
    %127 = tpu.matmul %126, %101, %cst_123 {dimension_numbers = #tpu.dot_dimension_numbers<[1], [0], [0], [1], [0, 0, 1, 1], [], []>} : vector<2x4xbf16>, vector<4x256xbf16>, vector<2x256xf32> -> vector<2x256xf32>
    %128 = arith.truncf %127 : vector<2x256xf32> to vector<2x256xbf16>
    %c3_124 = arith.constant 3 : index
    %c0_125 = arith.constant 0 : index
    %c0_126 = arith.constant 0 : index
    %129 = vector.load %arg10[%c3_124, %c0_125, %c0_126] : memref<5x256x16xbf16, #tpu.memory_space<vmem>>, vector<1x256x16xbf16>
    %130 = vector.shape_cast %129 : vector<1x256x16xbf16> to vector<256x16xbf16>
    %cst_127 = arith.constant dense<0.000000e+00> : vector<2x16xf32>
    %131 = tpu.matmul %128, %130, %cst_127 {dimension_numbers = #tpu.dot_dimension_numbers<[1], [0], [0], [1], [0, 0, 1, 1], [], []>} : vector<2x256xbf16>, vector<256x16xbf16>, vector<2x16xf32> -> vector<2x16xf32>
    %132 = arith.addf %124, %131 : vector<2x16xf32>
    %c4_128 = arith.constant 4 : index
    %c0_129 = arith.constant 0 : index
    %c0_130 = arith.constant 0 : index
    %133 = vector.load %arg9[%c4_128, %c0_129, %c0_130] : memref<5x2x4xbf16, #tpu.memory_space<vmem>>, vector<1x2x4xbf16>
    %134 = vector.shape_cast %133 : vector<1x2x4xbf16> to vector<2x4xbf16>
    %cst_131 = arith.constant dense<0.000000e+00> : vector<2x256xf32>
    %135 = tpu.matmul %134, %101, %cst_131 {dimension_numbers = #tpu.dot_dimension_numbers<[1], [0], [0], [1], [0, 0, 1, 1], [], []>} : vector<2x4xbf16>, vector<4x256xbf16>, vector<2x256xf32> -> vector<2x256xf32>
    %136 = arith.truncf %135 : vector<2x256xf32> to vector<2x256xbf16>
    %c4_132 = arith.constant 4 : index
    %c0_133 = arith.constant 0 : index
    %c0_134 = arith.constant 0 : index
    %137 = vector.load %arg10[%c4_132, %c0_133, %c0_134] : memref<5x256x16xbf16, #tpu.memory_space<vmem>>, vector<1x256x16xbf16>
    %138 = vector.shape_cast %137 : vector<1x256x16xbf16> to vector<256x16xbf16>
    %cst_135 = arith.constant dense<0.000000e+00> : vector<2x16xf32>
    %139 = tpu.matmul %136, %138, %cst_135 {dimension_numbers = #tpu.dot_dimension_numbers<[1], [0], [0], [1], [0, 0, 1, 1], [], []>} : vector<2x256xbf16>, vector<256x16xbf16>, vector<2x16xf32> -> vector<2x16xf32>
    %140 = arith.addf %132, %139 : vector<2x16xf32>
    %c0_136 = arith.constant 0 : index
    %c0_137 = arith.constant 0 : index
    %141 = vector.load %arg11[%c0_136, %c0_137] : memref<1x16xf32, #tpu.memory_space<vmem>>, vector<1x16xf32>
    %142 = vector.broadcast %141 : vector<1x16xf32> to vector<2x16xf32>
    %143 = arith.addf %140, %142 : vector<2x16xf32>
    %cst_138 = arith.constant 0.000000e+00 : f32
    %144 = vector.broadcast %cst_138 : f32 to vector<2x16xf32>
    %145 = arith.maximumf %143, %144 : vector<2x16xf32>
    %146 = vector.extract_strided_slice %145 {offsets = [0, 0], sizes = [1, 16], strides = [1, 1]} : vector<2x16xf32> to vector<1x16xf32>
    %c0_139 = arith.constant 0 : index
    %c0_140 = arith.constant 0 : index
    %c0_141 = arith.constant 0 : index
    %147 = vector.load %arg12[%c0_139, %c0_140, %c0_141] : memref<2x16x8xf32, #tpu.memory_space<vmem>>, vector<1x16x8xf32>
    %148 = vector.shape_cast %147 : vector<1x16x8xf32> to vector<16x8xf32>
    %cst_142 = arith.constant dense<0.000000e+00> : vector<1x8xf32>
    %149 = tpu.matmul %146, %148, %cst_142 {dimension_numbers = #tpu.dot_dimension_numbers<[1], [0], [0], [1], [0, 0, 1, 1], [], []>} : vector<1x16xf32>, vector<16x8xf32>, vector<1x8xf32> -> vector<1x8xf32>
    %150 = vector.extract_strided_slice %145 {offsets = [1, 0], sizes = [1, 16], strides = [1, 1]} : vector<2x16xf32> to vector<1x16xf32>
    %c1_143 = arith.constant 1 : index
    %c0_144 = arith.constant 0 : index
    %c0_145 = arith.constant 0 : index
    %151 = vector.load %arg12[%c1_143, %c0_144, %c0_145] : memref<2x16x8xf32, #tpu.memory_space<vmem>>, vector<1x16x8xf32>
    %152 = vector.shape_cast %151 : vector<1x16x8xf32> to vector<16x8xf32>
    %cst_146 = arith.constant dense<0.000000e+00> : vector<1x8xf32>
    %153 = tpu.matmul %150, %152, %cst_146 {dimension_numbers = #tpu.dot_dimension_numbers<[1], [0], [0], [1], [0, 0, 1, 1], [], []>} : vector<1x16xf32>, vector<16x8xf32>, vector<1x8xf32> -> vector<1x8xf32>
    %154 = arith.addf %149, %153 : vector<1x8xf32>
    %c0_147 = arith.constant 0 : index
    %c0_148 = arith.constant 0 : index
    %155 = vector.load %arg13[%c0_147, %c0_148] : memref<1x8xf32, #tpu.memory_space<vmem>>, vector<1x8xf32>
    %156 = arith.addf %154, %155 : vector<1x8xf32>
    %c0_149 = arith.constant 0 : index
    %c0_150 = arith.constant 0 : index
    %c0_151 = arith.constant 0 : index
    %157 = vector.load %arg14[%c0_149, %c0_150, %c0_151] : memref<1x1x8xf32, #tpu.memory_space<vmem>>, vector<1x1x8xf32>
    %158 = vector.shape_cast %157 : vector<1x1x8xf32> to vector<1x8xf32>
    %159 = vector.shape_cast %156 : vector<1x8xf32> to vector<1x1x8xf32>
    tpu.vector_store %arg14[%c0_149, %c0_150, %c0_151], %159 {strides = array<i32>} : memref<1x1x8xf32, #tpu.memory_space<vmem>>, vector<1x1x8xf32>,
    return
  }
  func.func @transform_0(%arg0: i32) -> (i32, i32, i32, i32) {
    %c0_i32 = arith.constant 0 : i32
    %c0_i32_0 = arith.constant 0 : i32
    %c0_i32_1 = arith.constant 0 : i32
    %c0_i32_2 = arith.constant 0 : i32
    return %arg0, %c0_i32, %c0_i32_0, %c0_i32_1 : i32, i32, i32, i32
  }
  func.func @transform_1(%arg0: i32) -> (i32, i32, i32) {
    %c0_i32 = arith.constant 0 : i32
    %c0_i32_0 = arith.constant 0 : i32
    %c0_i32_1 = arith.constant 0 : i32
    %c0_i32_2 = arith.constant 0 : i32
    return %c0_i32, %c0_i32_0, %c0_i32_1 : i32, i32, i32
  }
  func.func @transform_2(%arg0: i32) -> (i32, i32) {
    %c0_i32 = arith.constant 0 : i32
    %c0_i32_0 = arith.constant 0 : i32
    %c0_i32_1 = arith.constant 0 : i32
    return %c0_i32, %c0_i32_0 : i32, i32
  }
  func.func @transform_3(%arg0: i32) -> (i32, i32, i32) {
    %c0_i32 = arith.constant 0 : i32
    %c0_i32_0 = arith.constant 0 : i32
    %c0_i32_1 = arith.constant 0 : i32
    %c0_i32_2 = arith.constant 0 : i32
    return %c0_i32, %c0_i32_0, %c0_i32_1 : i32, i32, i32
  }
  func.func @transform_4(%arg0: i32) -> (i32, i32, i32) {
    %c0_i32 = arith.constant 0 : i32
    %c0_i32_0 = arith.constant 0 : i32
    %c0_i32_1 = arith.constant 0 : i32
    %c0_i32_2 = arith.constant 0 : i32
    return %c0_i32, %c0_i32_0, %c0_i32_1 : i32, i32, i32
  }
  func.func @transform_5(%arg0: i32) -> (i32, i32, i32) {
    %c0_i32 = arith.constant 0 : i32
    %c0_i32_0 = arith.constant 0 : i32
    %c0_i32_1 = arith.constant 0 : i32
    %c0_i32_2 = arith.constant 0 : i32
    return %c0_i32, %c0_i32_0, %c0_i32_1 : i32, i32, i32
  }
  func.func @transform_6(%arg0: i32) -> (i32, i32) {
    %c0_i32 = arith.constant 0 : i32
    %c0_i32_0 = arith.constant 0 : i32
    %c0_i32_1 = arith.constant 0 : i32
    return %c0_i32, %c0_i32_0 : i32, i32
  }
  func.func @transform_7(%arg0: i32) -> (i32, i32, i32) {
    %c0_i32 = arith.constant 0 : i32
    %c0_i32_0 = arith.constant 0 : i32
    %c0_i32_1 = arith.constant 0 : i32
    %c0_i32_2 = arith.constant 0 : i32
    return %c0_i32, %c0_i32_0, %c0_i32_1 : i32, i32, i32
  }
  func.func @transform_8(%arg0: i32) -> (i32, i32, i32) {
    %c0_i32 = arith.constant 0 : i32
    %c0_i32_0 = arith.constant 0 : i32
    %c0_i32_1 = arith.constant 0 : i32
    %c0_i32_2 = arith.constant 0 : i32
    return %c0_i32, %c0_i32_0, %c0_i32_1 : i32, i32, i32
  }
  func.func @transform_9(%arg0: i32) -> (i32, i32, i32) {
    %c0_i32 = arith.constant 0 : i32
    %c0_i32_0 = arith.constant 0 : i32
    %c0_i32_1 = arith.constant 0 : i32
    %c0_i32_2 = arith.constant 0 : i32
    return %c0_i32, %c0_i32_0, %c0_i32_1 : i32, i32, i32
  }
  func.func @transform_10(%arg0: i32) -> (i32, i32) {
    %c0_i32 = arith.constant 0 : i32
    %c0_i32_0 = arith.constant 0 : i32
    %c0_i32_1 = arith.constant 0 : i32
    return %c0_i32, %c0_i32_0 : i32, i32
  }
  func.func @transform_11(%arg0: i32) -> (i32, i32, i32) {
    %c0_i32 = arith.constant 0 : i32
    %c0_i32_0 = arith.constant 0 : i32
    %c0_i32_1 = arith.constant 0 : i32
    %c0_i32_2 = arith.constant 0 : i32
    return %c0_i32, %c0_i32_0, %c0_i32_1 : i32, i32, i32
  }
  func.func @transform_12(%arg0: i32) -> (i32, i32) {
    %c0_i32 = arith.constant 0 : i32
    %c0_i32_0 = arith.constant 0 : i32
    %c0_i32_1 = arith.constant 0 : i32
    return %c0_i32, %c0_i32_0 : i32, i32
  }
  func.func @transform_13(%arg0: i32) -> (i32, i32, i32) {
    %c0_i32 = arith.constant 0 : i32
    %c0_i32_0 = arith.constant 0 : i32
    %c0_i32_1 = arith.constant 0 : i32
    return %arg0, %c0_i32, %c0_i32_0 : i32, i32, i32
  }
}

</mosaic_0001>

<llo_original>
// kernel: forward.1
$region0: #{forward.1}
  #allocation0 [shape = 'u32[]', space=smem, size = 0x4, offset = 0x4, fixed_abs, tag = 'smem constant byte address 0x4 - core index']
  #allocation1 [shape = 'u32[72,128]{1,0:T(1,128)}', space=vmem, size = 0x9000, scoped, tag = 'internal scratch']
  %s0 = inlined_call_operand.vmem [shape: bf16[2,5,32,192], index: 0, kind: input, shape index: {}]
  %s1 = inlined_call_operand.hbm [shape: bf16[5,192,512], index: 1, kind: input, shape index: {}]
  %s2 = inlined_call_operand.vmem [shape: f32[1,512], index: 2, kind: input, shape index: {}]
  %s3 = inlined_call_operand.vmem [shape: bf16[2,16,32], index: 3, kind: input, shape index: {}]
  %s4 = inlined_call_operand.vmem [shape: bf16[5,8,16], index: 4, kind: input, shape index: {}]
  %s5 = inlined_call_operand.vmem [shape: bf16[5,256,512], index: 5, kind: input, shape index: {}]
  %s6 = inlined_call_operand.vmem [shape: f32[1,512], index: 6, kind: input, shape index: {}]
  %s7 = inlined_call_operand.vmem [shape: bf16[2,4,8], index: 7, kind: input, shape index: {}]
  %s8 = inlined_call_operand.vmem [shape: bf16[5,2,4], index: 8, kind: input, shape index: {}]
  %s9 = inlined_call_operand.vmem [shape: bf16[5,256,16], index: 9, kind: input, shape index: {}]
  %s10 = inlined_call_operand.vmem [shape: f32[1,16], index: 10, kind: input, shape index: {}]
  %s11 = inlined_call_operand.vmem [shape: f32[2,16,8], index: 11, kind: input, shape index: {}]
  %s12 = inlined_call_operand.vmem [shape: f32[1,8], index: 12, kind: input, shape index: {}]
  %s13 = inlined_call_operand.hbm [shape: f32[2,1,8], index: 13, kind: output, shape index: {}]
  %s14 = sld [smem:[#allocation0]]
  $region89: #{forward.1} parent=0
    _
  %s16 = ssub.s32 1, %s14
  %s17 = scalar_select 0, %s16, %s14
  $region1: #{forward.1} parent=0
    #allocation2 [shape = 'u8[983040]{0}', space=vmem, size = 0xf0000, scoped, tag = 'input window, operand 1, single buffered']
    #allocation3 [shape = 's32[2]{0}', space=sflag, size = 0x8, scoped, tag = 'scoped memory for forward.1']
    #allocation4 [shape = 's32[2]{0}', space=sflag, size = 0x8, scoped, tag = 'scoped memory for forward.1']
    #allocation5 [shape = 'u8[1024]{0}', space=vmem, size = 0x400, scoped, tag = 'output window, operand 0']
    %18 = vsyncpa [#allocation3], 0
    %19 = vsyncpa [#allocation4], 0
    %s20 = scalar_lea.sflag [#allocation4], 1
    %21 = vsyncpa %s20, 0
    loop: start=0, step=1, limit=4
    $region2: #{forward.1} parent=1 // loop_pre_header
      _
    $region3: #{forward.1} parent=1 // loop_header
      %s23 = sphi 0, %s27
      %p24 = scmp.ge.s32.totalorder %s23, 4
      %s33 = sphi 0, %s35
      %s36 = sphi 0, %s33
      %s37 = sphi 0, %s36
      %s53 = sphi 0, %s37
      %s57 = sphi 0, %s57
      %s59 = sphi 0, %s57
      %s60 = sphi 0, %s59
      %s74 = sphi 0, %s60
      %s78 = sphi 0, %s78
      %s80 = sphi 0, %s78
      %s81 = sphi 0, %s80
      %s95 = sphi 0, %s81
      %s99 = sphi 0, %s99
      %s101 = sphi 0, %s99
      %s102 = sphi 0, %s101
      %s116 = sphi 0, %s102
      %s120 = sphi 0, %s120
      %s122 = sphi 0, %s120
      %s123 = sphi 0, %s122
      %s137 = sphi 0, %s123
      %s141 = sphi 0, %s141
      %s143 = sphi 0, %s141
      %s144 = sphi 0, %s143
      %s158 = sphi 0, %s144
      %s162 = sphi 0, %s162
      %s164 = sphi 0, %s162
      %s165 = sphi 0, %s164
      %s179 = sphi 0, %s165
      %s183 = sphi 0, %s183
      %s185 = sphi 0, %s183
      %s186 = sphi 0, %s185
      %s200 = sphi 0, %s186
      %s204 = sphi 0, %s204
      %s206 = sphi 0, %s204
      %s207 = sphi 0, %s206
      %s221 = sphi 0, %s207
      %s225 = sphi 0, %s225
      %s227 = sphi 0, %s225
      %s228 = sphi 0, %s227
      %s242 = sphi 0, %s228
      %s246 = sphi 0, %s246
      %s248 = sphi 0, %s246
      %s249 = sphi 0, %s248
      %s263 = sphi 0, %s249
      %s267 = sphi 0, %s267
      %s269 = sphi 0, %s267
      %s270 = sphi 0, %s269
      %s284 = sphi 0, %s270
      %s288 = sphi 0, %s288
      %s290 = sphi 0, %s288
      %s291 = sphi 0, %s290
      %s305 = sphi 0, %s291
      %s311 = sphi 0, %s313
      %s314 = sphi 0, %s311
      %s315 = sphi 0, %s314
      %s331 = sphi 0, %s315
    $region4: #{forward.1} parent=1 // loop_header_branch
      %26 = sbr.rel (%p24) target = $region8
    $region5: #{forward.1} parent=1 // loop_body
      %s28 = ssub.s32 %s23, 1
      %s29 = ssub.s32 %s23, 2
      %s30 = sadd.s32 %s23, 1
      %s31 = ssub.s32 %s23, %s30
      %p32 = scmp.eq.s32.totalorder %s31, 0
      %s34 = sadd.s32 %s33, 1
      %s35 = scalar_select %p32, %s33, %s34
      %p38 = pneg %p32
      %p39 = scmp.eq.s32.totalorder %s23, 1
      %p40 = por %p38, %p39
      %p41 = scmp.ne.s32.totalorder %s33, %s36
      %p42 = scmp.eq.s32.totalorder %s23, 0
      %p43 = por %p41, %p42
      %p44 = scmp.ne.s32.totalorder %s33, %s36
      %p45 = scmp.eq.s32.totalorder %s28, 1
      %p46 = por %p44, %p45
      %p47 = scmp.ne.s32.totalorder %s36, %s37
      %p48 = scmp.eq.s32.totalorder %s28, 0
      %p49 = por %p47, %p48
      %p50 = scmp.ne.s32.totalorder %s36, %s37
      %p51 = scmp.eq.s32.totalorder %s29, 1
      %p52 = por %p50, %p51
      %p54 = scmp.ne.s32.totalorder %s37, %s53
      %p55 = scmp.eq.s32.totalorder %s29, 0
      %p56 = por %p54, %p55
      %s58 = sadd.s32 %s57, 1
      %p61 = scmp.eq.s32.totalorder %s23, 1
      %p62 = scmp.ne.s32.totalorder %s57, %s59
      %p63 = scmp.eq.s32.totalorder %s23, 0
      %p64 = por %p62, %p63
      %p65 = scmp.ne.s32.totalorder %s57, %s59
      %p66 = scmp.eq.s32.totalorder %s28, 1
      %p67 = por %p65, %p66
      %p68 = scmp.ne.s32.totalorder %s59, %s60
      %p69 = scmp.eq.s32.totalorder %s28, 0
      %p70 = por %p68, %p69
      %p71 = scmp.ne.s32.totalorder %s59, %s60
      %p72 = scmp.eq.s32.totalorder %s29, 1
      %p73 = por %p71, %p72
      %p75 = scmp.ne.s32.totalorder %s60, %s74
      %p76 = scmp.eq.s32.totalorder %s29, 0
      %p77 = por %p75, %p76
      %s79 = sadd.s32 %s78, 1
      %p82 = scmp.eq.s32.totalorder %s23, 1
      %p83 = scmp.ne.s32.totalorder %s78, %s80
      %p84 = scmp.eq.s32.totalorder %s23, 0
      %p85 = por %p83, %p84
      %p86 = scmp.ne.s32.totalorder %s78, %s80
      %p87 = scmp.eq.s32.totalorder %s28, 1
      %p88 = por %p86, %p87
      %p89 = scmp.ne.s32.totalorder %s80, %s81
      %p90 = scmp.eq.s32.totalorder %s28, 0
      %p91 = por %p89, %p90
      %p92 = scmp.ne.s32.totalorder %s80, %s81
      %p93 = scmp.eq.s32.totalorder %s29, 1
      %p94 = por %p92, %p93
      %p96 = scmp.ne.s32.totalorder %s81, %s95
      %p97 = scmp.eq.s32.totalorder %s29, 0
      %p98 = por %p96, %p97
      %s100 = sadd.s32 %s99, 1
      %p103 = scmp.eq.s32.totalorder %s23, 1
      %p104 = scmp.ne.s32.totalorder %s99, %s101
      %p105 = scmp.eq.s32.totalorder %s23, 0
      %p106 = por %p104, %p105
      %p107 = scmp.ne.s32.totalorder %s99, %s101
      %p108 = scmp.eq.s32.totalorder %s28, 1
      %p109 = por %p107, %p108
      %p110 = scmp.ne.s32.totalorder %s101, %s102
      %p111 = scmp.eq.s32.totalorder %s28, 0
      %p112 = por %p110, %p111
      %p113 = scmp.ne.s32.totalorder %s101, %s102
      %p114 = scmp.eq.s32.totalorder %s29, 1
      %p115 = por %p113, %p114
      %p117 = scmp.ne.s32.totalorder %s102, %s116
      %p118 = scmp.eq.s32.totalorder %s29, 0
      %p119 = por %p117, %p118
      %s121 = sadd.s32 %s120, 1
      %p124 = scmp.eq.s32.totalorder %s23, 1
      %p125 = scmp.ne.s32.totalorder %s120, %s122
      %p126 = scmp.eq.s32.totalorder %s23, 0
      %p127 = por %p125, %p126
      %p128 = scmp.ne.s32.totalorder %s120, %s122
      %p129 = scmp.eq.s32.totalorder %s28, 1
      %p130 = por %p128, %p129
      %p131 = scmp.ne.s32.totalorder %s122, %s123
      %p132 = scmp.eq.s32.totalorder %s28, 0
      %p133 = por %p131, %p132
      %p134 = scmp.ne.s32.totalorder %s122, %s123
      %p135 = scmp.eq.s32.totalorder %s29, 1
      %p136 = por %p134, %p135
      %p138 = scmp.ne.s32.totalorder %s123, %s137
      %p139 = scmp.eq.s32.totalorder %s29, 0
      %p140 = por %p138, %p139
      %s142 = sadd.s32 %s141, 1
      %p145 = scmp.eq.s32.totalorder %s23, 1
      %p146 = scmp.ne.s32.totalorder %s141, %s143
      %p147 = scmp.eq.s32.totalorder %s23, 0
      %p148 = por %p146, %p147
      %p149 = scmp.ne.s32.totalorder %s141, %s143
      %p150 = scmp.eq.s32.totalorder %s28, 1
      %p151 = por %p149, %p150
      %p152 = scmp.ne.s32.totalorder %s143, %s144
      %p153 = scmp.eq.s32.totalorder %s28, 0
      %p154 = por %p152, %p153
      %p155 = scmp.ne.s32.totalorder %s143, %s144
      %p156 = scmp.eq.s32.totalorder %s29, 1
      %p157 = por %p155, %p156
      %p159 = scmp.ne.s32.totalorder %s144, %s158
      %p160 = scmp.eq.s32.totalorder %s29, 0
      %p161 = por %p159, %p160
      %s163 = sadd.s32 %s162, 1
      %p166 = scmp.eq.s32.totalorder %s23, 1
      %p167 = scmp.ne.s32.totalorder %s162, %s164
      %p168 = scmp.eq.s32.totalorder %s23, 0
      %p169 = por %p167, %p168
      %p170 = scmp.ne.s32.totalorder %s162, %s164
      %p171 = scmp.eq.s32.totalorder %s28, 1
      %p172 = por %p170, %p171
      %p173 = scmp.ne.s32.totalorder %s164, %s165
      %p174 = scmp.eq.s32.totalorder %s28, 0
      %p175 = por %p173, %p174
      %p176 = scmp.ne.s32.totalorder %s164, %s165
      %p177 = scmp.eq.s32.totalorder %s29, 1
      %p178 = por %p176, %p177
      %p180 = scmp.ne.s32.totalorder %s165, %s179
      %p181 = scmp.eq.s32.totalorder %s29, 0
      %p182 = por %p180, %p181
      %s184 = sadd.s32 %s183, 1
      %p187 = scmp.eq.s32.totalorder %s23, 1
      %p188 = scmp.ne.s32.totalorder %s183, %s185
      %p189 = scmp.eq.s32.totalorder %s23, 0
      %p190 = por %p188, %p189
      %p191 = scmp.ne.s32.totalorder %s183, %s185
      %p192 = scmp.eq.s32.totalorder %s28, 1
      %p193 = por %p191, %p192
      %p194 = scmp.ne.s32.totalorder %s185, %s186
      %p195 = scmp.eq.s32.totalorder %s28, 0
      %p196 = por %p194, %p195
      %p197 = scmp.ne.s32.totalorder %s185, %s186
      %p198 = scmp.eq.s32.totalorder %s29, 1
      %p199 = por %p197, %p198
      %p201 = scmp.ne.s32.totalorder %s186, %s200
      %p202 = scmp.eq.s32.totalorder %s29, 0
      %p203 = por %p201, %p202
      %s205 = sadd.s32 %s204, 1
      %p208 = scmp.eq.s32.totalorder %s23, 1
      %p209 = scmp.ne.s32.totalorder %s204, %s206
      %p210 = scmp.eq.s32.totalorder %s23, 0
      %p211 = por %p209, %p210
      %p212 = scmp.ne.s32.totalorder %s204, %s206
      %p213 = scmp.eq.s32.totalorder %s28, 1
      %p214 = por %p212, %p213
      %p215 = scmp.ne.s32.totalorder %s206, %s207
      %p216 = scmp.eq.s32.totalorder %s28, 0
      %p217 = por %p215, %p216
      %p218 = scmp.ne.s32.totalorder %s206, %s207
      %p219 = scmp.eq.s32.totalorder %s29, 1
      %p220 = por %p218, %p219
      %p222 = scmp.ne.s32.totalorder %s207, %s221
      %p223 = scmp.eq.s32.totalorder %s29, 0
      %p224 = por %p222, %p223
      %s226 = sadd.s32 %s225, 1
      %p229 = scmp.eq.s32.totalorder %s23, 1
      %p230 = scmp.ne.s32.totalorder %s225, %s227
      %p231 = scmp.eq.s32.totalorder %s23, 0
      %p232 = por %p230, %p231
      %p233 = scmp.ne.s32.totalorder %s225, %s227
      %p234 = scmp.eq.s32.totalorder %s28, 1
      %p235 = por %p233, %p234
      %p236 = scmp.ne.s32.totalorder %s227, %s228
      %p237 = scmp.eq.s32.totalorder %s28, 0
      %p238 = por %p236, %p237
      %p239 = scmp.ne.s32.totalorder %s227, %s228
      %p240 = scmp.eq.s32.totalorder %s29, 1
      %p241 = por %p239, %p240
      %p243 = scmp.ne.s32.totalorder %s228, %s242
      %p244 = scmp.eq.s32.totalorder %s29, 0
      %p245 = por %p243, %p244
      %s247 = sadd.s32 %s246, 1
      %p250 = scmp.eq.s32.totalorder %s23, 1
      %p251 = scmp.ne.s32.totalorder %s246, %s248
      %p252 = scmp.eq.s32.totalorder %s23, 0
      %p253 = por %p251, %p252
      %p254 = scmp.ne.s32.totalorder %s246, %s248
      %p255 = scmp.eq.s32.totalorder %s28, 1
      %p256 = por %p254, %p255
      %p257 = scmp.ne.s32.totalorder %s248, %s249
      %p258 = scmp.eq.s32.totalorder %s28, 0
      %p259 = por %p257, %p258
      %p260 = scmp.ne.s32.totalorder %s248, %s249
      %p261 = scmp.eq.s32.totalorder %s29, 1
      %p262 = por %p260, %p261
      %p264 = scmp.ne.s32.totalorder %s249, %s263
      %p265 = scmp.eq.s32.totalorder %s29, 0
      %p266 = por %p264, %p265
      %s268 = sadd.s32 %s267, 1
      %p271 = scmp.eq.s32.totalorder %s23, 1
      %p272 = scmp.ne.s32.totalorder %s267, %s269
      %p273 = scmp.eq.s32.totalorder %s23, 0
      %p274 = por %p272, %p273
      %p275 = scmp.ne.s32.totalorder %s267, %s269
      %p276 = scmp.eq.s32.totalorder %s28, 1
      %p277 = por %p275, %p276
      %p278 = scmp.ne.s32.totalorder %s269, %s270
      %p279 = scmp.eq.s32.totalorder %s28, 0
      %p280 = por %p278, %p279
      %p281 = scmp.ne.s32.totalorder %s269, %s270
      %p282 = scmp.eq.s32.totalorder %s29, 1
      %p283 = por %p281, %p282
      %p285 = scmp.ne.s32.totalorder %s270, %s284
      %p286 = scmp.eq.s32.totalorder %s29, 0
      %p287 = por %p285, %p286
      %s289 = sadd.s32 %s288, 1
      %p292 = scmp.eq.s32.totalorder %s23, 1
      %p293 = scmp.ne.s32.totalorder %s288, %s290
      %p294 = scmp.eq.s32.totalorder %s23, 0
      %p295 = por %p293, %p294
      %p296 = scmp.ne.s32.totalorder %s288, %s290
      %p297 = scmp.eq.s32.totalorder %s28, 1
      %p298 = por %p296, %p297
      %p299 = scmp.ne.s32.totalorder %s290, %s291
      %p300 = scmp.eq.s32.totalorder %s28, 0
      %p301 = por %p299, %p300
      %p302 = scmp.ne.s32.totalorder %s290, %s291
      %p303 = scmp.eq.s32.totalorder %s29, 1
      %p304 = por %p302, %p303
      %p306 = scmp.ne.s32.totalorder %s291, %s305
      %p307 = scmp.eq.s32.totalorder %s29, 0
      %p308 = por %p306, %p307
      %s309 = ssub.s32 %s23, %s30
      %p310 = scmp.eq.s32.totalorder %s309, 0
      %s312 = sadd.s32 %s311, 1
      %s313 = scalar_select %p310, %s311, %s312
      %p316 = pneg %p310
      %p317 = scmp.eq.s32.totalorder %s23, 1
      %p318 = por %p316, %p317
      %p319 = scmp.ne.s32.totalorder %s311, %s314
      %p320 = scmp.eq.s32.totalorder %s23, 0
      %p321 = por %p319, %p320
      %p322 = scmp.ne.s32.totalorder %s311, %s314
      %p323 = scmp.eq.s32.totalorder %s28, 1
      %p324 = por %p322, %p323
      %p325 = scmp.ne.s32.totalorder %s314, %s315
      %p326 = scmp.eq.s32.totalorder %s28, 0
      %p327 = por %p325, %p326
      %p328 = scmp.ne.s32.totalorder %s314, %s315
      %p329 = scmp.eq.s32.totalorder %s29, 1
      %p330 = por %p328, %p329
      %p332 = scmp.ne.s32.totalorder %s315, %s331
      %p333 = scmp.eq.s32.totalorder %s29, 0
      %p334 = por %p332, %p333
      %p335 = scmp.le.s32.totalorder 1, %s23
      %p336 = scmp.lt.s32.totalorder %s23, 3
      %p337 = pnand %p335, %p336
      %p338 = pneg %p337
      // Predicated region
      $region9: #{forward.1} parent=5 // pred_check
        _
      $region10: #{forward.1} parent=5 // pred_check_branch
        %340 = sbr.rel (%p337) target = $region12
      $region11: #{forward.1} parent=5 // pred_region
        %s341 = ssub.s32 %s23, 1
        // Predicated region
        $region13: #{forward.1} parent=11 // pred_check
          %p342 = pneg %p70
        $region14: #{forward.1} parent=11 // pred_check_branch
          %344 = sbr.rel (%p342) target = $region16
        $region15: #{forward.1} parent=11 // pred_region
          %346 = vsyncadd [#allocation3], 0
          %s347 = sshll.u32 %s1, 4
          %s348 = int_to_ptr.hbm [resolvable:$true] %s347
          %s349 = sshll.u32 [#allocation2], 4
          %s350 = int_to_ptr.vmem [resolvable:$true] %s349
          %355 = dma.hbm_to_vmem [thread:$0]  %s348, 30720, %s350, [#allocation3], 256, 256, 16
        $region16: #{forward.1} parent=11 // pred_fallthru
          _
        // Predicated region
        $region17: #{forward.1} parent=11 // pred_check
          %p356 = pneg %p91
        $region18: #{forward.1} parent=11 // pred_check_branch
          %358 = sbr.rel (%p356) target = $region20
        $region19: #{forward.1} parent=11 // pred_region
          _
        $region20: #{forward.1} parent=11 // pred_fallthru
          _
        // Predicated region
        $region21: #{forward.1} parent=11 // pred_check
          %p359 = pneg %p112
        $region22: #{forward.1} parent=11 // pred_check_branch
          %361 = sbr.rel (%p359) target = $region24
        $region23: #{forward.1} parent=11 // pred_region
          _
        $region24: #{forward.1} parent=11 // pred_fallthru
          _
        // Predicated region
        $region25: #{forward.1} parent=11 // pred_check
          %p362 = pneg %p133
        $region26: #{forward.1} parent=11 // pred_check_branch
          %364 = sbr.rel (%p362) target = $region28
        $region27: #{forward.1} parent=11 // pred_region
          _
        $region28: #{forward.1} parent=11 // pred_fallthru
          _
        // Predicated region
        $region29: #{forward.1} parent=11 // pred_check
          %p365 = pneg %p154
        $region30: #{forward.1} parent=11 // pred_check_branch
          %367 = sbr.rel (%p365) target = $region32
        $region31: #{forward.1} parent=11 // pred_region
          _
        $region32: #{forward.1} parent=11 // pred_fallthru
          _
        // Predicated region
        $region33: #{forward.1} parent=11 // pred_check
          %p368 = pneg %p175
        $region34: #{forward.1} parent=11 // pred_check_branch
          %370 = sbr.rel (%p368) target = $region36
        $region35: #{forward.1} parent=11 // pred_region
          _
        $region36: #{forward.1} parent=11 // pred_fallthru
          _
        // Predicated region
        $region37: #{forward.1} parent=11 // pred_check
          %p371 = pneg %p196
        $region38: #{forward.1} parent=11 // pred_check_branch
          %373 = sbr.rel (%p371) target = $region40
        $region39: #{forward.1} parent=11 // pred_region
          _
        $region40: #{forward.1} parent=11 // pred_fallthru
          _
        // Predicated region
        $region41: #{forward.1} parent=11 // pred_check
          %p374 = pneg %p217
        $region42: #{forward.1} parent=11 // pred_check_branch
          %376 = sbr.rel (%p374) target = $region44
        $region43: #{forward.1} parent=11 // pred_region
          _
        $region44: #{forward.1} parent=11 // pred_fallthru
          _
        // Predicated region
        $region45: #{forward.1} parent=11 // pred_check
          %p377 = pneg %p238
        $region46: #{forward.1} parent=11 // pred_check_branch
          %379 = sbr.rel (%p377) target = $region48
        $region47: #{forward.1} parent=11 // pred_region
          _
        $region48: #{forward.1} parent=11 // pred_fallthru
          _
        // Predicated region
        $region49: #{forward.1} parent=11 // pred_check
          %p380 = pneg %p259
        $region50: #{forward.1} parent=11 // pred_check_branch
          %382 = sbr.rel (%p380) target = $region52
        $region51: #{forward.1} parent=11 // pred_region
          _
        $region52: #{forward.1} parent=11 // pred_fallthru
          _
        // Predicated region
        $region53: #{forward.1} parent=11 // pred_check
          %p383 = pneg %p280
        $region54: #{forward.1} parent=11 // pred_check_branch
          %385 = sbr.rel (%p383) target = $region56
        $region55: #{forward.1} parent=11 // pred_region
          _
        $region56: #{forward.1} parent=11 // pred_fallthru
          _
        // Predicated region
        $region57: #{forward.1} parent=11 // pred_check
          %p386 = pneg %p301
        $region58: #{forward.1} parent=11 // pred_check_branch
          %388 = sbr.rel (%p386) target = $region60
        $region59: #{forward.1} parent=11 // pred_region
          _
        $region60: #{forward.1} parent=11 // pred_fallthru
          _
      $region12: #{forward.1} parent=5 // pred_fallthru
        _
      %p389 = scmp.lt.s32.totalorder %s23, 2
      // Predicated region
      $region61: #{forward.1} parent=5 // pred_check
        %p390 = pneg %p389
      $region62: #{forward.1} parent=5 // pred_check_branch
        %392 = sbr.rel (%p390) target = $region64
      $region63: #{forward.1} parent=5 // pred_region
        // Predicated region
        $region65: #{forward.1} parent=63 // pred_check
          %p393 = pneg %p43
        $region66: #{forward.1} parent=63 // pred_check_branch
          %395 = sbr.rel (%p393) target = $region68
        $region67: #{forward.1} parent=63 // pred_region
          %p396 = scmp.lt.s32.totalorder %s23, 1
          %s397 = scalar_select %p396, %s23, 1
          %s398 = smul.addr %s397, 40
          %s399 = smul.addr %s398, 4
          %s400 = scalar_lea.vmem %s0, %s399
        $region68: #{forward.1} parent=63 // pred_fallthru
          _
      $region64: #{forward.1} parent=5 // pred_fallthru
        _
      %p401 = scmp.le.s32.totalorder 1, %s23
      %p402 = scmp.lt.s32.totalorder %s23, 3
      %p403 = pnand %p401, %p402
      %p404 = pneg %p403
      // Predicated region
      $region69: #{forward.1} parent=5 // pred_check
        _
      $region70: #{forward.1} parent=5 // pred_check_branch
        %406 = sbr.rel (%p403) target = $region72
      $region71: #{forward.1} parent=5 // pred_region
        %s407 = ssub.s32 %s23, 1
        // Predicated region
        $region73: #{forward.1} parent=71 // pred_check
          %p408 = pneg %p70
        $region74: #{forward.1} parent=71 // pred_check_branch
          %410 = sbr.rel (%p408) target = $region76
        $region75: #{forward.1} parent=71 // pred_region
          %412 = dma.done [#allocation3], 30720
        $region76: #{forward.1} parent=71 // pred_fallthru
          _
        %p413 = scmp.lt.s32.totalorder %s28, 1
        %s414 = scalar_select %p413, %s28, 1
        %s415 = smul.addr %s414, 40
        %s416 = smul.addr %s415, 4
        %s417 = scalar_lea.vmem %s0, %s416
        %p418 = pneg %p49
        %p419 = pneg %p46
        %p420 = pneg %p70
        %p421 = pneg %p67
        %p422 = pneg %p91
        %p423 = pneg %p88
        %p424 = pneg %p112
        %p425 = pneg %p109
        %p426 = pneg %p133
        %p427 = pneg %p130
        %p428 = pneg %p154
        %p429 = pneg %p151
        %p430 = pneg %p175
        %p431 = pneg %p172
        %p432 = pneg %p196
        %p433 = pneg %p193
        %p434 = pneg %p217
        %p435 = pneg %p214
        %p436 = pneg %p238
        %p437 = pneg %p235
        %p438 = pneg %p259
        %p439 = pneg %p256
        %p440 = pneg %p280
        %p441 = pneg %p277
        %p442 = pneg %p301
        %p443 = pneg %p298
        %p444 = pneg %p327
        %p445 = pneg %p324
        %s446 = sand.u32 %s314, 1
        %s447 = scalar_lea.sflag [#allocation4], %s446
        %s448 = sand.u32 %s314, 1
        %s449 = scalar_lea.vmem [#allocation5], %s448
        %p450 = scmp.lt.s32.totalorder %s28, 1
        %s451 = scalar_select %p450, %s28, 1
        %s452 = smul.addr %s451, 40
        %s453 = smul.addr %s452, 4
        %s454 = scalar_lea.vmem %s0, %s453
        %v456 = vld [vmem:[%s454] sm:$0xff]
        %v457 = vld [vmem:[%s454 + $0x8] sm:$0xff]
        %v458 = vld [vmem:[%s454 + $0x10] sm:$0xff]
        %v459 = vld [vmem:[%s454 + $0x18] sm:$0xff]
        %v460 = vld [vmem:[#allocation2] sm:$0xff]
        %v461 = vld [vmem:[#allocation2 + $0x8] sm:$0xff]
        %v462 = vld [vmem:[#allocation2 + $0x10] sm:$0xff]
        %v463 = vld [vmem:[#allocation2 + $0x18] sm:$0xff]
        %v464 = vld [vmem:[#allocation2 + $0x20] sm:$0xff]
        %v465 = vld [vmem:[#allocation2 + $0x28] sm:$0xff]
        %v466 = vld [vmem:[#allocation2 + $0x30] sm:$0xff]
        %v467 = vld [vmem:[#allocation2 + $0x38] sm:$0xff]
        %v468 = vld [vmem:[#allocation2 + $0x40] sm:$0xff]
        %v469 = vld [vmem:[#allocation2 + $0x48] sm:$0xff]
        %v470 = vld [vmem:[#allocation2 + $0x50] sm:$0xff]
        %v471 = vld [vmem:[#allocation2 + $0x58] sm:$0xff]
        %v472 = vld [vmem:[#allocation2 + $0x60] sm:$0xff]
        %v473 = vld [vmem:[#allocation2 + $0x68] sm:$0xff]
        %v474 = vld [vmem:[#allocation2 + $0x70] sm:$0xff]
        %v475 = vld [vmem:[#allocation2 + $0x78] sm:$0xff]
        %v476 = vld [vmem:[#allocation2 + $0x80] sm:$0xff]
        %v477 = vld [vmem:[#allocation2 + $0x88] sm:$0xff]
        %v478 = vld [vmem:[#allocation2 + $0x90] sm:$0xff]
        %v479 = vld [vmem:[#allocation2 + $0x98] sm:$0xff]
        %v480 = vld [vmem:[#allocation2 + $0xa0] sm:$0xff]
        %v481 = vld [vmem:[#allocation2 + $0xa8] sm:$0xff]
        %v482 = vld [vmem:[#allocation2 + $0xb0] sm:$0xff]
        %v483 = vld [vmem:[#allocation2 + $0xb8] sm:$0xff]
        %v484 = vld [vmem:[#allocation2 + $0xc0] sm:$0xff]
        %v485 = vld [vmem:[#allocation2 + $0xc8] sm:$0xff]
        %v486 = vld [vmem:[#allocation2 + $0xd0] sm:$0xff]
        %v487 = vld [vmem:[#allocation2 + $0xd8] sm:$0xff]
        %v488 = vld [vmem:[#allocation2 + $0xe0] sm:$0xff]
        %v489 = vld [vmem:[#allocation2 + $0xe8] sm:$0xff]
        %v490 = vld [vmem:[#allocation2 + $0xf0] sm:$0xff]
        %v491 = vld [vmem:[#allocation2 + $0xf8] sm:$0xff]
        %v492 = vld [vmem:[#allocation2 + $0x100] sm:$0xff]
        %v493 = vld [vmem:[#allocation2 + $0x108] sm:$0xff]
        %v494 = vld [vmem:[#allocation2 + $0x110] sm:$0xff]
        %v495 = vld [vmem:[#allocation2 + $0x118] sm:$0xff]
        %v496 = vld [vmem:[#allocation2 + $0x120] sm:$0xff]
        %v497 = vld [vmem:[#allocation2 + $0x128] sm:$0xff]
        %v498 = vld [vmem:[#allocation2 + $0x130] sm:$0xff]
        %v499 = vld [vmem:[#allocation2 + $0x138] sm:$0xff]
        %v500 = vld [vmem:[#allocation2 + $0x140] sm:$0xff]
        %v501 = vld [vmem:[#allocation2 + $0x148] sm:$0xff]
        %v502 = vld [vmem:[#allocation2 + $0x150] sm:$0xff]
        %v503 = vld [vmem:[#allocation2 + $0x158] sm:$0xff]
        %v504 = vld [vmem:[#allocation2 + $0x160] sm:$0xff]
        %v505 = vld [vmem:[#allocation2 + $0x168] sm:$0xff]
        %v506 = vld [vmem:[#allocation2 + $0x170] sm:$0xff]
        %v507 = vld [vmem:[#allocation2 + $0x178] sm:$0xff]
        %s508 = scalar_lea.vmem %s454, 32
        %v509 = vld [vmem:[%s508] sm:$0xff]
        %v510 = vld [vmem:[%s508 + $0x8] sm:$0xff]
        %v511 = vld [vmem:[%s508 + $0x10] sm:$0xff]
        %v512 = vld [vmem:[%s508 + $0x18] sm:$0xff]
        %s513 = scalar_lea.vmem [#allocation2], 384
        %v514 = vld [vmem:[%s513] sm:$0xff]
        %v515 = vld [vmem:[%s513 + $0x8] sm:$0xff]
        %v516 = vld [vmem:[%s513 + $0x10] sm:$0xff]
        %v517 = vld [vmem:[%s513 + $0x18] sm:$0xff]
        %v518 = vld [vmem:[%s513 + $0x20] sm:$0xff]
        %v519 = vld [vmem:[%s513 + $0x28] sm:$0xff]
        %v520 = vld [vmem:[%s513 + $0x30] sm:$0xff]
        %v521 = vld [vmem:[%s513 + $0x38] sm:$0xff]
        %v522 = vld [vmem:[%s513 + $0x40] sm:$0xff]
        %v523 = vld [vmem:[%s513 + $0x48] sm:$0xff]
        %v524 = vld [vmem:[%s513 + $0x50] sm:$0xff]
        %v525 = vld [vmem:[%s513 + $0x58] sm:$0xff]
        %v526 = vld [vmem:[%s513 + $0x60] sm:$0xff]
        %v527 = vld [vmem:[%s513 + $0x68] sm:$0xff]
        %v528 = vld [vmem:[%s513 + $0x70] sm:$0xff]
        %v529 = vld [vmem:[%s513 + $0x78] sm:$0xff]
        %v530 = vld [vmem:[%s513 + $0x80] sm:$0xff]
        %v531 = vld [vmem:[%s513 + $0x88] sm:$0xff]
        %v532 = vld [vmem:[%s513 + $0x90] sm:$0xff]
        %v533 = vld [vmem:[%s513 + $0x98] sm:$0xff]
        %v534 = vld [vmem:[%s513 + $0xa0] sm:$0xff]
        %v535 = vld [vmem:[%s513 + $0xa8] sm:$0xff]
        %v536 = vld [vmem:[%s513 + $0xb0] sm:$0xff]
        %v537 = vld [vmem:[%s513 + $0xb8] sm:$0xff]
        %v538 = vld [vmem:[%s513 + $0xc0] sm:$0xff]
        %v539 = vld [vmem:[%s513 + $0xc8] sm:$0xff]
        %v540 = vld [vmem:[%s513 + $0xd0] sm:$0xff]
        %v541 = vld [vmem:[%s513 + $0xd8] sm:$0xff]
        %v542 = vld [vmem:[%s513 + $0xe0] sm:$0xff]
        %v543 = vld [vmem:[%s513 + $0xe8] sm:$0xff]
        %v544 = vld [vmem:[%s513 + $0xf0] sm:$0xff]
        %v545 = vld [vmem:[%s513 + $0xf8] sm:$0xff]
        %v546 = vld [vmem:[%s513 + $0x100] sm:$0xff]
        %v547 = vld [vmem:[%s513 + $0x108] sm:$0xff]
        %v548 = vld [vmem:[%s513 + $0x110] sm:$0xff]
        %v549 = vld [vmem:[%s513 + $0x118] sm:$0xff]
        %v550 = vld [vmem:[%s513 + $0x120] sm:$0xff]
        %v551 = vld [vmem:[%s513 + $0x128] sm:$0xff]
        %v552 = vld [vmem:[%s513 + $0x130] sm:$0xff]
        %v553 = vld [vmem:[%s513 + $0x138] sm:$0xff]
        %v554 = vld [vmem:[%s513 + $0x140] sm:$0xff]
        %v555 = vld [vmem:[%s513 + $0x148] sm:$0xff]
        %v556 = vld [vmem:[%s513 + $0x150] sm:$0xff]
        %v557 = vld [vmem:[%s513 + $0x158] sm:$0xff]
        %v558 = vld [vmem:[%s513 + $0x160] sm:$0xff]
        %v559 = vld [vmem:[%s513 + $0x168] sm:$0xff]
        %v560 = vld [vmem:[%s513 + $0x170] sm:$0xff]
        %v561 = vld [vmem:[%s513 + $0x178] sm:$0xff]
        %v566 = vunpack.c.l.b16 %v509
        %v567 = vunpack.c.h.b16 %v509
        %v568 = vunpack.c.l.b16 %v510
        %v569 = vunpack.c.h.b16 %v510
        %v570 = vunpack.c.l.b16 %v511
        %v571 = vunpack.c.h.b16 %v511
        %v572 = vunpack.c.l.b16 %v512
        %v573 = vunpack.c.h.b16 %v512
        %v574 = vpack.c.b16 %v568, %v566
        %v575 = vpack.c.b16 %v569, %v567
        %v576 = vpack.c.b16 %v572, %v570
        %v577 = vpack.c.b16 %v573, %v571
        %v628 = vunpack.c.l.b16 %v514
        %v629 = vunpack.c.h.b16 %v514
        %v630 = vunpack.c.l.b16 %v515
        %v631 = vunpack.c.h.b16 %v515
        %v632 = vunpack.c.l.b16 %v516
        %v633 = vunpack.c.h.b16 %v516
        %v634 = vunpack.c.l.b16 %v517
        %v635 = vunpack.c.h.b16 %v517
        %v636 = vunpack.c.l.b16 %v518
        %v637 = vunpack.c.h.b16 %v518
        %v638 = vunpack.c.l.b16 %v519
        %v639 = vunpack.c.h.b16 %v519
        %v640 = vunpack.c.l.b16 %v520
        %v641 = vunpack.c.h.b16 %v520
        %v642 = vunpack.c.l.b16 %v521
        %v643 = vunpack.c.h.b16 %v521
        %v644 = vunpack.c.l.b16 %v522
        %v645 = vunpack.c.h.b16 %v522
        %v646 = vunpack.c.l.b16 %v523
        %v647 = vunpack.c.h.b16 %v523
        %v648 = vunpack.c.l.b16 %v524
        %v649 = vunpack.c.h.b16 %v524
        %v650 = vunpack.c.l.b16 %v525
        %v651 = vunpack.c.h.b16 %v525
        %v652 = vunpack.c.l.b16 %v526
        %v653 = vunpack.c.h.b16 %v526
        %v654 = vunpack.c.l.b16 %v527
        %v655 = vunpack.c.h.b16 %v527
        %v656 = vunpack.c.l.b16 %v528
        %v657 = vunpack.c.h.b16 %v528
        %v658 = vunpack.c.l.b16 %v529
        %v659 = vunpack.c.h.b16 %v529
        %v660 = vunpack.c.l.b16 %v530
        %v661 = vunpack.c.h.b16 %v530
        %v662 = vunpack.c.l.b16 %v531
        %v663 = vunpack.c.h.b16 %v531
        %v664 = vunpack.c.l.b16 %v532
        %v665 = vunpack.c.h.b16 %v532
        %v666 = vunpack.c.l.b16 %v533
        %v667 = vunpack.c.h.b16 %v533
        %v668 = vunpack.c.l.b16 %v534
        %v669 = vunpack.c.h.b16 %v534
        %v670 = vunpack.c.l.b16 %v535
        %v671 = vunpack.c.h.b16 %v535
        %v672 = vunpack.c.l.b16 %v536
        %v673 = vunpack.c.h.b16 %v536
        %v674 = vunpack.c.l.b16 %v537
        %v675 = vunpack.c.h.b16 %v537
        %v676 = vunpack.c.l.b16 %v538
        %v677 = vunpack.c.h.b16 %v538
        %v678 = vunpack.c.l.b16 %v539
        %v679 = vunpack.c.h.b16 %v539
        %v680 = vunpack.c.l.b16 %v540
        %v681 = vunpack.c.h.b16 %v540
        %v682 = vunpack.c.l.b16 %v541
        %v683 = vunpack.c.h.b16 %v541
        %v684 = vunpack.c.l.b16 %v542
        %v685 = vunpack.c.h.b16 %v542
        %v686 = vunpack.c.l.b16 %v543
        %v687 = vunpack.c.h.b16 %v543
        %v688 = vunpack.c.l.b16 %v544
        %v689 = vunpack.c.h.b16 %v544
        %v690 = vunpack.c.l.b16 %v545
        %v691 = vunpack.c.h.b16 %v545
        %v692 = vunpack.c.l.b16 %v546
        %v693 = vunpack.c.h.b16 %v546
        %v694 = vunpack.c.l.b16 %v547
        %v695 = vunpack.c.h.b16 %v547
        %v696 = vunpack.c.l.b16 %v548
        %v697 = vunpack.c.h.b16 %v548
        %v698 = vunpack.c.l.b16 %v549
        %v699 = vunpack.c.h.b16 %v549
        %v700 = vunpack.c.l.b16 %v550
        %v701 = vunpack.c.h.b16 %v550
        %v702 = vunpack.c.l.b16 %v551
        %v703 = vunpack.c.h.b16 %v551
        %v704 = vunpack.c.l.b16 %v552
        %v705 = vunpack.c.h.b16 %v552
        %v706 = vunpack.c.l.b16 %v553
        %v707 = vunpack.c.h.b16 %v553
        %v708 = vunpack.c.l.b16 %v554
        %v709 = vunpack.c.h.b16 %v554
        %v710 = vunpack.c.l.b16 %v555
        %v711 = vunpack.c.h.b16 %v555
        %v712 = vunpack.c.l.b16 %v556
        %v713 = vunpack.c.h.b16 %v556
        %v714 = vunpack.c.l.b16 %v557
        %v715 = vunpack.c.h.b16 %v557
        %v716 = vunpack.c.l.b16 %v558
        %v717 = vunpack.c.h.b16 %v558
        %v718 = vunpack.c.l.b16 %v559
        %v719 = vunpack.c.h.b16 %v559
        %v720 = vunpack.c.l.b16 %v560
        %v721 = vunpack.c.h.b16 %v560
        %v722 = vunpack.c.l.b16 %v561
        %v723 = vunpack.c.h.b16 %v561
        %v724 = vpack.c.b16 %v632, %v628
        %v725 = vpack.c.b16 %v633, %v629
        %v726 = vpack.c.b16 %v634, %v630
        %v727 = vpack.c.b16 %v635, %v631
        %v728 = vpack.c.b16 %v640, %v636
        %v729 = vpack.c.b16 %v641, %v637
        %v730 = vpack.c.b16 %v642, %v638
        %v731 = vpack.c.b16 %v643, %v639
        %v732 = vpack.c.b16 %v648, %v644
        %v733 = vpack.c.b16 %v649, %v645
        %v734 = vpack.c.b16 %v650, %v646
        %v735 = vpack.c.b16 %v651, %v647
        %v736 = vpack.c.b16 %v656, %v652
        %v737 = vpack.c.b16 %v657, %v653
        %v738 = vpack.c.b16 %v658, %v654
        %v739 = vpack.c.b16 %v659, %v655
        %v740 = vpack.c.b16 %v664, %v660
        %v741 = vpack.c.b16 %v665, %v661
        %v742 = vpack.c.b16 %v666, %v662
        %v743 = vpack.c.b16 %v667, %v663
        %v744 = vpack.c.b16 %v672, %v668
        %v745 = vpack.c.b16 %v673, %v669
        %v746 = vpack.c.b16 %v674, %v670
        %v747 = vpack.c.b16 %v675, %v671
        %v748 = vpack.c.b16 %v680, %v676
        %v749 = vpack.c.b16 %v681, %v677
        %v750 = vpack.c.b16 %v682, %v678
        %v751 = vpack.c.b16 %v683, %v679
        %v752 = vpack.c.b16 %v688, %v684
        %v753 = vpack.c.b16 %v689, %v685
        %v754 = vpack.c.b16 %v690, %v686
        %v755 = vpack.c.b16 %v691, %v687
        %v756 = vpack.c.b16 %v696, %v692
        %v757 = vpack.c.b16 %v697, %v693
        %v758 = vpack.c.b16 %v698, %v694
        %v759 = vpack.c.b16 %v699, %v695
        %v760 = vpack.c.b16 %v704, %v700
        %v761 = vpack.c.b16 %v705, %v701
        %v762 = vpack.c.b16 %v706, %v702
        %v763 = vpack.c.b16 %v707, %v703
        %v764 = vpack.c.b16 %v712, %v708
        %v765 = vpack.c.b16 %v713, %v709
        %v766 = vpack.c.b16 %v714, %v710
        %v767 = vpack.c.b16 %v715, %v711
        %v768 = vpack.c.b16 %v720, %v716
        %v769 = vpack.c.b16 %v721, %v717
        %v770 = vpack.c.b16 %v722, %v718
        %v771 = vpack.c.b16 %v723, %v719
        %vm820 = vcmask 523264
        %v822 = vsel %vm820, %v575, 0
        %v825 = vsel %vm820, %v577, 0
        %827 = vmatpush.bf16.msra.mxu0 %v752
        %828 = vmatpush.bf16.msra.mxu0 %v748
        %829 = vmatpush.bf16.msra.mxu0 %v744
        %830 = vmatpush.bf16.msra.mxu0 %v740
        %831 = vmatpush.bf16.msra.mxu0 %v736
        %832 = vmatpush.bf16.msra.mxu0 %v732
        %833 = vmatpush.bf16.msra.mxu0 %v728
        %834 = vmatpush.bf16.msra.mxu0 %v724
        %835 = vmatmul.bf16.gmra.mxu0 %v574
        %v836 = vpop.f32.mrf.mxu0
        %v837 = vadd.f32 0.0, %v836
        %v838 = vpop.f32.mrf.mxu0
        %v839 = vadd.f32 0.0, %v838
        %840 = vmatmul.bf16.gmra.mxu0 %v576
        %v841 = vpop.f32.mrf.mxu0
        %v842 = vadd.f32 0.0, %v841
        %v843 = vpop.f32.mrf.mxu0
        %v844 = vadd.f32 0.0, %v843
        %845 = vdwg.mxu0
        %846 = vmatpush.bf16.msra.mxu0 0
        %847 = vmatpush.bf16.msra.mxu0 0
        %848 = vmatpush.bf16.msra.mxu0 0
        %849 = vmatpush.bf16.msra.mxu0 0
        %850 = vmatpush.bf16.msra.mxu0 %v768
        %851 = vmatpush.bf16.msra.mxu0 %v764
        %852 = vmatpush.bf16.msra.mxu0 %v760
        %853 = vmatpush.bf16.msra.mxu0 %v756
        %854 = vmatmul.bf16.gmra.mxu0 %v822
        %v855 = vpop.f32.mrf.mxu0
        %v856 = vadd.f32 %v837, %v855
        %v857 = vpop.f32.mrf.mxu0
        %v858 = vadd.f32 %v839, %v857
        %859 = vmatmul.bf16.gmra.mxu0 %v825
        %v860 = vpop.f32.mrf.mxu0
        %v861 = vadd.f32 %v842, %v860
        %v862 = vpop.f32.mrf.mxu0
        %v863 = vadd.f32 %v844, %v862
        %864 = vdwg.mxu0
        %865 = vmatpush.bf16.msra.mxu0 %v753
        %866 = vmatpush.bf16.msra.mxu0 %v749
        %867 = vmatpush.bf16.msra.mxu0 %v745
        %868 = vmatpush.bf16.msra.mxu0 %v741
        %869 = vmatpush.bf16.msra.mxu0 %v737
        %870 = vmatpush.bf16.msra.mxu0 %v733
        %871 = vmatpush.bf16.msra.mxu0 %v729
        %872 = vmatpush.bf16.msra.mxu0 %v725
        %873 = vmatmul.bf16.gmra.mxu0 %v574
        %v874 = vpop.f32.mrf.mxu0
        %v875 = vadd.f32 0.0, %v874
        %v876 = vpop.f32.mrf.mxu0
        %v877 = vadd.f32 0.0, %v876
        %878 = vmatmul.bf16.gmra.mxu0 %v576
        %v879 = vpop.f32.mrf.mxu0
        %v880 = vadd.f32 0.0, %v879
        %v881 = vpop.f32.mrf.mxu0
        %v882 = vadd.f32 0.0, %v881
        %883 = vdwg.mxu0
        %884 = vmatpush.bf16.msra.mxu0 0
        %885 = vmatpush.bf16.msra.mxu0 0
        %886 = vmatpush.bf16.msra.mxu0 0
        %887 = vmatpush.bf16.msra.mxu0 0
        %888 = vmatpush.bf16.msra.mxu0 %v769
        %889 = vmatpush.bf16.msra.mxu0 %v765
        %890 = vmatpush.bf16.msra.mxu0 %v761
        %891 = vmatpush.bf16.msra.mxu0 %v757
        %892 = vmatmul.bf16.gmra.mxu0 %v822
        %v893 = vpop.f32.mrf.mxu0
        %v894 = vadd.f32 %v875, %v893
        %v895 = vpop.f32.mrf.mxu0
        %v896 = vadd.f32 %v877, %v895
        %897 = vmatmul.bf16.gmra.mxu0 %v825
        %v898 = vpop.f32.mrf.mxu0
        %v899 = vadd.f32 %v880, %v898
        %v900 = vpop.f32.mrf.mxu0
        %v901 = vadd.f32 %v882, %v900
        %902 = vdwg.mxu0
        %903 = vmatpush.bf16.msra.mxu0 %v754
        %904 = vmatpush.bf16.msra.mxu0 %v750
        %905 = vmatpush.bf16.msra.mxu0 %v746
        %906 = vmatpush.bf16.msra.mxu0 %v742
        %907 = vmatpush.bf16.msra.mxu0 %v738
        %908 = vmatpush.bf16.msra.mxu0 %v734
        %909 = vmatpush.bf16.msra.mxu0 %v730
        %910 = vmatpush.bf16.msra.mxu0 %v726
        %911 = vmatmul.bf16.gmra.mxu0 %v574
        %v912 = vpop.f32.mrf.mxu0
        %v913 = vadd.f32 0.0, %v912
        %v914 = vpop.f32.mrf.mxu0
        %v915 = vadd.f32 0.0, %v914
        %916 = vmatmul.bf16.gmra.mxu0 %v576
        %v917 = vpop.f32.mrf.mxu0
        %v918 = vadd.f32 0.0, %v917
        %v919 = vpop.f32.mrf.mxu0
        %v920 = vadd.f32 0.0, %v919
        %921 = vdwg.mxu0
        %922 = vmatpush.bf16.msra.mxu0 0
        %923 = vmatpush.bf16.msra.mxu0 0
        %924 = vmatpush.bf16.msra.mxu0 0
        %925 = vmatpush.bf16.msra.mxu0 0
        %926 = vmatpush.bf16.msra.mxu0 %v770
        %927 = vmatpush.bf16.msra.mxu0 %v766
        %928 = vmatpush.bf16.msra.mxu0 %v762
        %929 = vmatpush.bf16.msra.mxu0 %v758
        %930 = vmatmul.bf16.gmra.mxu0 %v822
        %v931 = vpop.f32.mrf.mxu0
        %v932 = vadd.f32 %v913, %v931
        %v933 = vpop.f32.mrf.mxu0
        %v934 = vadd.f32 %v915, %v933
        %935 = vmatmul.bf16.gmra.mxu0 %v825
        %v936 = vpop.f32.mrf.mxu0
        %v937 = vadd.f32 %v918, %v936
        %v938 = vpop.f32.mrf.mxu0
        %v939 = vadd.f32 %v920, %v938
        %940 = vdwg.mxu0
        %941 = vmatpush.bf16.msra.mxu0 %v755
        %942 = vmatpush.bf16.msra.mxu0 %v751
        %943 = vmatpush.bf16.msra.mxu0 %v747
        %944 = vmatpush.bf16.msra.mxu0 %v743
        %945 = vmatpush.bf16.msra.mxu0 %v739
        %946 = vmatpush.bf16.msra.mxu0 %v735
        %947 = vmatpush.bf16.msra.mxu0 %v731
        %948 = vmatpush.bf16.msra.mxu0 %v727
        %949 = vmatmul.bf16.gmra.mxu0 %v574
        %v950 = vpop.f32.mrf.mxu0
        %v951 = vadd.f32 0.0, %v950
        %v952 = vpop.f32.mrf.mxu0
        %v953 = vadd.f32 0.0, %v952
        %954 = vmatmul.bf16.gmra.mxu0 %v576
        %v955 = vpop.f32.mrf.mxu0
        %v956 = vadd.f32 0.0, %v955
        %v957 = vpop.f32.mrf.mxu0
        %v958 = vadd.f32 0.0, %v957
        %959 = vdwg.mxu0
        %960 = vmatpush.bf16.msra.mxu0 0
        %961 = vmatpush.bf16.msra.mxu0 0
        %962 = vmatpush.bf16.msra.mxu0 0
        %963 = vmatpush.bf16.msra.mxu0 0
        %964 = vmatpush.bf16.msra.mxu0 %v771
        %965 = vmatpush.bf16.msra.mxu0 %v767
        %966 = vmatpush.bf16.msra.mxu0 %v763
        %967 = vmatpush.bf16.msra.mxu0 %v759
        %968 = vmatmul.bf16.gmra.mxu0 %v822
        %v969 = vpop.f32.mrf.mxu0
        %v970 = vadd.f32 %v951, %v969
        %v971 = vpop.f32.mrf.mxu0
        %v972 = vadd.f32 %v953, %v971
        %973 = vmatmul.bf16.gmra.mxu0 %v825
        %v974 = vpop.f32.mrf.mxu0
        %v975 = vadd.f32 %v956, %v974
        %v976 = vpop.f32.mrf.mxu0
        %v977 = vadd.f32 %v958, %v976
        %978 = vdwg.mxu0
        %v983 = vunpack.c.l.b16 %v456
        %v984 = vunpack.c.h.b16 %v456
        %v985 = vunpack.c.l.b16 %v457
        %v986 = vunpack.c.h.b16 %v457
        %v987 = vunpack.c.l.b16 %v458
        %v988 = vunpack.c.h.b16 %v458
        %v989 = vunpack.c.l.b16 %v459
        %v990 = vunpack.c.h.b16 %v459
        %v991 = vpack.c.b16 %v985, %v983
        %v992 = vpack.c.b16 %v986, %v984
        %v993 = vpack.c.b16 %v989, %v987
        %v994 = vpack.c.b16 %v990, %v988
        %v1045 = vunpack.c.l.b16 %v460
        %v1046 = vunpack.c.h.b16 %v460
        %v1047 = vunpack.c.l.b16 %v461
        %v1048 = vunpack.c.h.b16 %v461
        %v1049 = vunpack.c.l.b16 %v462
        %v1050 = vunpack.c.h.b16 %v462
        %v1051 = vunpack.c.l.b16 %v463
        %v1052 = vunpack.c.h.b16 %v463
        %v1053 = vunpack.c.l.b16 %v464
        %v1054 = vunpack.c.h.b16 %v464
        %v1055 = vunpack.c.l.b16 %v465
        %v1056 = vunpack.c.h.b16 %v465
        %v1057 = vunpack.c.l.b16 %v466
        %v1058 = vunpack.c.h.b16 %v466
        %v1059 = vunpack.c.l.b16 %v467
        %v1060 = vunpack.c.h.b16 %v467
        %v1061 = vunpack.c.l.b16 %v468
        %v1062 = vunpack.c.h.b16 %v468
        %v1063 = vunpack.c.l.b16 %v469
        %v1064 = vunpack.c.h.b16 %v469
        %v1065 = vunpack.c.l.b16 %v470
        %v1066 = vunpack.c.h.b16 %v470
        %v1067 = vunpack.c.l.b16 %v471
        %v1068 = vunpack.c.h.b16 %v471
        %v1069 = vunpack.c.l.b16 %v472
        %v1070 = vunpack.c.h.b16 %v472
        %v1071 = vunpack.c.l.b16 %v473
        %v1072 = vunpack.c.h.b16 %v473
        %v1073 = vunpack.c.l.b16 %v474
        %v1074 = vunpack.c.h.b16 %v474
        %v1075 = vunpack.c.l.b16 %v475
        %v1076 = vunpack.c.h.b16 %v475
        %v1077 = vunpack.c.l.b16 %v476
        %v1078 = vunpack.c.h.b16 %v476
        %v1079 = vunpack.c.l.b16 %v477
        %v1080 = vunpack.c.h.b16 %v477
        %v1081 = vunpack.c.l.b16 %v478
        %v1082 = vunpack.c.h.b16 %v478
        %v1083 = vunpack.c.l.b16 %v479
        %v1084 = vunpack.c.h.b16 %v479
        %v1085 = vunpack.c.l.b16 %v480
        %v1086 = vunpack.c.h.b16 %v480
        %v1087 = vunpack.c.l.b16 %v481
        %v1088 = vunpack.c.h.b16 %v481
        %v1089 = vunpack.c.l.b16 %v482
        %v1090 = vunpack.c.h.b16 %v482
        %v1091 = vunpack.c.l.b16 %v483
        %v1092 = vunpack.c.h.b16 %v483
        %v1093 = vunpack.c.l.b16 %v484
        %v1094 = vunpack.c.h.b16 %v484
        %v1095 = vunpack.c.l.b16 %v485
        %v1096 = vunpack.c.h.b16 %v485
        %v1097 = vunpack.c.l.b16 %v486
        %v1098 = vunpack.c.h.b16 %v486
        %v1099 = vunpack.c.l.b16 %v487
        %v1100 = vunpack.c.h.b16 %v487
        %v1101 = vunpack.c.l.b16 %v488
        %v1102 = vunpack.c.h.b16 %v488
        %v1103 = vunpack.c.l.b16 %v489
        %v1104 = vunpack.c.h.b16 %v489
        %v1105 = vunpack.c.l.b16 %v490
        %v1106 = vunpack.c.h.b16 %v490
        %v1107 = vunpack.c.l.b16 %v491
        %v1108 = vunpack.c.h.b16 %v491
        %v1109 = vunpack.c.l.b16 %v492
        %v1110 = vunpack.c.h.b16 %v492
        %v1111 = vunpack.c.l.b16 %v493
        %v1112 = vunpack.c.h.b16 %v493
        %v1113 = vunpack.c.l.b16 %v494
        %v1114 = vunpack.c.h.b16 %v494
        %v1115 = vunpack.c.l.b16 %v495
        %v1116 = vunpack.c.h.b16 %v495
        %v1117 = vunpack.c.l.b16 %v496
        %v1118 = vunpack.c.h.b16 %v496
        %v1119 = vunpack.c.l.b16 %v497
        %v1120 = vunpack.c.h.b16 %v497
        %v1121 = vunpack.c.l.b16 %v498
        %v1122 = vunpack.c.h.b16 %v498
        %v1123 = vunpack.c.l.b16 %v499
        %v1124 = vunpack.c.h.b16 %v499
        %v1125 = vunpack.c.l.b16 %v500
        %v1126 = vunpack.c.h.b16 %v500
        %v1127 = vunpack.c.l.b16 %v501
        %v1128 = vunpack.c.h.b16 %v501
        %v1129 = vunpack.c.l.b16 %v502
        %v1130 = vunpack.c.h.b16 %v502
        %v1131 = vunpack.c.l.b16 %v503
        %v1132 = vunpack.c.h.b16 %v503
        %v1133 = vunpack.c.l.b16 %v504
        %v1134 = vunpack.c.h.b16 %v504
        %v1135 = vunpack.c.l.b16 %v505
        %v1136 = vunpack.c.h.b16 %v505
        %v1137 = vunpack.c.l.b16 %v506
        %v1138 = vunpack.c.h.b16 %v506
        %v1139 = vunpack.c.l.b16 %v507
        %v1140 = vunpack.c.h.b16 %v507
        %v1141 = vpack.c.b16 %v1049, %v1045
        %v1142 = vpack.c.b16 %v1050, %v1046
        %v1143 = vpack.c.b16 %v1051, %v1047
        %v1144 = vpack.c.b16 %v1052, %v1048
        %v1145 = vpack.c.b16 %v1057, %v1053
        %v1146 = vpack.c.b16 %v1058, %v1054
        %v1147 = vpack.c.b16 %v1059, %v1055
        %v1148 = vpack.c.b16 %v1060, %v1056
        %v1149 = vpack.c.b16 %v1065, %v1061
        %v1150 = vpack.c.b16 %v1066, %v1062
        %v1151 = vpack.c.b16 %v1067, %v1063
        %v1152 = vpack.c.b16 %v1068, %v1064
        %v1153 = vpack.c.b16 %v1073, %v1069
        %v1154 = vpack.c.b16 %v1074, %v1070
        %v1155 = vpack.c.b16 %v1075, %v1071
        %v1156 = vpack.c.b16 %v1076, %v1072
        %v1157 = vpack.c.b16 %v1081, %v1077
        %v1158 = vpack.c.b16 %v1082, %v1078
        %v1159 = vpack.c.b16 %v1083, %v1079
        %v1160 = vpack.c.b16 %v1084, %v1080
        %v1161 = vpack.c.b16 %v1089, %v1085
        %v1162 = vpack.c.b16 %v1090, %v1086
        %v1163 = vpack.c.b16 %v1091, %v1087
        %v1164 = vpack.c.b16 %v1092, %v1088
        %v1165 = vpack.c.b16 %v1097, %v1093
        %v1166 = vpack.c.b16 %v1098, %v1094
        %v1167 = vpack.c.b16 %v1099, %v1095
        %v1168 = vpack.c.b16 %v1100, %v1096
        %v1169 = vpack.c.b16 %v1105, %v1101
        %v1170 = vpack.c.b16 %v1106, %v1102
        %v1171 = vpack.c.b16 %v1107, %v1103
        %v1172 = vpack.c.b16 %v1108, %v1104
        %v1173 = vpack.c.b16 %v1113, %v1109
        %v1174 = vpack.c.b16 %v1114, %v1110
        %v1175 = vpack.c.b16 %v1115, %v1111
        %v1176 = vpack.c.b16 %v1116, %v1112
        %v1177 = vpack.c.b16 %v1121, %v1117
        %v1178 = vpack.c.b16 %v1122, %v1118
        %v1179 = vpack.c.b16 %v1123, %v1119
        %v1180 = vpack.c.b16 %v1124, %v1120
        %v1181 = vpack.c.b16 %v1129, %v1125
        %v1182 = vpack.c.b16 %v1130, %v1126
        %v1183 = vpack.c.b16 %v1131, %v1127
        %v1184 = vpack.c.b16 %v1132, %v1128
        %v1185 = vpack.c.b16 %v1137, %v1133
        %v1186 = vpack.c.b16 %v1138, %v1134
        %v1187 = vpack.c.b16 %v1139, %v1135
        %v1188 = vpack.c.b16 %v1140, %v1136
        %v1238 = vsel %vm820, %v992, 0
        %v1241 = vsel %vm820, %v994, 0
        %1243 = vmatpush.bf16.msra.mxu0 %v1169
        %1244 = vmatpush.bf16.msra.mxu0 %v1165
        %1245 = vmatpush.bf16.msra.mxu0 %v1161
        %1246 = vmatpush.bf16.msra.mxu0 %v1157
        %1247 = vmatpush.bf16.msra.mxu0 %v1153
        %1248 = vmatpush.bf16.msra.mxu0 %v1149
        %1249 = vmatpush.bf16.msra.mxu0 %v1145
        %1250 = vmatpush.bf16.msra.mxu0 %v1141
        %1251 = vmatmul.bf16.gmra.mxu0 %v991
        %v1252 = vpop.f32.mrf.mxu0
        %v1253 = vadd.f32 %v856, %v1252
        %v1254 = vpop.f32.mrf.mxu0
        %v1255 = vadd.f32 %v858, %v1254
        %1256 = vmatmul.bf16.gmra.mxu0 %v993
        %v1257 = vpop.f32.mrf.mxu0
        %v1258 = vadd.f32 %v861, %v1257
        %v1259 = vpop.f32.mrf.mxu0
        %v1260 = vadd.f32 %v863, %v1259
        %1261 = vdwg.mxu0
        %1262 = vmatpush.bf16.msra.mxu0 0
        %1263 = vmatpush.bf16.msra.mxu0 0
        %1264 = vmatpush.bf16.msra.mxu0 0
        %1265 = vmatpush.bf16.msra.mxu0 0
        %1266 = vmatpush.bf16.msra.mxu0 %v1185
        %1267 = vmatpush.bf16.msra.mxu0 %v1181
        %1268 = vmatpush.bf16.msra.mxu0 %v1177
        %1269 = vmatpush.bf16.msra.mxu0 %v1173
        %1270 = vmatmul.bf16.gmra.mxu0 %v1238
        %v1271 = vpop.f32.mrf.mxu0
        %v1272 = vadd.f32 %v1253, %v1271
        %v1273 = vpop.f32.mrf.mxu0
        %v1274 = vadd.f32 %v1255, %v1273
        %1275 = vmatmul.bf16.gmra.mxu0 %v1241
        %v1276 = vpop.f32.mrf.mxu0
        %v1277 = vadd.f32 %v1258, %v1276
        %v1278 = vpop.f32.mrf.mxu0
        %v1279 = vadd.f32 %v1260, %v1278
        %1280 = vdwg.mxu0
        %1281 = vmatpush.bf16.msra.mxu0 %v1170
        %1282 = vmatpush.bf16.msra.mxu0 %v1166
        %1283 = vmatpush.bf16.msra.mxu0 %v1162
        %1284 = vmatpush.bf16.msra.mxu0 %v1158
        %1285 = vmatpush.bf16.msra.mxu0 %v1154
        %1286 = vmatpush.bf16.msra.mxu0 %v1150
        %1287 = vmatpush.bf16.msra.mxu0 %v1146
        %1288 = vmatpush.bf16.msra.mxu0 %v1142
        %1289 = vmatmul.bf16.gmra.mxu0 %v991
        %v1290 = vpop.f32.mrf.mxu0
        %v1291 = vadd.f32 %v894, %v1290
        %v1292 = vpop.f32.mrf.mxu0
        %v1293 = vadd.f32 %v896, %v1292
        %1294 = vmatmul.bf16.gmra.mxu0 %v993
        %v1295 = vpop.f32.mrf.mxu0
        %v1296 = vadd.f32 %v899, %v1295
        %v1297 = vpop.f32.mrf.mxu0
        %v1298 = vadd.f32 %v901, %v1297
        %1299 = vdwg.mxu0
        %1300 = vmatpush.bf16.msra.mxu0 0
        %1301 = vmatpush.bf16.msra.mxu0 0
        %1302 = vmatpush.bf16.msra.mxu0 0
        %1303 = vmatpush.bf16.msra.mxu0 0
        %1304 = vmatpush.bf16.msra.mxu0 %v1186
        %1305 = vmatpush.bf16.msra.mxu0 %v1182
        %1306 = vmatpush.bf16.msra.mxu0 %v1178
        %1307 = vmatpush.bf16.msra.mxu0 %v1174
        %1308 = vmatmul.bf16.gmra.mxu0 %v1238
        %v1309 = vpop.f32.mrf.mxu0
        %v1310 = vadd.f32 %v1291, %v1309
        %v1311 = vpop.f32.mrf.mxu0
        %v1312 = vadd.f32 %v1293, %v1311
        %1313 = vmatmul.bf16.gmra.mxu0 %v1241
        %v1314 = vpop.f32.mrf.mxu0
        %v1315 = vadd.f32 %v1296, %v1314
        %v1316 = vpop.f32.mrf.mxu0
        %v1317 = vadd.f32 %v1298, %v1316
        %1318 = vdwg.mxu0
        %1319 = vmatpush.bf16.msra.mxu0 %v1171
        %1320 = vmatpush.bf16.msra.mxu0 %v1167
        %1321 = vmatpush.bf16.msra.mxu0 %v1163
        %1322 = vmatpush.bf16.msra.mxu0 %v1159
        %1323 = vmatpush.bf16.msra.mxu0 %v1155
        %1324 = vmatpush.bf16.msra.mxu0 %v1151
        %1325 = vmatpush.bf16.msra.mxu0 %v1147
        %1326 = vmatpush.bf16.msra.mxu0 %v1143
        %1327 = vmatmul.bf16.gmra.mxu0 %v991
        %v1328 = vpop.f32.mrf.mxu0
        %v1329 = vadd.f32 %v932, %v1328
        %v1330 = vpop.f32.mrf.mxu0
        %v1331 = vadd.f32 %v934, %v1330
        %1332 = vmatmul.bf16.gmra.mxu0 %v993
        %v1333 = vpop.f32.mrf.mxu0
        %v1334 = vadd.f32 %v937, %v1333
        %v1335 = vpop.f32.mrf.mxu0
        %v1336 = vadd.f32 %v939, %v1335
        %1337 = vdwg.mxu0
        %1338 = vmatpush.bf16.msra.mxu0 0
        %1339 = vmatpush.bf16.msra.mxu0 0
        %1340 = vmatpush.bf16.msra.mxu0 0
        %1341 = vmatpush.bf16.msra.mxu0 0
        %1342 = vmatpush.bf16.msra.mxu0 %v1187
        %1343 = vmatpush.bf16.msra.mxu0 %v1183
        %1344 = vmatpush.bf16.msra.mxu0 %v1179
        %1345 = vmatpush.bf16.msra.mxu0 %v1175
        %1346 = vmatmul.bf16.gmra.mxu0 %v1238
        %v1347 = vpop.f32.mrf.mxu0
        %v1348 = vadd.f32 %v1329, %v1347
        %v1349 = vpop.f32.mrf.mxu0
        %v1350 = vadd.f32 %v1331, %v1349
        %1351 = vmatmul.bf16.gmra.mxu0 %v1241
        %v1352 = vpop.f32.mrf.mxu0
        %v1353 = vadd.f32 %v1334, %v1352
        %v1354 = vpop.f32.mrf.mxu0
        %v1355 = vadd.f32 %v1336, %v1354
        %1356 = vdwg.mxu0
        %1357 = vmatpush.bf16.msra.mxu0 %v1172
        %1358 = vmatpush.bf16.msra.mxu0 %v1168
        %1359 = vmatpush.bf16.msra.mxu0 %v1164
        %1360 = vmatpush.bf16.msra.mxu0 %v1160
        %1361 = vmatpush.bf16.msra.mxu0 %v1156
        %1362 = vmatpush.bf16.msra.mxu0 %v1152
        %1363 = vmatpush.bf16.msra.mxu0 %v1148
        %1364 = vmatpush.bf16.msra.mxu0 %v1144
        %1365 = vmatmul.bf16.gmra.mxu0 %v991
        %v1366 = vpop.f32.mrf.mxu0
        %v1367 = vadd.f32 %v970, %v1366
        %v1368 = vpop.f32.mrf.mxu0
        %v1369 = vadd.f32 %v972, %v1368
        %1370 = vmatmul.bf16.gmra.mxu0 %v993
        %v1371 = vpop.f32.mrf.mxu0
        %v1372 = vadd.f32 %v975, %v1371
        %v1373 = vpop.f32.mrf.mxu0
        %v1374 = vadd.f32 %v977, %v1373
        %1375 = vdwg.mxu0
        %1376 = vmatpush.bf16.msra.mxu0 0
        %1377 = vmatpush.bf16.msra.mxu0 0
        %1378 = vmatpush.bf16.msra.mxu0 0
        %1379 = vmatpush.bf16.msra.mxu0 0
        %1380 = vmatpush.bf16.msra.mxu0 %v1188
        %1381 = vmatpush.bf16.msra.mxu0 %v1184
        %1382 = vmatpush.bf16.msra.mxu0 %v1180
        %1383 = vmatpush.bf16.msra.mxu0 %v1176
        %1384 = vmatmul.bf16.gmra.mxu0 %v1238
        %v1385 = vpop.f32.mrf.mxu0
        %v1386 = vadd.f32 %v1367, %v1385
        %v1387 = vpop.f32.mrf.mxu0
        %v1388 = vadd.f32 %v1369, %v1387
        %1389 = vmatmul.bf16.gmra.mxu0 %v1241
        %v1390 = vpop.f32.mrf.mxu0
        %v1391 = vadd.f32 %v1372, %v1390
        %v1392 = vpop.f32.mrf.mxu0
        %v1393 = vadd.f32 %v1374, %v1392
        %1394 = vdwg.mxu0
        %s1395 = scalar_lea.vmem %s454, 64
        %v1396 = vld [vmem:[%s1395] sm:$0xff]
        %v1397 = vld [vmem:[%s1395 + $0x8] sm:$0xff]
        %v1398 = vld [vmem:[%s1395 + $0x10] sm:$0xff]
        %v1399 = vld [vmem:[%s1395 + $0x18] sm:$0xff]
        %s1400 = scalar_lea.vmem [#allocation2], 768
        %v1401 = vld [vmem:[%s1400] sm:$0xff]
        %v1402 = vld [vmem:[%s1400 + $0x8] sm:$0xff]
        %v1403 = vld [vmem:[%s1400 + $0x10] sm:$0xff]
        %v1404 = vld [vmem:[%s1400 + $0x18] sm:$0xff]
        %v1405 = vld [vmem:[%s1400 + $0x20] sm:$0xff]
        %v1406 = vld [vmem:[%s1400 + $0x28] sm:$0xff]
        %v1407 = vld [vmem:[%s1400 + $0x30] sm:$0xff]
        %v1408 = vld [vmem:[%s1400 + $0x38] sm:$0xff]
        %v1409 = vld [vmem:[%s1400 + $0x40] sm:$0xff]
        %v1410 = vld [vmem:[%s1400 + $0x48] sm:$0xff]
        %v1411 = vld [vmem:[%s1400 + $0x50] sm:$0xff]
        %v1412 = vld [vmem:[%s1400 + $0x58] sm:$0xff]
        %v1413 = vld [vmem:[%s1400 + $0x60] sm:$0xff]
        %v1414 = vld [vmem:[%s1400 + $0x68] sm:$0xff]
        %v1415 = vld [vmem:[%s1400 + $0x70] sm:$0xff]
        %v1416 = vld [vmem:[%s1400 + $0x78] sm:$0xff]
        %v1417 = vld [vmem:[%s1400 + $0x80] sm:$0xff]
        %v1418 = vld [vmem:[%s1400 + $0x88] sm:$0xff]
        %v1419 = vld [vmem:[%s1400 + $0x90] sm:$0xff]
        %v1420 = vld [vmem:[%s1400 + $0x98] sm:$0xff]
        %v1421 = vld [vmem:[%s1400 + $0xa0] sm:$0xff]
        %v1422 = vld [vmem:[%s1400 + $0xa8] sm:$0xff]
        %v1423 = vld [vmem:[%s1400 + $0xb0] sm:$0xff]
        %v1424 = vld [vmem:[%s1400 + $0xb8] sm:$0xff]
        %v1425 = vld [vmem:[%s1400 + $0xc0] sm:$0xff]
        %v1426 = vld [vmem:[%s1400 + $0xc8] sm:$0xff]
        %v1427 = vld [vmem:[%s1400 + $0xd0] sm:$0xff]
        %v1428 = vld [vmem:[%s1400 + $0xd8] sm:$0xff]
        %v1429 = vld [vmem:[%s1400 + $0xe0] sm:$0xff]
        %v1430 = vld [vmem:[%s1400 + $0xe8] sm:$0xff]
        %v1431 = vld [vmem:[%s1400 + $0xf0] sm:$0xff]
        %v1432 = vld [vmem:[%s1400 + $0xf8] sm:$0xff]
        %v1433 = vld [vmem:[%s1400 + $0x100] sm:$0xff]
        %v1434 = vld [vmem:[%s1400 + $0x108] sm:$0xff]
        %v1435 = vld [vmem:[%s1400 + $0x110] sm:$0xff]
        %v1436 = vld [vmem:[%s1400 + $0x118] sm:$0xff]
        %v1437 = vld [vmem:[%s1400 + $0x120] sm:$0xff]
        %v1438 = vld [vmem:[%s1400 + $0x128] sm:$0xff]
        %v1439 = vld [vmem:[%s1400 + $0x130] sm:$0xff]
        %v1440 = vld [vmem:[%s1400 + $0x138] sm:$0xff]
        %v1441 = vld [vmem:[%s1400 + $0x140] sm:$0xff]
        %v1442 = vld [vmem:[%s1400 + $0x148] sm:$0xff]
        %v1443 = vld [vmem:[%s1400 + $0x150] sm:$0xff]
        %v1444 = vld [vmem:[%s1400 + $0x158] sm:$0xff]
        %v1445 = vld [vmem:[%s1400 + $0x160] sm:$0xff]
        %v1446 = vld [vmem:[%s1400 + $0x168] sm:$0xff]
        %v1447 = vld [vmem:[%s1400 + $0x170] sm:$0xff]
        %v1448 = vld [vmem:[%s1400 + $0x178] sm:$0xff]
        %v1453 = vunpack.c.l.b16 %v1396
        %v1454 = vunpack.c.h.b16 %v1396
        %v1455 = vunpack.c.l.b16 %v1397
        %v1456 = vunpack.c.h.b16 %v1397
        %v1457 = vunpack.c.l.b16 %v1398
        %v1458 = vunpack.c.h.b16 %v1398
        %v1459 = vunpack.c.l.b16 %v1399
        %v1460 = vunpack.c.h.b16 %v1399
        %v1461 = vpack.c.b16 %v1455, %v1453
        %v1462 = vpack.c.b16 %v1456, %v1454
        %v1463 = vpack.c.b16 %v1459, %v1457
        %v1464 = vpack.c.b16 %v1460, %v1458
        %v1515 = vunpack.c.l.b16 %v1401
        %v1516 = vunpack.c.h.b16 %v1401
        %v1517 = vunpack.c.l.b16 %v1402
        %v1518 = vunpack.c.h.b16 %v1402
        %v1519 = vunpack.c.l.b16 %v1403
        %v1520 = vunpack.c.h.b16 %v1403
        %v1521 = vunpack.c.l.b16 %v1404
        %v1522 = vunpack.c.h.b16 %v1404
        %v1523 = vunpack.c.l.b16 %v1405
        %v1524 = vunpack.c.h.b16 %v1405
        %v1525 = vunpack.c.l.b16 %v1406
        %v1526 = vunpack.c.h.b16 %v1406
        %v1527 = vunpack.c.l.b16 %v1407
        %v1528 = vunpack.c.h.b16 %v1407
        %v1529 = vunpack.c.l.b16 %v1408
        %v1530 = vunpack.c.h.b16 %v1408
        %v1531 = vunpack.c.l.b16 %v1409
        %v1532 = vunpack.c.h.b16 %v1409
        %v1533 = vunpack.c.l.b16 %v1410
        %v1534 = vunpack.c.h.b16 %v1410
        %v1535 = vunpack.c.l.b16 %v1411
        %v1536 = vunpack.c.h.b16 %v1411
        %v1537 = vunpack.c.l.b16 %v1412
        %v1538 = vunpack.c.h.b16 %v1412
        %v1539 = vunpack.c.l.b16 %v1413
        %v1540 = vunpack.c.h.b16 %v1413
        %v1541 = vunpack.c.l.b16 %v1414
        %v1542 = vunpack.c.h.b16 %v1414
        %v1543 = vunpack.c.l.b16 %v1415
        %v1544 = vunpack.c.h.b16 %v1415
        %v1545 = vunpack.c.l.b16 %v1416
        %v1546 = vunpack.c.h.b16 %v1416
        %v1547 = vunpack.c.l.b16 %v1417
        %v1548 = vunpack.c.h.b16 %v1417
        %v1549 = vunpack.c.l.b16 %v1418
        %v1550 = vunpack.c.h.b16 %v1418
        %v1551 = vunpack.c.l.b16 %v1419
        %v1552 = vunpack.c.h.b16 %v1419
        %v1553 = vunpack.c.l.b16 %v1420
        %v1554 = vunpack.c.h.b16 %v1420
        %v1555 = vunpack.c.l.b16 %v1421
        %v1556 = vunpack.c.h.b16 %v1421
        %v1557 = vunpack.c.l.b16 %v1422
        %v1558 = vunpack.c.h.b16 %v1422
        %v1559 = vunpack.c.l.b16 %v1423
        %v1560 = vunpack.c.h.b16 %v1423
        %v1561 = vunpack.c.l.b16 %v1424
        %v1562 = vunpack.c.h.b16 %v1424
        %v1563 = vunpack.c.l.b16 %v1425
        %v1564 = vunpack.c.h.b16 %v1425
        %v1565 = vunpack.c.l.b16 %v1426
        %v1566 = vunpack.c.h.b16 %v1426
        %v1567 = vunpack.c.l.b16 %v1427
        %v1568 = vunpack.c.h.b16 %v1427
        %v1569 = vunpack.c.l.b16 %v1428
        %v1570 = vunpack.c.h.b16 %v1428
        %v1571 = vunpack.c.l.b16 %v1429
        %v1572 = vunpack.c.h.b16 %v1429
        %v1573 = vunpack.c.l.b16 %v1430
        %v1574 = vunpack.c.h.b16 %v1430
        %v1575 = vunpack.c.l.b16 %v1431
        %v1576 = vunpack.c.h.b16 %v1431
        %v1577 = vunpack.c.l.b16 %v1432
        %v1578 = vunpack.c.h.b16 %v1432
        %v1579 = vunpack.c.l.b16 %v1433
        %v1580 = vunpack.c.h.b16 %v1433
        %v1581 = vunpack.c.l.b16 %v1434
        %v1582 = vunpack.c.h.b16 %v1434
        %v1583 = vunpack.c.l.b16 %v1435
        %v1584 = vunpack.c.h.b16 %v1435
        %v1585 = vunpack.c.l.b16 %v1436
        %v1586 = vunpack.c.h.b16 %v1436
        %v1587 = vunpack.c.l.b16 %v1437
        %v1588 = vunpack.c.h.b16 %v1437
        %v1589 = vunpack.c.l.b16 %v1438
        %v1590 = vunpack.c.h.b16 %v1438
        %v1591 = vunpack.c.l.b16 %v1439
        %v1592 = vunpack.c.h.b16 %v1439
        %v1593 = vunpack.c.l.b16 %v1440
        %v1594 = vunpack.c.h.b16 %v1440
        %v1595 = vunpack.c.l.b16 %v1441
        %v1596 = vunpack.c.h.b16 %v1441
        %v1597 = vunpack.c.l.b16 %v1442
        %v1598 = vunpack.c.h.b16 %v1442
        %v1599 = vunpack.c.l.b16 %v1443
        %v1600 = vunpack.c.h.b16 %v1443
        %v1601 = vunpack.c.l.b16 %v1444
        %v1602 = vunpack.c.h.b16 %v1444
        %v1603 = vunpack.c.l.b16 %v1445
        %v1604 = vunpack.c.h.b16 %v1445
        %v1605 = vunpack.c.l.b16 %v1446
        %v1606 = vunpack.c.h.b16 %v1446
        %v1607 = vunpack.c.l.b16 %v1447
        %v1608 = vunpack.c.h.b16 %v1447
        %v1609 = vunpack.c.l.b16 %v1448
        %v1610 = vunpack.c.h.b16 %v1448
        %v1611 = vpack.c.b16 %v1519, %v1515
        %v1612 = vpack.c.b16 %v1520, %v1516
        %v1613 = vpack.c.b16 %v1521, %v1517
        %v1614 = vpack.c.b16 %v1522, %v1518
        %v1615 = vpack.c.b16 %v1527, %v1523
        %v1616 = vpack.c.b16 %v1528, %v1524
        %v1617 = vpack.c.b16 %v1529, %v1525
        %v1618 = vpack.c.b16 %v1530, %v1526
        %v1619 = vpack.c.b16 %v1535, %v1531
        %v1620 = vpack.c.b16 %v1536, %v1532
        %v1621 = vpack.c.b16 %v1537, %v1533
        %v1622 = vpack.c.b16 %v1538, %v1534
        %v1623 = vpack.c.b16 %v1543, %v1539
        %v1624 = vpack.c.b16 %v1544, %v1540
        %v1625 = vpack.c.b16 %v1545, %v1541
        %v1626 = vpack.c.b16 %v1546, %v1542
        %v1627 = vpack.c.b16 %v1551, %v1547
        %v1628 = vpack.c.b16 %v1552, %v1548
        %v1629 = vpack.c.b16 %v1553, %v1549
        %v1630 = vpack.c.b16 %v1554, %v1550
        %v1631 = vpack.c.b16 %v1559, %v1555
        %v1632 = vpack.c.b16 %v1560, %v1556
        %v1633 = vpack.c.b16 %v1561, %v1557
        %v1634 = vpack.c.b16 %v1562, %v1558
        %v1635 = vpack.c.b16 %v1567, %v1563
        %v1636 = vpack.c.b16 %v1568, %v1564
        %v1637 = vpack.c.b16 %v1569, %v1565
        %v1638 = vpack.c.b16 %v1570, %v1566
        %v1639 = vpack.c.b16 %v1575, %v1571
        %v1640 = vpack.c.b16 %v1576, %v1572
        %v1641 = vpack.c.b16 %v1577, %v1573
        %v1642 = vpack.c.b16 %v1578, %v1574
        %v1643 = vpack.c.b16 %v1583, %v1579
        %v1644 = vpack.c.b16 %v1584, %v1580
        %v1645 = vpack.c.b16 %v1585, %v1581
        %v1646 = vpack.c.b16 %v1586, %v1582
        %v1647 = vpack.c.b16 %v1591, %v1587
        %v1648 = vpack.c.b16 %v1592, %v1588
        %v1649 = vpack.c.b16 %v1593, %v1589
        %v1650 = vpack.c.b16 %v1594, %v1590
        %v1651 = vpack.c.b16 %v1599, %v1595
        %v1652 = vpack.c.b16 %v1600, %v1596
        %v1653 = vpack.c.b16 %v1601, %v1597
        %v1654 = vpack.c.b16 %v1602, %v1598
        %v1655 = vpack.c.b16 %v1607, %v1603
        %v1656 = vpack.c.b16 %v1608, %v1604
        %v1657 = vpack.c.b16 %v1609, %v1605
        %v1658 = vpack.c.b16 %v1610, %v1606
        %v1708 = vsel %vm820, %v1462, 0
        %v1711 = vsel %vm820, %v1464, 0
        %1713 = vmatpush.bf16.msra.mxu0 %v1639
        %1714 = vmatpush.bf16.msra.mxu0 %v1635
        %1715 = vmatpush.bf16.msra.mxu0 %v1631
        %1716 = vmatpush.bf16.msra.mxu0 %v1627
        %1717 = vmatpush.bf16.msra.mxu0 %v1623
        %1718 = vmatpush.bf16.msra.mxu0 %v1619
        %1719 = vmatpush.bf16.msra.mxu0 %v1615
        %1720 = vmatpush.bf16.msra.mxu0 %v1611
        %1721 = vmatmul.bf16.gmra.mxu0 %v1461
        %v1722 = vpop.f32.mrf.mxu0
        %v1723 = vadd.f32 0.0, %v1722
        %v1724 = vpop.f32.mrf.mxu0
        %v1725 = vadd.f32 0.0, %v1724
        %1726 = vmatmul.bf16.gmra.mxu0 %v1463
        %v1727 = vpop.f32.mrf.mxu0
        %v1728 = vadd.f32 0.0, %v1727
        %v1729 = vpop.f32.mrf.mxu0
        %v1730 = vadd.f32 0.0, %v1729
        %1731 = vdwg.mxu0
        %1732 = vmatpush.bf16.msra.mxu0 0
        %1733 = vmatpush.bf16.msra.mxu0 0
        %1734 = vmatpush.bf16.msra.mxu0 0
        %1735 = vmatpush.bf16.msra.mxu0 0
        %1736 = vmatpush.bf16.msra.mxu0 %v1655
        %1737 = vmatpush.bf16.msra.mxu0 %v1651
        %1738 = vmatpush.bf16.msra.mxu0 %v1647
        %1739 = vmatpush.bf16.msra.mxu0 %v1643
        %1740 = vmatmul.bf16.gmra.mxu0 %v1708
        %v1741 = vpop.f32.mrf.mxu0
        %v1742 = vadd.f32 %v1723, %v1741
        %v1743 = vpop.f32.mrf.mxu0
        %v1744 = vadd.f32 %v1725, %v1743
        %1745 = vmatmul.bf16.gmra.mxu0 %v1711
        %v1746 = vpop.f32.mrf.mxu0
        %v1747 = vadd.f32 %v1728, %v1746
        %v1748 = vpop.f32.mrf.mxu0
        %v1749 = vadd.f32 %v1730, %v1748
        %1750 = vdwg.mxu0
        %1751 = vmatpush.bf16.msra.mxu0 %v1640
        %1752 = vmatpush.bf16.msra.mxu0 %v1636
        %1753 = vmatpush.bf16.msra.mxu0 %v1632
        %1754 = vmatpush.bf16.msra.mxu0 %v1628
        %1755 = vmatpush.bf16.msra.mxu0 %v1624
        %1756 = vmatpush.bf16.msra.mxu0 %v1620
        %1757 = vmatpush.bf16.msra.mxu0 %v1616
        %1758 = vmatpush.bf16.msra.mxu0 %v1612
        %1759 = vmatmul.bf16.gmra.mxu0 %v1461
        %v1760 = vpop.f32.mrf.mxu0
        %v1761 = vadd.f32 0.0, %v1760
        %v1762 = vpop.f32.mrf.mxu0
        %v1763 = vadd.f32 0.0, %v1762
        %1764 = vmatmul.bf16.gmra.mxu0 %v1463
        %v1765 = vpop.f32.mrf.mxu0
        %v1766 = vadd.f32 0.0, %v1765
        %v1767 = vpop.f32.mrf.mxu0
        %v1768 = vadd.f32 0.0, %v1767
        %1769 = vdwg.mxu0
        %1770 = vmatpush.bf16.msra.mxu0 0
        %1771 = vmatpush.bf16.msra.mxu0 0
        %1772 = vmatpush.bf16.msra.mxu0 0
        %1773 = vmatpush.bf16.msra.mxu0 0
        %1774 = vmatpush.bf16.msra.mxu0 %v1656
        %1775 = vmatpush.bf16.msra.mxu0 %v1652
        %1776 = vmatpush.bf16.msra.mxu0 %v1648
        %1777 = vmatpush.bf16.msra.mxu0 %v1644
        %1778 = vmatmul.bf16.gmra.mxu0 %v1708
        %v1779 = vpop.f32.mrf.mxu0
        %v1780 = vadd.f32 %v1761, %v1779
        %v1781 = vpop.f32.mrf.mxu0
        %v1782 = vadd.f32 %v1763, %v1781
        %1783 = vmatmul.bf16.gmra.mxu0 %v1711
        %v1784 = vpop.f32.mrf.mxu0
        %v1785 = vadd.f32 %v1766, %v1784
        %v1786 = vpop.f32.mrf.mxu0
        %v1787 = vadd.f32 %v1768, %v1786
        %1788 = vdwg.mxu0
        %1789 = vmatpush.bf16.msra.mxu0 %v1641
        %1790 = vmatpush.bf16.msra.mxu0 %v1637
        %1791 = vmatpush.bf16.msra.mxu0 %v1633
        %1792 = vmatpush.bf16.msra.mxu0 %v1629
        %1793 = vmatpush.bf16.msra.mxu0 %v1625
        %1794 = vmatpush.bf16.msra.mxu0 %v1621
        %1795 = vmatpush.bf16.msra.mxu0 %v1617
        %1796 = vmatpush.bf16.msra.mxu0 %v1613
        %1797 = vmatmul.bf16.gmra.mxu0 %v1461
        %v1798 = vpop.f32.mrf.mxu0
        %v1799 = vadd.f32 0.0, %v1798
        %v1800 = vpop.f32.mrf.mxu0
        %v1801 = vadd.f32 0.0, %v1800
        %1802 = vmatmul.bf16.gmra.mxu0 %v1463
        %v1803 = vpop.f32.mrf.mxu0
        %v1804 = vadd.f32 0.0, %v1803
        %v1805 = vpop.f32.mrf.mxu0
        %v1806 = vadd.f32 0.0, %v1805
        %1807 = vdwg.mxu0
        %1808 = vmatpush.bf16.msra.mxu0 0
        %1809 = vmatpush.bf16.msra.mxu0 0
        %1810 = vmatpush.bf16.msra.mxu0 0
        %1811 = vmatpush.bf16.msra.mxu0 0
        %1812 = vmatpush.bf16.msra.mxu0 %v1657
        %1813 = vmatpush.bf16.msra.mxu0 %v1653
        %1814 = vmatpush.bf16.msra.mxu0 %v1649
        %1815 = vmatpush.bf16.msra.mxu0 %v1645
        %1816 = vmatmul.bf16.gmra.mxu0 %v1708
        %v1817 = vpop.f32.mrf.mxu0
        %v1818 = vadd.f32 %v1799, %v1817
        %v1819 = vpop.f32.mrf.mxu0
        %v1820 = vadd.f32 %v1801, %v1819
        %1821 = vmatmul.bf16.gmra.mxu0 %v1711
        %v1822 = vpop.f32.mrf.mxu0
        %v1823 = vadd.f32 %v1804, %v1822
        %v1824 = vpop.f32.mrf.mxu0
        %v1825 = vadd.f32 %v1806, %v1824
        %1826 = vdwg.mxu0
        %1827 = vmatpush.bf16.msra.mxu0 %v1642
        %1828 = vmatpush.bf16.msra.mxu0 %v1638
        %1829 = vmatpush.bf16.msra.mxu0 %v1634
        %1830 = vmatpush.bf16.msra.mxu0 %v1630
        %1831 = vmatpush.bf16.msra.mxu0 %v1626
        %1832 = vmatpush.bf16.msra.mxu0 %v1622
        %1833 = vmatpush.bf16.msra.mxu0 %v1618
        %1834 = vmatpush.bf16.msra.mxu0 %v1614
        %1835 = vmatmul.bf16.gmra.mxu0 %v1461
        %v1836 = vpop.f32.mrf.mxu0
        %v1837 = vadd.f32 0.0, %v1836
        %v1838 = vpop.f32.mrf.mxu0
        %v1839 = vadd.f32 0.0, %v1838
        %1840 = vmatmul.bf16.gmra.mxu0 %v1463
        %v1841 = vpop.f32.mrf.mxu0
        %v1842 = vadd.f32 0.0, %v1841
        %v1843 = vpop.f32.mrf.mxu0
        %v1844 = vadd.f32 0.0, %v1843
        %1845 = vdwg.mxu0
        %1846 = vmatpush.bf16.msra.mxu0 0
        %1847 = vmatpush.bf16.msra.mxu0 0
        %1848 = vmatpush.bf16.msra.mxu0 0
        %1849 = vmatpush.bf16.msra.mxu0 0
        %1850 = vmatpush.bf16.msra.mxu0 %v1658
        %1851 = vmatpush.bf16.msra.mxu0 %v1654
        %1852 = vmatpush.bf16.msra.mxu0 %v1650
        %1853 = vmatpush.bf16.msra.mxu0 %v1646
        %1854 = vmatmul.bf16.gmra.mxu0 %v1708
        %v1855 = vpop.f32.mrf.mxu0
        %v1856 = vadd.f32 %v1837, %v1855
        %v1857 = vpop.f32.mrf.mxu0
        %v1858 = vadd.f32 %v1839, %v1857
        %1859 = vmatmul.bf16.gmra.mxu0 %v1711
        %v1860 = vpop.f32.mrf.mxu0
        %v1861 = vadd.f32 %v1842, %v1860
        %v1862 = vpop.f32.mrf.mxu0
        %v1863 = vadd.f32 %v1844, %v1862
        %1864 = vdwg.mxu0
        %v1865 = vadd.f32 %v1272, %v1742
        %v1866 = vadd.f32 %v1310, %v1780
        %v1867 = vadd.f32 %v1348, %v1818
        %v1868 = vadd.f32 %v1386, %v1856
        %v1869 = vadd.f32 %v1274, %v1744
        %v1870 = vadd.f32 %v1312, %v1782
        %v1871 = vadd.f32 %v1350, %v1820
        %v1872 = vadd.f32 %v1388, %v1858
        %v1873 = vadd.f32 %v1277, %v1747
        %v1874 = vadd.f32 %v1315, %v1785
        %v1875 = vadd.f32 %v1353, %v1823
        %v1876 = vadd.f32 %v1391, %v1861
        %v1877 = vadd.f32 %v1279, %v1749
        %v1878 = vadd.f32 %v1317, %v1787
        %v1879 = vadd.f32 %v1355, %v1825
        %v1880 = vadd.f32 %v1393, %v1863
        %s1881 = scalar_lea.vmem %s454, 96
        %v1882 = vld [vmem:[%s1881] sm:$0xff]
        %v1883 = vld [vmem:[%s1881 + $0x8] sm:$0xff]
        %v1884 = vld [vmem:[%s1881 + $0x10] sm:$0xff]
        %v1885 = vld [vmem:[%s1881 + $0x18] sm:$0xff]
        %s1886 = scalar_lea.vmem [#allocation2], 1152
        %v1887 = vld [vmem:[%s1886] sm:$0xff]
        %v1888 = vld [vmem:[%s1886 + $0x8] sm:$0xff]
        %v1889 = vld [vmem:[%s1886 + $0x10] sm:$0xff]
        %v1890 = vld [vmem:[%s1886 + $0x18] sm:$0xff]
        %v1891 = vld [vmem:[%s1886 + $0x20] sm:$0xff]
        %v1892 = vld [vmem:[%s1886 + $0x28] sm:$0xff]
        %v1893 = vld [vmem:[%s1886 + $0x30] sm:$0xff]
        %v1894 = vld [vmem:[%s1886 + $0x38] sm:$0xff]
        %v1895 = vld [vmem:[%s1886 + $0x40] sm:$0xff]
        %v1896 = vld [vmem:[%s1886 + $0x48] sm:$0xff]
        %v1897 = vld [vmem:[%s1886 + $0x50] sm:$0xff]
        %v1898 = vld [vmem:[%s1886 + $0x58] sm:$0xff]
        %v1899 = vld [vmem:[%s1886 + $0x60] sm:$0xff]
        %v1900 = vld [vmem:[%s1886 + $0x68] sm:$0xff]
        %v1901 = vld [vmem:[%s1886 + $0x70] sm:$0xff]
        %v1902 = vld [vmem:[%s1886 + $0x78] sm:$0xff]
        %v1903 = vld [vmem:[%s1886 + $0x80] sm:$0xff]
        %v1904 = vld [vmem:[%s1886 + $0x88] sm:$0xff]
        %v1905 = vld [vmem:[%s1886 + $0x90] sm:$0xff]
        %v1906 = vld [vmem:[%s1886 + $0x98] sm:$0xff]
        %v1907 = vld [vmem:[%s1886 + $0xa0] sm:$0xff]
        %v1908 = vld [vmem:[%s1886 + $0xa8] sm:$0xff]
        %v1909 = vld [vmem:[%s1886 + $0xb0] sm:$0xff]
        %v1910 = vld [vmem:[%s1886 + $0xb8] sm:$0xff]
        %v1911 = vld [vmem:[%s1886 + $0xc0] sm:$0xff]
        %v1912 = vld [vmem:[%s1886 + $0xc8] sm:$0xff]
        %v1913 = vld [vmem:[%s1886 + $0xd0] sm:$0xff]
        %v1914 = vld [vmem:[%s1886 + $0xd8] sm:$0xff]
        %v1915 = vld [vmem:[%s1886 + $0xe0] sm:$0xff]
        %v1916 = vld [vmem:[%s1886 + $0xe8] sm:$0xff]
        %v1917 = vld [vmem:[%s1886 + $0xf0] sm:$0xff]
        %v1918 = vld [vmem:[%s1886 + $0xf8] sm:$0xff]
        %v1919 = vld [vmem:[%s1886 + $0x100] sm:$0xff]
        %v1920 = vld [vmem:[%s1886 + $0x108] sm:$0xff]
        %v1921 = vld [vmem:[%s1886 + $0x110] sm:$0xff]
        %v1922 = vld [vmem:[%s1886 + $0x118] sm:$0xff]
        %v1923 = vld [vmem:[%s1886 + $0x120] sm:$0xff]
        %v1924 = vld [vmem:[%s1886 + $0x128] sm:$0xff]
        %v1925 = vld [vmem:[%s1886 + $0x130] sm:$0xff]
        %v1926 = vld [vmem:[%s1886 + $0x138] sm:$0xff]
        %v1927 = vld [vmem:[%s1886 + $0x140] sm:$0xff]
        %v1928 = vld [vmem:[%s1886 + $0x148] sm:$0xff]
        %v1929 = vld [vmem:[%s1886 + $0x150] sm:$0xff]
        %v1930 = vld [vmem:[%s1886 + $0x158] sm:$0xff]
        %v1931 = vld [vmem:[%s1886 + $0x160] sm:$0xff]
        %v1932 = vld [vmem:[%s1886 + $0x168] sm:$0xff]
        %v1933 = vld [vmem:[%s1886 + $0x170] sm:$0xff]
        %v1934 = vld [vmem:[%s1886 + $0x178] sm:$0xff]
        %v1939 = vunpack.c.l.b16 %v1882
        %v1940 = vunpack.c.h.b16 %v1882
        %v1941 = vunpack.c.l.b16 %v1883
        %v1942 = vunpack.c.h.b16 %v1883
        %v1943 = vunpack.c.l.b16 %v1884
        %v1944 = vunpack.c.h.b16 %v1884
        %v1945 = vunpack.c.l.b16 %v1885
        %v1946 = vunpack.c.h.b16 %v1885
        %v1947 = vpack.c.b16 %v1941, %v1939
        %v1948 = vpack.c.b16 %v1942, %v1940
        %v1949 = vpack.c.b16 %v1945, %v1943
        %v1950 = vpack.c.b16 %v1946, %v1944
        %v2001 = vunpack.c.l.b16 %v1887
        %v2002 = vunpack.c.h.b16 %v1887
        %v2003 = vunpack.c.l.b16 %v1888
        %v2004 = vunpack.c.h.b16 %v1888
        %v2005 = vunpack.c.l.b16 %v1889
        %v2006 = vunpack.c.h.b16 %v1889
        %v2007 = vunpack.c.l.b16 %v1890
        %v2008 = vunpack.c.h.b16 %v1890
        %v2009 = vunpack.c.l.b16 %v1891
        %v2010 = vunpack.c.h.b16 %v1891
        %v2011 = vunpack.c.l.b16 %v1892
        %v2012 = vunpack.c.h.b16 %v1892
        %v2013 = vunpack.c.l.b16 %v1893
        %v2014 = vunpack.c.h.b16 %v1893
        %v2015 = vunpack.c.l.b16 %v1894
        %v2016 = vunpack.c.h.b16 %v1894
        %v2017 = vunpack.c.l.b16 %v1895
        %v2018 = vunpack.c.h.b16 %v1895
        %v2019 = vunpack.c.l.b16 %v1896
        %v2020 = vunpack.c.h.b16 %v1896
        %v2021 = vunpack.c.l.b16 %v1897
        %v2022 = vunpack.c.h.b16 %v1897
        %v2023 = vunpack.c.l.b16 %v1898
        %v2024 = vunpack.c.h.b16 %v1898
        %v2025 = vunpack.c.l.b16 %v1899
        %v2026 = vunpack.c.h.b16 %v1899
        %v2027 = vunpack.c.l.b16 %v1900
        %v2028 = vunpack.c.h.b16 %v1900
        %v2029 = vunpack.c.l.b16 %v1901
        %v2030 = vunpack.c.h.b16 %v1901
        %v2031 = vunpack.c.l.b16 %v1902
        %v2032 = vunpack.c.h.b16 %v1902
        %v2033 = vunpack.c.l.b16 %v1903
        %v2034 = vunpack.c.h.b16 %v1903
        %v2035 = vunpack.c.l.b16 %v1904
        %v2036 = vunpack.c.h.b16 %v1904
        %v2037 = vunpack.c.l.b16 %v1905
        %v2038 = vunpack.c.h.b16 %v1905
        %v2039 = vunpack.c.l.b16 %v1906
        %v2040 = vunpack.c.h.b16 %v1906
        %v2041 = vunpack.c.l.b16 %v1907
        %v2042 = vunpack.c.h.b16 %v1907
        %v2043 = vunpack.c.l.b16 %v1908
        %v2044 = vunpack.c.h.b16 %v1908
        %v2045 = vunpack.c.l.b16 %v1909
        %v2046 = vunpack.c.h.b16 %v1909
        %v2047 = vunpack.c.l.b16 %v1910
        %v2048 = vunpack.c.h.b16 %v1910
        %v2049 = vunpack.c.l.b16 %v1911
        %v2050 = vunpack.c.h.b16 %v1911
        %v2051 = vunpack.c.l.b16 %v1912
        %v2052 = vunpack.c.h.b16 %v1912
        %v2053 = vunpack.c.l.b16 %v1913
        %v2054 = vunpack.c.h.b16 %v1913
        %v2055 = vunpack.c.l.b16 %v1914
        %v2056 = vunpack.c.h.b16 %v1914
        %v2057 = vunpack.c.l.b16 %v1915
        %v2058 = vunpack.c.h.b16 %v1915
        %v2059 = vunpack.c.l.b16 %v1916
        %v2060 = vunpack.c.h.b16 %v1916
        %v2061 = vunpack.c.l.b16 %v1917
        %v2062 = vunpack.c.h.b16 %v1917
        %v2063 = vunpack.c.l.b16 %v1918
        %v2064 = vunpack.c.h.b16 %v1918
        %v2065 = vunpack.c.l.b16 %v1919
        %v2066 = vunpack.c.h.b16 %v1919
        %v2067 = vunpack.c.l.b16 %v1920
        %v2068 = vunpack.c.h.b16 %v1920
        %v2069 = vunpack.c.l.b16 %v1921
        %v2070 = vunpack.c.h.b16 %v1921
        %v2071 = vunpack.c.l.b16 %v1922
        %v2072 = vunpack.c.h.b16 %v1922
        %v2073 = vunpack.c.l.b16 %v1923
        %v2074 = vunpack.c.h.b16 %v1923
        %v2075 = vunpack.c.l.b16 %v1924
        %v2076 = vunpack.c.h.b16 %v1924
        %v2077 = vunpack.c.l.b16 %v1925
        %v2078 = vunpack.c.h.b16 %v1925
        %v2079 = vunpack.c.l.b16 %v1926
        %v2080 = vunpack.c.h.b16 %v1926
        %v2081 = vunpack.c.l.b16 %v1927
        %v2082 = vunpack.c.h.b16 %v1927
        %v2083 = vunpack.c.l.b16 %v1928
        %v2084 = vunpack.c.h.b16 %v1928
        %v2085 = vunpack.c.l.b16 %v1929
        %v2086 = vunpack.c.h.b16 %v1929
        %v2087 = vunpack.c.l.b16 %v1930
        %v2088 = vunpack.c.h.b16 %v1930
        %v2089 = vunpack.c.l.b16 %v1931
        %v2090 = vunpack.c.h.b16 %v1931
        %v2091 = vunpack.c.l.b16 %v1932
        %v2092 = vunpack.c.h.b16 %v1932
        %v2093 = vunpack.c.l.b16 %v1933
        %v2094 = vunpack.c.h.b16 %v1933
        %v2095 = vunpack.c.l.b16 %v1934
        %v2096 = vunpack.c.h.b16 %v1934
        %v2097 = vpack.c.b16 %v2005, %v2001
        %v2098 = vpack.c.b16 %v2006, %v2002
        %v2099 = vpack.c.b16 %v2007, %v2003
        %v2100 = vpack.c.b16 %v2008, %v2004
        %v2101 = vpack.c.b16 %v2013, %v2009
        %v2102 = vpack.c.b16 %v2014, %v2010
        %v2103 = vpack.c.b16 %v2015, %v2011
        %v2104 = vpack.c.b16 %v2016, %v2012
        %v2105 = vpack.c.b16 %v2021, %v2017
        %v2106 = vpack.c.b16 %v2022, %v2018
        %v2107 = vpack.c.b16 %v2023, %v2019
        %v2108 = vpack.c.b16 %v2024, %v2020
        %v2109 = vpack.c.b16 %v2029, %v2025
        %v2110 = vpack.c.b16 %v2030, %v2026
        %v2111 = vpack.c.b16 %v2031, %v2027
        %v2112 = vpack.c.b16 %v2032, %v2028
        %v2113 = vpack.c.b16 %v2037, %v2033
        %v2114 = vpack.c.b16 %v2038, %v2034
        %v2115 = vpack.c.b16 %v2039, %v2035
        %v2116 = vpack.c.b16 %v2040, %v2036
        %v2117 = vpack.c.b16 %v2045, %v2041
        %v2118 = vpack.c.b16 %v2046, %v2042
        %v2119 = vpack.c.b16 %v2047, %v2043
        %v2120 = vpack.c.b16 %v2048, %v2044
        %v2121 = vpack.c.b16 %v2053, %v2049
        %v2122 = vpack.c.b16 %v2054, %v2050
        %v2123 = vpack.c.b16 %v2055, %v2051
        %v2124 = vpack.c.b16 %v2056, %v2052
        %v2125 = vpack.c.b16 %v2061, %v2057
        %v2126 = vpack.c.b16 %v2062, %v2058
        %v2127 = vpack.c.b16 %v2063, %v2059
        %v2128 = vpack.c.b16 %v2064, %v2060
        %v2129 = vpack.c.b16 %v2069, %v2065
        %v2130 = vpack.c.b16 %v2070, %v2066
        %v2131 = vpack.c.b16 %v2071, %v2067
        %v2132 = vpack.c.b16 %v2072, %v2068
        %v2133 = vpack.c.b16 %v2077, %v2073
        %v2134 = vpack.c.b16 %v2078, %v2074
        %v2135 = vpack.c.b16 %v2079, %v2075
        %v2136 = vpack.c.b16 %v2080, %v2076
        %v2137 = vpack.c.b16 %v2085, %v2081
        %v2138 = vpack.c.b16 %v2086, %v2082
        %v2139 = vpack.c.b16 %v2087, %v2083
        %v2140 = vpack.c.b16 %v2088, %v2084
        %v2141 = vpack.c.b16 %v2093, %v2089
        %v2142 = vpack.c.b16 %v2094, %v2090
        %v2143 = vpack.c.b16 %v2095, %v2091
        %v2144 = vpack.c.b16 %v2096, %v2092
        %v2194 = vsel %vm820, %v1948, 0
        %v2197 = vsel %vm820, %v1950, 0
        %2199 = vmatpush.bf16.msra.mxu0 %v2125
        %2200 = vmatpush.bf16.msra.mxu0 %v2121
        %2201 = vmatpush.bf16.msra.mxu0 %v2117
        %2202 = vmatpush.bf16.msra.mxu0 %v2113
        %2203 = vmatpush.bf16.msra.mxu0 %v2109
        %2204 = vmatpush.bf16.msra.mxu0 %v2105
        %2205 = vmatpush.bf16.msra.mxu0 %v2101
        %2206 = vmatpush.bf16.msra.mxu0 %v2097
        %2207 = vmatmul.bf16.gmra.mxu0 %v1947
        %v2208 = vpop.f32.mrf.mxu0
        %v2209 = vadd.f32 0.0, %v2208
        %v2210 = vpop.f32.mrf.mxu0
        %v2211 = vadd.f32 0.0, %v2210
        %2212 = vmatmul.bf16.gmra.mxu0 %v1949
        %v2213 = vpop.f32.mrf.mxu0
        %v2214 = vadd.f32 0.0, %v2213
        %v2215 = vpop.f32.mrf.mxu0
        %v2216 = vadd.f32 0.0, %v2215
        %2217 = vdwg.mxu0
        %2218 = vmatpush.bf16.msra.mxu0 0
        %2219 = vmatpush.bf16.msra.mxu0 0
        %2220 = vmatpush.bf16.msra.mxu0 0
        %2221 = vmatpush.bf16.msra.mxu0 0
        %2222 = vmatpush.bf16.msra.mxu0 %v2141
        %2223 = vmatpush.bf16.msra.mxu0 %v2137
        %2224 = vmatpush.bf16.msra.mxu0 %v2133
        %2225 = vmatpush.bf16.msra.mxu0 %v2129
        %2226 = vmatmul.bf16.gmra.mxu0 %v2194
        %v2227 = vpop.f32.mrf.mxu0
        %v2228 = vadd.f32 %v2209, %v2227
        %v2229 = vpop.f32.mrf.mxu0
        %v2230 = vadd.f32 %v2211, %v2229
        %2231 = vmatmul.bf16.gmra.mxu0 %v2197
        %v2232 = vpop.f32.mrf.mxu0
        %v2233 = vadd.f32 %v2214, %v2232
        %v2234 = vpop.f32.mrf.mxu0
        %v2235 = vadd.f32 %v2216, %v2234
        %2236 = vdwg.mxu0
        %2237 = vmatpush.bf16.msra.mxu0 %v2126
        %2238 = vmatpush.bf16.msra.mxu0 %v2122
        %2239 = vmatpush.bf16.msra.mxu0 %v2118
        %2240 = vmatpush.bf16.msra.mxu0 %v2114
        %2241 = vmatpush.bf16.msra.mxu0 %v2110
        %2242 = vmatpush.bf16.msra.mxu0 %v2106
        %2243 = vmatpush.bf16.msra.mxu0 %v2102
        %2244 = vmatpush.bf16.msra.mxu0 %v2098
        %2245 = vmatmul.bf16.gmra.mxu0 %v1947
        %v2246 = vpop.f32.mrf.mxu0
        %v2247 = vadd.f32 0.0, %v2246
        %v2248 = vpop.f32.mrf.mxu0
        %v2249 = vadd.f32 0.0, %v2248
        %2250 = vmatmul.bf16.gmra.mxu0 %v1949
        %v2251 = vpop.f32.mrf.mxu0
        %v2252 = vadd.f32 0.0, %v2251
        %v2253 = vpop.f32.mrf.mxu0
        %v2254 = vadd.f32 0.0, %v2253
        %2255 = vdwg.mxu0
        %2256 = vmatpush.bf16.msra.mxu0 0
        %2257 = vmatpush.bf16.msra.mxu0 0
        %2258 = vmatpush.bf16.msra.mxu0 0
        %2259 = vmatpush.bf16.msra.mxu0 0
        %2260 = vmatpush.bf16.msra.mxu0 %v2142
        %2261 = vmatpush.bf16.msra.mxu0 %v2138
        %2262 = vmatpush.bf16.msra.mxu0 %v2134
        %2263 = vmatpush.bf16.msra.mxu0 %v2130
        %2264 = vmatmul.bf16.gmra.mxu0 %v2194
        %v2265 = vpop.f32.mrf.mxu0
        %v2266 = vadd.f32 %v2247, %v2265
        %v2267 = vpop.f32.mrf.mxu0
        %v2268 = vadd.f32 %v2249, %v2267
        %2269 = vmatmul.bf16.gmra.mxu0 %v2197
        %v2270 = vpop.f32.mrf.mxu0
        %v2271 = vadd.f32 %v2252, %v2270
        %v2272 = vpop.f32.mrf.mxu0
        %v2273 = vadd.f32 %v2254, %v2272
        %2274 = vdwg.mxu0
        %2275 = vmatpush.bf16.msra.mxu0 %v2127
        %2276 = vmatpush.bf16.msra.mxu0 %v2123
        %2277 = vmatpush.bf16.msra.mxu0 %v2119
        %2278 = vmatpush.bf16.msra.mxu0 %v2115
        %2279 = vmatpush.bf16.msra.mxu0 %v2111
        %2280 = vmatpush.bf16.msra.mxu0 %v2107
        %2281 = vmatpush.bf16.msra.mxu0 %v2103
        %2282 = vmatpush.bf16.msra.mxu0 %v2099
        %2283 = vmatmul.bf16.gmra.mxu0 %v1947
        %v2284 = vpop.f32.mrf.mxu0
        %v2285 = vadd.f32 0.0, %v2284
        %v2286 = vpop.f32.mrf.mxu0
        %v2287 = vadd.f32 0.0, %v2286
        %2288 = vmatmul.bf16.gmra.mxu0 %v1949
        %v2289 = vpop.f32.mrf.mxu0
        %v2290 = vadd.f32 0.0, %v2289
        %v2291 = vpop.f32.mrf.mxu0
        %v2292 = vadd.f32 0.0, %v2291
        %2293 = vdwg.mxu0
        %2294 = vmatpush.bf16.msra.mxu0 0
        %2295 = vmatpush.bf16.msra.mxu0 0
        %2296 = vmatpush.bf16.msra.mxu0 0
        %2297 = vmatpush.bf16.msra.mxu0 0
        %2298 = vmatpush.bf16.msra.mxu0 %v2143
        %2299 = vmatpush.bf16.msra.mxu0 %v2139
        %2300 = vmatpush.bf16.msra.mxu0 %v2135
        %2301 = vmatpush.bf16.msra.mxu0 %v2131
        %2302 = vmatmul.bf16.gmra.mxu0 %v2194
        %v2303 = vpop.f32.mrf.mxu0
        %v2304 = vadd.f32 %v2285, %v2303
        %v2305 = vpop.f32.mrf.mxu0
        %v2306 = vadd.f32 %v2287, %v2305
        %2307 = vmatmul.bf16.gmra.mxu0 %v2197
        %v2308 = vpop.f32.mrf.mxu0
        %v2309 = vadd.f32 %v2290, %v2308
        %v2310 = vpop.f32.mrf.mxu0
        %v2311 = vadd.f32 %v2292, %v2310
        %2312 = vdwg.mxu0
        %2313 = vmatpush.bf16.msra.mxu0 %v2128
        %2314 = vmatpush.bf16.msra.mxu0 %v2124
        %2315 = vmatpush.bf16.msra.mxu0 %v2120
        %2316 = vmatpush.bf16.msra.mxu0 %v2116
        %2317 = vmatpush.bf16.msra.mxu0 %v2112
        %2318 = vmatpush.bf16.msra.mxu0 %v2108
        %2319 = vmatpush.bf16.msra.mxu0 %v2104
        %2320 = vmatpush.bf16.msra.mxu0 %v2100
        %2321 = vmatmul.bf16.gmra.mxu0 %v1947
        %v2322 = vpop.f32.mrf.mxu0
        %v2323 = vadd.f32 0.0, %v2322
        %v2324 = vpop.f32.mrf.mxu0
        %v2325 = vadd.f32 0.0, %v2324
        %2326 = vmatmul.bf16.gmra.mxu0 %v1949
        %v2327 = vpop.f32.mrf.mxu0
        %v2328 = vadd.f32 0.0, %v2327
        %v2329 = vpop.f32.mrf.mxu0
        %v2330 = vadd.f32 0.0, %v2329
        %2331 = vdwg.mxu0
        %2332 = vmatpush.bf16.msra.mxu0 0
        %2333 = vmatpush.bf16.msra.mxu0 0
        %2334 = vmatpush.bf16.msra.mxu0 0
        %2335 = vmatpush.bf16.msra.mxu0 0
        %2336 = vmatpush.bf16.msra.mxu0 %v2144
        %2337 = vmatpush.bf16.msra.mxu0 %v2140
        %2338 = vmatpush.bf16.msra.mxu0 %v2136
        %2339 = vmatpush.bf16.msra.mxu0 %v2132
        %2340 = vmatmul.bf16.gmra.mxu0 %v2194
        %v2341 = vpop.f32.mrf.mxu0
        %v2342 = vadd.f32 %v2323, %v2341
        %v2343 = vpop.f32.mrf.mxu0
        %v2344 = vadd.f32 %v2325, %v2343
        %2345 = vmatmul.bf16.gmra.mxu0 %v2197
        %v2346 = vpop.f32.mrf.mxu0
        %v2347 = vadd.f32 %v2328, %v2346
        %v2348 = vpop.f32.mrf.mxu0
        %v2349 = vadd.f32 %v2330, %v2348
        %2350 = vdwg.mxu0
        %v2351 = vadd.f32 %v1865, %v2228
        %v2352 = vadd.f32 %v1866, %v2266
        %v2353 = vadd.f32 %v1867, %v2304
        %v2354 = vadd.f32 %v1868, %v2342
        %v2355 = vadd.f32 %v1869, %v2230
        %v2356 = vadd.f32 %v1870, %v2268
        %v2357 = vadd.f32 %v1871, %v2306
        %v2358 = vadd.f32 %v1872, %v2344
        %v2359 = vadd.f32 %v1873, %v2233
        %v2360 = vadd.f32 %v1874, %v2271
        %v2361 = vadd.f32 %v1875, %v2309
        %v2362 = vadd.f32 %v1876, %v2347
        %v2363 = vadd.f32 %v1877, %v2235
        %v2364 = vadd.f32 %v1878, %v2273
        %v2365 = vadd.f32 %v1879, %v2311
        %v2366 = vadd.f32 %v1880, %v2349
        %s2367 = scalar_lea.vmem %s454, 128
        %v2368 = vld [vmem:[%s2367] sm:$0xff]
        %v2369 = vld [vmem:[%s2367 + $0x8] sm:$0xff]
        %v2370 = vld [vmem:[%s2367 + $0x10] sm:$0xff]
        %v2371 = vld [vmem:[%s2367 + $0x18] sm:$0xff]
        %s2372 = scalar_lea.vmem [#allocation2], 1536
        %v2373 = vld [vmem:[%s2372] sm:$0xff]
        %v2374 = vld [vmem:[%s2372 + $0x8] sm:$0xff]
        %v2375 = vld [vmem:[%s2372 + $0x10] sm:$0xff]
        %v2376 = vld [vmem:[%s2372 + $0x18] sm:$0xff]
        %v2377 = vld [vmem:[%s2372 + $0x20] sm:$0xff]
        %v2378 = vld [vmem:[%s2372 + $0x28] sm:$0xff]
        %v2379 = vld [vmem:[%s2372 + $0x30] sm:$0xff]
        %v2380 = vld [vmem:[%s2372 + $0x38] sm:$0xff]
        %v2381 = vld [vmem:[%s2372 + $0x40] sm:$0xff]
        %v2382 = vld [vmem:[%s2372 + $0x48] sm:$0xff]
        %v2383 = vld [vmem:[%s2372 + $0x50] sm:$0xff]
        %v2384 = vld [vmem:[%s2372 + $0x58] sm:$0xff]
        %v2385 = vld [vmem:[%s2372 + $0x60] sm:$0xff]
        %v2386 = vld [vmem:[%s2372 + $0x68] sm:$0xff]
        %v2387 = vld [vmem:[%s2372 + $0x70] sm:$0xff]
        %v2388 = vld [vmem:[%s2372 + $0x78] sm:$0xff]
        %v2389 = vld [vmem:[%s2372 + $0x80] sm:$0xff]
        %v2390 = vld [vmem:[%s2372 + $0x88] sm:$0xff]
        %v2391 = vld [vmem:[%s2372 + $0x90] sm:$0xff]
        %v2392 = vld [vmem:[%s2372 + $0x98] sm:$0xff]
        %v2393 = vld [vmem:[%s2372 + $0xa0] sm:$0xff]
        %v2394 = vld [vmem:[%s2372 + $0xa8] sm:$0xff]
        %v2395 = vld [vmem:[%s2372 + $0xb0] sm:$0xff]
        %v2396 = vld [vmem:[%s2372 + $0xb8] sm:$0xff]
        %v2397 = vld [vmem:[%s2372 + $0xc0] sm:$0xff]
        %v2398 = vld [vmem:[%s2372 + $0xc8] sm:$0xff]
        %v2399 = vld [vmem:[%s2372 + $0xd0] sm:$0xff]
        %v2400 = vld [vmem:[%s2372 + $0xd8] sm:$0xff]
        %v2401 = vld [vmem:[%s2372 + $0xe0] sm:$0xff]
        %v2402 = vld [vmem:[%s2372 + $0xe8] sm:$0xff]
        %v2403 = vld [vmem:[%s2372 + $0xf0] sm:$0xff]
        %v2404 = vld [vmem:[%s2372 + $0xf8] sm:$0xff]
        %v2405 = vld [vmem:[%s2372 + $0x100] sm:$0xff]
        %v2406 = vld [vmem:[%s2372 + $0x108] sm:$0xff]
        %v2407 = vld [vmem:[%s2372 + $0x110] sm:$0xff]
        %v2408 = vld [vmem:[%s2372 + $0x118] sm:$0xff]
        %v2409 = vld [vmem:[%s2372 + $0x120] sm:$0xff]
        %v2410 = vld [vmem:[%s2372 + $0x128] sm:$0xff]
        %v2411 = vld [vmem:[%s2372 + $0x130] sm:$0xff]
        %v2412 = vld [vmem:[%s2372 + $0x138] sm:$0xff]
        %v2413 = vld [vmem:[%s2372 + $0x140] sm:$0xff]
        %v2414 = vld [vmem:[%s2372 + $0x148] sm:$0xff]
        %v2415 = vld [vmem:[%s2372 + $0x150] sm:$0xff]
        %v2416 = vld [vmem:[%s2372 + $0x158] sm:$0xff]
        %v2417 = vld [vmem:[%s2372 + $0x160] sm:$0xff]
        %v2418 = vld [vmem:[%s2372 + $0x168] sm:$0xff]
        %v2419 = vld [vmem:[%s2372 + $0x170] sm:$0xff]
        %v2420 = vld [vmem:[%s2372 + $0x178] sm:$0xff]
        %v2425 = vunpack.c.l.b16 %v2368
        %v2426 = vunpack.c.h.b16 %v2368
        %v2427 = vunpack.c.l.b16 %v2369
        %v2428 = vunpack.c.h.b16 %v2369
        %v2429 = vunpack.c.l.b16 %v2370
        %v2430 = vunpack.c.h.b16 %v2370
        %v2431 = vunpack.c.l.b16 %v2371
        %v2432 = vunpack.c.h.b16 %v2371
        %v2433 = vpack.c.b16 %v2427, %v2425
        %v2434 = vpack.c.b16 %v2428, %v2426
        %v2435 = vpack.c.b16 %v2431, %v2429
        %v2436 = vpack.c.b16 %v2432, %v2430
        %v2487 = vunpack.c.l.b16 %v2373
        %v2488 = vunpack.c.h.b16 %v2373
        %v2489 = vunpack.c.l.b16 %v2374
        %v2490 = vunpack.c.h.b16 %v2374
        %v2491 = vunpack.c.l.b16 %v2375
        %v2492 = vunpack.c.h.b16 %v2375
        %v2493 = vunpack.c.l.b16 %v2376
        %v2494 = vunpack.c.h.b16 %v2376
        %v2495 = vunpack.c.l.b16 %v2377
        %v2496 = vunpack.c.h.b16 %v2377
        %v2497 = vunpack.c.l.b16 %v2378
        %v2498 = vunpack.c.h.b16 %v2378
        %v2499 = vunpack.c.l.b16 %v2379
        %v2500 = vunpack.c.h.b16 %v2379
        %v2501 = vunpack.c.l.b16 %v2380
        %v2502 = vunpack.c.h.b16 %v2380
        %v2503 = vunpack.c.l.b16 %v2381
        %v2504 = vunpack.c.h.b16 %v2381
        %v2505 = vunpack.c.l.b16 %v2382
        %v2506 = vunpack.c.h.b16 %v2382
        %v2507 = vunpack.c.l.b16 %v2383
        %v2508 = vunpack.c.h.b16 %v2383
        %v2509 = vunpack.c.l.b16 %v2384
        %v2510 = vunpack.c.h.b16 %v2384
        %v2511 = vunpack.c.l.b16 %v2385
        %v2512 = vunpack.c.h.b16 %v2385
        %v2513 = vunpack.c.l.b16 %v2386
        %v2514 = vunpack.c.h.b16 %v2386
        %v2515 = vunpack.c.l.b16 %v2387
        %v2516 = vunpack.c.h.b16 %v2387
        %v2517 = vunpack.c.l.b16 %v2388
        %v2518 = vunpack.c.h.b16 %v2388
        %v2519 = vunpack.c.l.b16 %v2389
        %v2520 = vunpack.c.h.b16 %v2389
        %v2521 = vunpack.c.l.b16 %v2390
        %v2522 = vunpack.c.h.b16 %v2390
        %v2523 = vunpack.c.l.b16 %v2391
        %v2524 = vunpack.c.h.b16 %v2391
        %v2525 = vunpack.c.l.b16 %v2392
        %v2526 = vunpack.c.h.b16 %v2392
        %v2527 = vunpack.c.l.b16 %v2393
        %v2528 = vunpack.c.h.b16 %v2393
        %v2529 = vunpack.c.l.b16 %v2394
        %v2530 = vunpack.c.h.b16 %v2394
        %v2531 = vunpack.c.l.b16 %v2395
        %v2532 = vunpack.c.h.b16 %v2395
        %v2533 = vunpack.c.l.b16 %v2396
        %v2534 = vunpack.c.h.b16 %v2396
        %v2535 = vunpack.c.l.b16 %v2397
        %v2536 = vunpack.c.h.b16 %v2397
        %v2537 = vunpack.c.l.b16 %v2398
        %v2538 = vunpack.c.h.b16 %v2398
        %v2539 = vunpack.c.l.b16 %v2399
        %v2540 = vunpack.c.h.b16 %v2399
        %v2541 = vunpack.c.l.b16 %v2400
        %v2542 = vunpack.c.h.b16 %v2400
        %v2543 = vunpack.c.l.b16 %v2401
        %v2544 = vunpack.c.h.b16 %v2401
        %v2545 = vunpack.c.l.b16 %v2402
        %v2546 = vunpack.c.h.b16 %v2402
        %v2547 = vunpack.c.l.b16 %v2403
        %v2548 = vunpack.c.h.b16 %v2403
        %v2549 = vunpack.c.l.b16 %v2404
        %v2550 = vunpack.c.h.b16 %v2404
        %v2551 = vunpack.c.l.b16 %v2405
        %v2552 = vunpack.c.h.b16 %v2405
        %v2553 = vunpack.c.l.b16 %v2406
        %v2554 = vunpack.c.h.b16 %v2406
        %v2555 = vunpack.c.l.b16 %v2407
        %v2556 = vunpack.c.h.b16 %v2407
        %v2557 = vunpack.c.l.b16 %v2408
        %v2558 = vunpack.c.h.b16 %v2408
        %v2559 = vunpack.c.l.b16 %v2409
        %v2560 = vunpack.c.h.b16 %v2409
        %v2561 = vunpack.c.l.b16 %v2410
        %v2562 = vunpack.c.h.b16 %v2410
        %v2563 = vunpack.c.l.b16 %v2411
        %v2564 = vunpack.c.h.b16 %v2411
        %v2565 = vunpack.c.l.b16 %v2412
        %v2566 = vunpack.c.h.b16 %v2412
        %v2567 = vunpack.c.l.b16 %v2413
        %v2568 = vunpack.c.h.b16 %v2413
        %v2569 = vunpack.c.l.b16 %v2414
        %v2570 = vunpack.c.h.b16 %v2414
        %v2571 = vunpack.c.l.b16 %v2415
        %v2572 = vunpack.c.h.b16 %v2415
        %v2573 = vunpack.c.l.b16 %v2416
        %v2574 = vunpack.c.h.b16 %v2416
        %v2575 = vunpack.c.l.b16 %v2417
        %v2576 = vunpack.c.h.b16 %v2417
        %v2577 = vunpack.c.l.b16 %v2418
        %v2578 = vunpack.c.h.b16 %v2418
        %v2579 = vunpack.c.l.b16 %v2419
        %v2580 = vunpack.c.h.b16 %v2419
        %v2581 = vunpack.c.l.b16 %v2420
        %v2582 = vunpack.c.h.b16 %v2420
        %v2583 = vpack.c.b16 %v2491, %v2487
        %v2584 = vpack.c.b16 %v2492, %v2488
        %v2585 = vpack.c.b16 %v2493, %v2489
        %v2586 = vpack.c.b16 %v2494, %v2490
        %v2587 = vpack.c.b16 %v2499, %v2495
        %v2588 = vpack.c.b16 %v2500, %v2496
        %v2589 = vpack.c.b16 %v2501, %v2497
        %v2590 = vpack.c.b16 %v2502, %v2498
        %v2591 = vpack.c.b16 %v2507, %v2503
        %v2592 = vpack.c.b16 %v2508, %v2504
        %v2593 = vpack.c.b16 %v2509, %v2505
        %v2594 = vpack.c.b16 %v2510, %v2506
        %v2595 = vpack.c.b16 %v2515, %v2511
        %v2596 = vpack.c.b16 %v2516, %v2512
        %v2597 = vpack.c.b16 %v2517, %v2513
        %v2598 = vpack.c.b16 %v2518, %v2514
        %v2599 = vpack.c.b16 %v2523, %v2519
        %v2600 = vpack.c.b16 %v2524, %v2520
        %v2601 = vpack.c.b16 %v2525, %v2521
        %v2602 = vpack.c.b16 %v2526, %v2522
        %v2603 = vpack.c.b16 %v2531, %v2527
        %v2604 = vpack.c.b16 %v2532, %v2528
        %v2605 = vpack.c.b16 %v2533, %v2529
        %v2606 = vpack.c.b16 %v2534, %v2530
        %v2607 = vpack.c.b16 %v2539, %v2535
        %v2608 = vpack.c.b16 %v2540, %v2536
        %v2609 = vpack.c.b16 %v2541, %v2537
        %v2610 = vpack.c.b16 %v2542, %v2538
        %v2611 = vpack.c.b16 %v2547, %v2543
        %v2612 = vpack.c.b16 %v2548, %v2544
        %v2613 = vpack.c.b16 %v2549, %v2545
        %v2614 = vpack.c.b16 %v2550, %v2546
        %v2615 = vpack.c.b16 %v2555, %v2551
        %v2616 = vpack.c.b16 %v2556, %v2552
        %v2617 = vpack.c.b16 %v2557, %v2553
        %v2618 = vpack.c.b16 %v2558, %v2554
        %v2619 = vpack.c.b16 %v2563, %v2559
        %v2620 = vpack.c.b16 %v2564, %v2560
        %v2621 = vpack.c.b16 %v2565, %v2561
        %v2622 = vpack.c.b16 %v2566, %v2562
        %v2623 = vpack.c.b16 %v2571, %v2567
        %v2624 = vpack.c.b16 %v2572, %v2568
        %v2625 = vpack.c.b16 %v2573, %v2569
        %v2626 = vpack.c.b16 %v2574, %v2570
        %v2627 = vpack.c.b16 %v2579, %v2575
        %v2628 = vpack.c.b16 %v2580, %v2576
        %v2629 = vpack.c.b16 %v2581, %v2577
        %v2630 = vpack.c.b16 %v2582, %v2578
        %v2680 = vsel %vm820, %v2434, 0
        %v2683 = vsel %vm820, %v2436, 0
        %2685 = vmatpush.bf16.msra.mxu0 %v2611
        %2686 = vmatpush.bf16.msra.mxu0 %v2607
        %2687 = vmatpush.bf16.msra.mxu0 %v2603
        %2688 = vmatpush.bf16.msra.mxu0 %v2599
        %2689 = vmatpush.bf16.msra.mxu0 %v2595
        %2690 = vmatpush.bf16.msra.mxu0 %v2591
        %2691 = vmatpush.bf16.msra.mxu0 %v2587
        %2692 = vmatpush.bf16.msra.mxu0 %v2583
        %2693 = vmatmul.bf16.gmra.mxu0 %v2433
        %v2694 = vpop.f32.mrf.mxu0
        %v2695 = vadd.f32 0.0, %v2694
        %v2696 = vpop.f32.mrf.mxu0
        %v2697 = vadd.f32 0.0, %v2696
        %2698 = vmatmul.bf16.gmra.mxu0 %v2435
        %v2699 = vpop.f32.mrf.mxu0
        %v2700 = vadd.f32 0.0, %v2699
        %v2701 = vpop.f32.mrf.mxu0
        %v2702 = vadd.f32 0.0, %v2701
        %2703 = vdwg.mxu0
        %2704 = vmatpush.bf16.msra.mxu0 0
        %2705 = vmatpush.bf16.msra.mxu0 0
        %2706 = vmatpush.bf16.msra.mxu0 0
        %2707 = vmatpush.bf16.msra.mxu0 0
        %2708 = vmatpush.bf16.msra.mxu0 %v2627
        %2709 = vmatpush.bf16.msra.mxu0 %v2623
        %2710 = vmatpush.bf16.msra.mxu0 %v2619
        %2711 = vmatpush.bf16.msra.mxu0 %v2615
        %2712 = vmatmul.bf16.gmra.mxu0 %v2680
        %v2713 = vpop.f32.mrf.mxu0
        %v2714 = vadd.f32 %v2695, %v2713
        %v2715 = vpop.f32.mrf.mxu0
        %v2716 = vadd.f32 %v2697, %v2715
        %2717 = vmatmul.bf16.gmra.mxu0 %v2683
        %v2718 = vpop.f32.mrf.mxu0
        %v2719 = vadd.f32 %v2700, %v2718
        %v2720 = vpop.f32.mrf.mxu0
        %v2721 = vadd.f32 %v2702, %v2720
        %2722 = vdwg.mxu0
        %2723 = vmatpush.bf16.msra.mxu0 %v2612
        %2724 = vmatpush.bf16.msra.mxu0 %v2608
        %2725 = vmatpush.bf16.msra.mxu0 %v2604
        %2726 = vmatpush.bf16.msra.mxu0 %v2600
        %2727 = vmatpush.bf16.msra.mxu0 %v2596
        %2728 = vmatpush.bf16.msra.mxu0 %v2592
        %2729 = vmatpush.bf16.msra.mxu0 %v2588
        %2730 = vmatpush.bf16.msra.mxu0 %v2584
        %2731 = vmatmul.bf16.gmra.mxu0 %v2433
        %v2732 = vpop.f32.mrf.mxu0
        %v2733 = vadd.f32 0.0, %v2732
        %v2734 = vpop.f32.mrf.mxu0
        %v2735 = vadd.f32 0.0, %v2734
        %2736 = vmatmul.bf16.gmra.mxu0 %v2435
        %v2737 = vpop.f32.mrf.mxu0
        %v2738 = vadd.f32 0.0, %v2737
        %v2739 = vpop.f32.mrf.mxu0
        %v2740 = vadd.f32 0.0, %v2739
        %2741 = vdwg.mxu0
        %2742 = vmatpush.bf16.msra.mxu0 0
        %2743 = vmatpush.bf16.msra.mxu0 0
        %2744 = vmatpush.bf16.msra.mxu0 0
        %2745 = vmatpush.bf16.msra.mxu0 0
        %2746 = vmatpush.bf16.msra.mxu0 %v2628
        %2747 = vmatpush.bf16.msra.mxu0 %v2624
        %2748 = vmatpush.bf16.msra.mxu0 %v2620
        %2749 = vmatpush.bf16.msra.mxu0 %v2616
        %2750 = vmatmul.bf16.gmra.mxu0 %v2680
        %v2751 = vpop.f32.mrf.mxu0
        %v2752 = vadd.f32 %v2733, %v2751
        %v2753 = vpop.f32.mrf.mxu0
        %v2754 = vadd.f32 %v2735, %v2753
        %2755 = vmatmul.bf16.gmra.mxu0 %v2683
        %v2756 = vpop.f32.mrf.mxu0
        %v2757 = vadd.f32 %v2738, %v2756
        %v2758 = vpop.f32.mrf.mxu0
        %v2759 = vadd.f32 %v2740, %v2758
        %2760 = vdwg.mxu0
        %2761 = vmatpush.bf16.msra.mxu0 %v2613
        %2762 = vmatpush.bf16.msra.mxu0 %v2609
        %2763 = vmatpush.bf16.msra.mxu0 %v2605
        %2764 = vmatpush.bf16.msra.mxu0 %v2601
        %2765 = vmatpush.bf16.msra.mxu0 %v2597
        %2766 = vmatpush.bf16.msra.mxu0 %v2593
        %2767 = vmatpush.bf16.msra.mxu0 %v2589
        %2768 = vmatpush.bf16.msra.mxu0 %v2585
        %2769 = vmatmul.bf16.gmra.mxu0 %v2433
        %v2770 = vpop.f32.mrf.mxu0
        %v2771 = vadd.f32 0.0, %v2770
        %v2772 = vpop.f32.mrf.mxu0
        %v2773 = vadd.f32 0.0, %v2772
        %2774 = vmatmul.bf16.gmra.mxu0 %v2435
        %v2775 = vpop.f32.mrf.mxu0
        %v2776 = vadd.f32 0.0, %v2775
        %v2777 = vpop.f32.mrf.mxu0
        %v2778 = vadd.f32 0.0, %v2777
        %2779 = vdwg.mxu0
        %2780 = vmatpush.bf16.msra.mxu0 0
        %2781 = vmatpush.bf16.msra.mxu0 0
        %2782 = vmatpush.bf16.msra.mxu0 0
        %2783 = vmatpush.bf16.msra.mxu0 0
        %2784 = vmatpush.bf16.msra.mxu0 %v2629
        %2785 = vmatpush.bf16.msra.mxu0 %v2625
        %2786 = vmatpush.bf16.msra.mxu0 %v2621
        %2787 = vmatpush.bf16.msra.mxu0 %v2617
        %2788 = vmatmul.bf16.gmra.mxu0 %v2680
        %v2789 = vpop.f32.mrf.mxu0
        %v2790 = vadd.f32 %v2771, %v2789
        %v2791 = vpop.f32.mrf.mxu0
        %v2792 = vadd.f32 %v2773, %v2791
        %2793 = vmatmul.bf16.gmra.mxu0 %v2683
        %v2794 = vpop.f32.mrf.mxu0
        %v2795 = vadd.f32 %v2776, %v2794
        %v2796 = vpop.f32.mrf.mxu0
        %v2797 = vadd.f32 %v2778, %v2796
        %2798 = vdwg.mxu0
        %2799 = vmatpush.bf16.msra.mxu0 %v2614
        %2800 = vmatpush.bf16.msra.mxu0 %v2610
        %2801 = vmatpush.bf16.msra.mxu0 %v2606
        %2802 = vmatpush.bf16.msra.mxu0 %v2602
        %2803 = vmatpush.bf16.msra.mxu0 %v2598
        %2804 = vmatpush.bf16.msra.mxu0 %v2594
        %2805 = vmatpush.bf16.msra.mxu0 %v2590
        %2806 = vmatpush.bf16.msra.mxu0 %v2586
        %2807 = vmatmul.bf16.gmra.mxu0 %v2433
        %v2808 = vpop.f32.mrf.mxu0
        %v2809 = vadd.f32 0.0, %v2808
        %v2810 = vpop.f32.mrf.mxu0
        %v2811 = vadd.f32 0.0, %v2810
        %2812 = vmatmul.bf16.gmra.mxu0 %v2435
        %v2813 = vpop.f32.mrf.mxu0
        %v2814 = vadd.f32 0.0, %v2813
        %v2815 = vpop.f32.mrf.mxu0
        %v2816 = vadd.f32 0.0, %v2815
        %2817 = vdwg.mxu0
        %2818 = vmatpush.bf16.msra.mxu0 0
        %2819 = vmatpush.bf16.msra.mxu0 0
        %2820 = vmatpush.bf16.msra.mxu0 0
        %2821 = vmatpush.bf16.msra.mxu0 0
        %2822 = vmatpush.bf16.msra.mxu0 %v2630
        %2823 = vmatpush.bf16.msra.mxu0 %v2626
        %2824 = vmatpush.bf16.msra.mxu0 %v2622
        %2825 = vmatpush.bf16.msra.mxu0 %v2618
        %2826 = vmatmul.bf16.gmra.mxu0 %v2680
        %v2827 = vpop.f32.mrf.mxu0
        %v2828 = vadd.f32 %v2809, %v2827
        %v2829 = vpop.f32.mrf.mxu0
        %v2830 = vadd.f32 %v2811, %v2829
        %2831 = vmatmul.bf16.gmra.mxu0 %v2683
        %v2832 = vpop.f32.mrf.mxu0
        %v2833 = vadd.f32 %v2814, %v2832
        %v2834 = vpop.f32.mrf.mxu0
        %v2835 = vadd.f32 %v2816, %v2834
        %2836 = vdwg.mxu0
        %v2837 = vadd.f32 %v2351, %v2714
        %v2838 = vadd.f32 %v2352, %v2752
        %v2839 = vadd.f32 %v2353, %v2790
        %v2840 = vadd.f32 %v2354, %v2828
        %v2841 = vadd.f32 %v2355, %v2716
        %v2842 = vadd.f32 %v2356, %v2754
        %v2843 = vadd.f32 %v2357, %v2792
        %v2844 = vadd.f32 %v2358, %v2830
        %v2845 = vadd.f32 %v2359, %v2719
        %v2846 = vadd.f32 %v2360, %v2757
        %v2847 = vadd.f32 %v2361, %v2795
        %v2848 = vadd.f32 %v2362, %v2833
        %v2849 = vadd.f32 %v2363, %v2721
        %v2850 = vadd.f32 %v2364, %v2759
        %v2851 = vadd.f32 %v2365, %v2797
        %v2852 = vadd.f32 %v2366, %v2835
        %v2853 = vld [vmem:[%s2] sm:$0xf]
        %v2855 = vperm.slane %v2853, 0
        %v2856 = vperm.slane %v2853, 1
        %v2857 = vperm.slane %v2853, 2
        %v2858 = vperm.slane %v2853, 3
        %v2863 = vadd.f32 %v2837, %v2855
        %v2864 = vadd.f32 %v2838, %v2856
        %v2865 = vadd.f32 %v2839, %v2857
        %v2866 = vadd.f32 %v2840, %v2858
        %v2867 = vadd.f32 %v2841, %v2855
        %v2868 = vadd.f32 %v2842, %v2856
        %v2869 = vadd.f32 %v2843, %v2857
        %v2870 = vadd.f32 %v2844, %v2858
        %v2871 = vadd.f32 %v2845, %v2855
        %v2872 = vadd.f32 %v2846, %v2856
        %v2873 = vadd.f32 %v2847, %v2857
        %v2874 = vadd.f32 %v2848, %v2858
        %v2875 = vadd.f32 %v2849, %v2855
        %v2876 = vadd.f32 %v2850, %v2856
        %v2877 = vadd.f32 %v2851, %v2857
        %v2878 = vadd.f32 %v2852, %v2858
        %v2879 = vmax.f32 %v2863, 0.0
        %v2880 = vmax.f32 %v2864, 0.0
        %v2881 = vmax.f32 %v2865, 0.0
        %v2882 = vmax.f32 %v2866, 0.0
        %v2883 = vmax.f32 %v2867, 0.0
        %v2884 = vmax.f32 %v2868, 0.0
        %v2885 = vmax.f32 %v2869, 0.0
        %v2886 = vmax.f32 %v2870, 0.0
        %v2887 = vmax.f32 %v2871, 0.0
        %v2888 = vmax.f32 %v2872, 0.0
        %v2889 = vmax.f32 %v2873, 0.0
        %v2890 = vmax.f32 %v2874, 0.0
        %v2891 = vmax.f32 %v2875, 0.0
        %v2892 = vmax.f32 %v2876, 0.0
        %v2893 = vmax.f32 %v2877, 0.0
        %v2894 = vmax.f32 %v2878, 0.0
        %v2895 = vpack.c.bf16 %v2883, %v2879
        %v2896 = vpack.c.bf16 %v2884, %v2880
        %v2897 = vpack.c.bf16 %v2885, %v2881
        %v2898 = vpack.c.bf16 %v2886, %v2882
        %v2899 = vpack.c.bf16 %v2891, %v2887
        %v2900 = vpack.c.bf16 %v2892, %v2888
        %v2901 = vpack.c.bf16 %v2893, %v2889
        %v2902 = vpack.c.bf16 %v2894, %v2890
        %v2903 = vld [vmem:[%s3] sm:$0xf]
        %v2904 = vld [vmem:[%s3 + $0x4] sm:$0xf]
        %v2907 = vunpack.c.l.b16 %v2903
        %v2908 = vunpack.c.l.b16 %v2904
        %v2909 = vpack.c.b16 %v2908, %v2907
        %vm2910 = vcmask 261120
        %v2912 = vsel %vm2910, %v2909, 0
        %2914 = vmatpush.bf16.msra.mxu0 0
        %2915 = vmatpush.bf16.msra.mxu0 0
        %2916 = vmatpush.bf16.msra.mxu0 0
        %2917 = vmatpush.bf16.msra.mxu0 0
        %2918 = vmatpush.bf16.msra.mxu0 0
        %2919 = vmatpush.bf16.msra.mxu0 0
        %2920 = vmatpush.bf16.msra.mxu0 %v2899
        %2921 = vmatpush.bf16.msra.mxu0 %v2895
        %2922 = vmatmul.bf16.gmra.mxu0 %v2912
        %v2923 = vpop.f32.mrf.mxu0
        %v2924 = vadd.f32 0.0, %v2923
        %v2925 = vpop.f32.mrf.mxu0
        %v2926 = vadd.f32 0.0, %v2925
        %2927 = vdwg.mxu0
        %2928 = vmatpush.bf16.msra.mxu0 0
        %2929 = vmatpush.bf16.msra.mxu0 0
        %2930 = vmatpush.bf16.msra.mxu0 0
        %2931 = vmatpush.bf16.msra.mxu0 0
        %2932 = vmatpush.bf16.msra.mxu0 0
        %2933 = vmatpush.bf16.msra.mxu0 0
        %2934 = vmatpush.bf16.msra.mxu0 %v2900
        %2935 = vmatpush.bf16.msra.mxu0 %v2896
        %2936 = vmatmul.bf16.gmra.mxu0 %v2912
        %v2937 = vpop.f32.mrf.mxu0
        %v2938 = vadd.f32 0.0, %v2937
        %v2939 = vpop.f32.mrf.mxu0
        %v2940 = vadd.f32 0.0, %v2939
        %2941 = vdwg.mxu0
        %2942 = vmatpush.bf16.msra.mxu0 0
        %2943 = vmatpush.bf16.msra.mxu0 0
        %2944 = vmatpush.bf16.msra.mxu0 0
        %2945 = vmatpush.bf16.msra.mxu0 0
        %2946 = vmatpush.bf16.msra.mxu0 0
        %2947 = vmatpush.bf16.msra.mxu0 0
        %2948 = vmatpush.bf16.msra.mxu0 %v2901
        %2949 = vmatpush.bf16.msra.mxu0 %v2897
        %2950 = vmatmul.bf16.gmra.mxu0 %v2912
        %v2951 = vpop.f32.mrf.mxu0
        %v2952 = vadd.f32 0.0, %v2951
        %v2953 = vpop.f32.mrf.mxu0
        %v2954 = vadd.f32 0.0, %v2953
        %2955 = vdwg.mxu0
        %2956 = vmatpush.bf16.msra.mxu0 0
        %2957 = vmatpush.bf16.msra.mxu0 0
        %2958 = vmatpush.bf16.msra.mxu0 0
        %2959 = vmatpush.bf16.msra.mxu0 0
        %2960 = vmatpush.bf16.msra.mxu0 0
        %2961 = vmatpush.bf16.msra.mxu0 0
        %2962 = vmatpush.bf16.msra.mxu0 %v2902
        %2963 = vmatpush.bf16.msra.mxu0 %v2898
        %2964 = vmatmul.bf16.gmra.mxu0 %v2912
        %v2965 = vpop.f32.mrf.mxu0
        %v2966 = vadd.f32 0.0, %v2965
        %v2967 = vpop.f32.mrf.mxu0
        %v2968 = vadd.f32 0.0, %v2967
        %2969 = vdwg.mxu0
        %s2970 = scalar_lea.vmem %s3, 8
        %v2971 = vld [vmem:[%s2970] sm:$0xf]
        %v2972 = vld [vmem:[%s2970 + $0x4] sm:$0xf]
        %v2975 = vunpack.c.l.b16 %v2971
        %v2976 = vunpack.c.l.b16 %v2972
        %v2977 = vpack.c.b16 %v2976, %v2975
        %v2979 = vsel %vm2910, %v2977, 0
        %2981 = vmatpush.bf16.msra.mxu0 0
        %2982 = vmatpush.bf16.msra.mxu0 0
        %2983 = vmatpush.bf16.msra.mxu0 0
        %2984 = vmatpush.bf16.msra.mxu0 0
        %2985 = vmatpush.bf16.msra.mxu0 0
        %2986 = vmatpush.bf16.msra.mxu0 0
        %2987 = vmatpush.bf16.msra.mxu0 %v2899
        %2988 = vmatpush.bf16.msra.mxu0 %v2895
        %2989 = vmatmul.bf16.gmra.mxu0 %v2979
        %v2990 = vpop.f32.mrf.mxu0
        %v2991 = vadd.f32 0.0, %v2990
        %v2992 = vpop.f32.mrf.mxu0
        %v2993 = vadd.f32 0.0, %v2992
        %2994 = vdwg.mxu0
        %2995 = vmatpush.bf16.msra.mxu0 0
        %2996 = vmatpush.bf16.msra.mxu0 0
        %2997 = vmatpush.bf16.msra.mxu0 0
        %2998 = vmatpush.bf16.msra.mxu0 0
        %2999 = vmatpush.bf16.msra.mxu0 0
        %3000 = vmatpush.bf16.msra.mxu0 0
        %3001 = vmatpush.bf16.msra.mxu0 %v2900
        %3002 = vmatpush.bf16.msra.mxu0 %v2896
        %3003 = vmatmul.bf16.gmra.mxu0 %v2979
        %v3004 = vpop.f32.mrf.mxu0
        %v3005 = vadd.f32 0.0, %v3004
        %v3006 = vpop.f32.mrf.mxu0
        %v3007 = vadd.f32 0.0, %v3006
        %3008 = vdwg.mxu0
        %3009 = vmatpush.bf16.msra.mxu0 0
        %3010 = vmatpush.bf16.msra.mxu0 0
        %3011 = vmatpush.bf16.msra.mxu0 0
        %3012 = vmatpush.bf16.msra.mxu0 0
        %3013 = vmatpush.bf16.msra.mxu0 0
        %3014 = vmatpush.bf16.msra.mxu0 0
        %3015 = vmatpush.bf16.msra.mxu0 %v2901
        %3016 = vmatpush.bf16.msra.mxu0 %v2897
        %3017 = vmatmul.bf16.gmra.mxu0 %v2979
        %v3018 = vpop.f32.mrf.mxu0
        %v3019 = vadd.f32 0.0, %v3018
        %v3020 = vpop.f32.mrf.mxu0
        %v3021 = vadd.f32 0.0, %v3020
        %3022 = vdwg.mxu0
        %3023 = vmatpush.bf16.msra.mxu0 0
        %3024 = vmatpush.bf16.msra.mxu0 0
        %3025 = vmatpush.bf16.msra.mxu0 0
        %3026 = vmatpush.bf16.msra.mxu0 0
        %3027 = vmatpush.bf16.msra.mxu0 0
        %3028 = vmatpush.bf16.msra.mxu0 0
        %3029 = vmatpush.bf16.msra.mxu0 %v2902
        %3030 = vmatpush.bf16.msra.mxu0 %v2898
        %3031 = vmatmul.bf16.gmra.mxu0 %v2979
        %v3032 = vpop.f32.mrf.mxu0
        %v3033 = vadd.f32 0.0, %v3032
        %v3034 = vpop.f32.mrf.mxu0
        %v3035 = vadd.f32 0.0, %v3034
        %3036 = vdwg.mxu0
        %v3037 = vmax.f32 %v2924, %v2991
        %v3038 = vmax.f32 %v2938, %v3005
        %v3039 = vmax.f32 %v2952, %v3019
        %v3040 = vmax.f32 %v2966, %v3033
        %v3041 = vmax.f32 %v2926, %v2993
        %v3042 = vmax.f32 %v2940, %v3007
        %v3043 = vmax.f32 %v2954, %v3021
        %v3044 = vmax.f32 %v2968, %v3035
        %v3045 = vmax.f32 %v3037, %v3039
        %v3046 = vmax.f32 %v3038, %v3040
        %v3047 = vmax.f32 %v3041, %v3043
        %v3048 = vmax.f32 %v3042, %v3044
        %v3049 = vpack.c.bf16 %v3047, %v3045
        %v3050 = vpack.c.bf16 %v3048, %v3046
        %v3051 = vld [vmem:[%s4] sm:$0xf]
        %vm3052 = vcmask 130048
        %v3054 = vsel %vm3052, %v3051, 0
        %3056 = vmatpush.bf16.msra.mxu0 0
        %3057 = vmatpush.bf16.msra.mxu0 0
        %3058 = vmatpush.bf16.msra.mxu0 0
        %3059 = vmatpush.bf16.msra.mxu0 0
        %3060 = vmatpush.bf16.msra.mxu0 0
        %3061 = vmatpush.bf16.msra.mxu0 0
        %3062 = vmatpush.bf16.msra.mxu0 0
        %3063 = vmatpush.bf16.msra.mxu0 %v3049
        %3064 = vmatmul.bf16.gmra.mxu0 %v3054
        %v3065 = vpop.f32.mrf.mxu0
        %v3066 = vadd.f32 0.0, %v3065
        %v3067 = vpop.f32.mrf.mxu0
        %3068 = vdwg.mxu0
        %3069 = vmatpush.bf16.msra.mxu0 0
        %3070 = vmatpush.bf16.msra.mxu0 0
        %3071 = vmatpush.bf16.msra.mxu0 0
        %3072 = vmatpush.bf16.msra.mxu0 0
        %3073 = vmatpush.bf16.msra.mxu0 0
        %3074 = vmatpush.bf16.msra.mxu0 0
        %3075 = vmatpush.bf16.msra.mxu0 0
        %3076 = vmatpush.bf16.msra.mxu0 %v3050
        %3077 = vmatmul.bf16.gmra.mxu0 %v3054
        %v3078 = vpop.f32.mrf.mxu0
        %v3079 = vadd.f32 0.0, %v3078
        %v3080 = vpop.f32.mrf.mxu0
        %3081 = vdwg.mxu0
        %v3082 = vpack.c.bf16 %v3066, %v3066
        %v3083 = vpack.c.bf16 %v3079, %v3079
        %v3084 = vld [vmem:[%s5] sm:$0xff]
        %v3085 = vld [vmem:[%s5 + $0x8] sm:$0xff]
        %v3086 = vld [vmem:[%s5 + $0x10] sm:$0xff]
        %v3087 = vld [vmem:[%s5 + $0x18] sm:$0xff]
        %v3088 = vld [vmem:[%s5 + $0x20] sm:$0xff]
        %v3089 = vld [vmem:[%s5 + $0x28] sm:$0xff]
        %v3090 = vld [vmem:[%s5 + $0x30] sm:$0xff]
        %v3091 = vld [vmem:[%s5 + $0x38] sm:$0xff]
        %v3092 = vld [vmem:[%s5 + $0x40] sm:$0xff]
        %v3093 = vld [vmem:[%s5 + $0x48] sm:$0xff]
        %v3094 = vld [vmem:[%s5 + $0x50] sm:$0xff]
        %v3095 = vld [vmem:[%s5 + $0x58] sm:$0xff]
        %v3096 = vld [vmem:[%s5 + $0x60] sm:$0xff]
        %v3097 = vld [vmem:[%s5 + $0x68] sm:$0xff]
        %v3098 = vld [vmem:[%s5 + $0x70] sm:$0xff]
        %v3099 = vld [vmem:[%s5 + $0x78] sm:$0xff]
        %v3100 = vld [vmem:[%s5 + $0x80] sm:$0xff]
        %v3101 = vld [vmem:[%s5 + $0x88] sm:$0xff]
        %v3102 = vld [vmem:[%s5 + $0x90] sm:$0xff]
        %v3103 = vld [vmem:[%s5 + $0x98] sm:$0xff]
        %v3104 = vld [vmem:[%s5 + $0xa0] sm:$0xff]
        %v3105 = vld [vmem:[%s5 + $0xa8] sm:$0xff]
        %v3106 = vld [vmem:[%s5 + $0xb0] sm:$0xff]
        %v3107 = vld [vmem:[%s5 + $0xb8] sm:$0xff]
        %v3108 = vld [vmem:[%s5 + $0xc0] sm:$0xff]
        %v3109 = vld [vmem:[%s5 + $0xc8] sm:$0xff]
        %v3110 = vld [vmem:[%s5 + $0xd0] sm:$0xff]
        %v3111 = vld [vmem:[%s5 + $0xd8] sm:$0xff]
        %v3112 = vld [vmem:[%s5 + $0xe0] sm:$0xff]
        %v3113 = vld [vmem:[%s5 + $0xe8] sm:$0xff]
        %v3114 = vld [vmem:[%s5 + $0xf0] sm:$0xff]
        %v3115 = vld [vmem:[%s5 + $0xf8] sm:$0xff]
        %v3116 = vld [vmem:[%s5 + $0x100] sm:$0xff]
        %v3117 = vld [vmem:[%s5 + $0x108] sm:$0xff]
        %v3118 = vld [vmem:[%s5 + $0x110] sm:$0xff]
        %v3119 = vld [vmem:[%s5 + $0x118] sm:$0xff]
        %v3120 = vld [vmem:[%s5 + $0x120] sm:$0xff]
        %v3121 = vld [vmem:[%s5 + $0x128] sm:$0xff]
        %v3122 = vld [vmem:[%s5 + $0x130] sm:$0xff]
        %v3123 = vld [vmem:[%s5 + $0x138] sm:$0xff]
        %v3124 = vld [vmem:[%s5 + $0x140] sm:$0xff]
        %v3125 = vld [vmem:[%s5 + $0x148] sm:$0xff]
        %v3126 = vld [vmem:[%s5 + $0x150] sm:$0xff]
        %v3127 = vld [vmem:[%s5 + $0x158] sm:$0xff]
        %v3128 = vld [vmem:[%s5 + $0x160] sm:$0xff]
        %v3129 = vld [vmem:[%s5 + $0x168] sm:$0xff]
        %v3130 = vld [vmem:[%s5 + $0x170] sm:$0xff]
        %v3131 = vld [vmem:[%s5 + $0x178] sm:$0xff]
        %v3132 = vld [vmem:[%s5 + $0x180] sm:$0xff]
        %v3133 = vld [vmem:[%s5 + $0x188] sm:$0xff]
        %v3134 = vld [vmem:[%s5 + $0x190] sm:$0xff]
        %v3135 = vld [vmem:[%s5 + $0x198] sm:$0xff]
        %v3136 = vld [vmem:[%s5 + $0x1a0] sm:$0xff]
        %v3137 = vld [vmem:[%s5 + $0x1a8] sm:$0xff]
        %v3138 = vld [vmem:[%s5 + $0x1b0] sm:$0xff]
        %v3139 = vld [vmem:[%s5 + $0x1b8] sm:$0xff]
        %v3140 = vld [vmem:[%s5 + $0x1c0] sm:$0xff]
        %v3141 = vld [vmem:[%s5 + $0x1c8] sm:$0xff]
        %v3142 = vld [vmem:[%s5 + $0x1d0] sm:$0xff]
        %v3143 = vld [vmem:[%s5 + $0x1d8] sm:$0xff]
        %v3144 = vld [vmem:[%s5 + $0x1e0] sm:$0xff]
        %v3145 = vld [vmem:[%s5 + $0x1e8] sm:$0xff]
        %v3146 = vld [vmem:[%s5 + $0x1f0] sm:$0xff]
        %v3147 = vld [vmem:[%s5 + $0x1f8] sm:$0xff]
        %s3148 = scalar_lea.vmem %s4, 4
        %v3149 = vld [vmem:[%s3148] sm:$0xf]
        %v3151 = vsel %vm3052, %v3149, 0
        %3153 = vmatpush.bf16.msra.mxu0 0
        %3154 = vmatpush.bf16.msra.mxu0 0
        %3155 = vmatpush.bf16.msra.mxu0 0
        %3156 = vmatpush.bf16.msra.mxu0 0
        %3157 = vmatpush.bf16.msra.mxu0 0
        %3158 = vmatpush.bf16.msra.mxu0 0
        %3159 = vmatpush.bf16.msra.mxu0 0
        %3160 = vmatpush.bf16.msra.mxu0 %v3049
        %3161 = vmatmul.bf16.gmra.mxu0 %v3151
        %v3162 = vpop.f32.mrf.mxu0
        %v3163 = vadd.f32 0.0, %v3162
        %v3164 = vpop.f32.mrf.mxu0
        %3165 = vdwg.mxu0
        %3166 = vmatpush.bf16.msra.mxu0 0
        %3167 = vmatpush.bf16.msra.mxu0 0
        %3168 = vmatpush.bf16.msra.mxu0 0
        %3169 = vmatpush.bf16.msra.mxu0 0
        %3170 = vmatpush.bf16.msra.mxu0 0
        %3171 = vmatpush.bf16.msra.mxu0 0
        %3172 = vmatpush.bf16.msra.mxu0 0
        %3173 = vmatpush.bf16.msra.mxu0 %v3050
        %3174 = vmatmul.bf16.gmra.mxu0 %v3151
        %v3175 = vpop.f32.mrf.mxu0
        %v3176 = vadd.f32 0.0, %v3175
        %v3177 = vpop.f32.mrf.mxu0
        %3178 = vdwg.mxu0
        %v3179 = vpack.c.bf16 %v3163, %v3163
        %v3180 = vpack.c.bf16 %v3176, %v3176
        %s3181 = scalar_lea.vmem %s5, 512
        %v3182 = vld [vmem:[%s3181] sm:$0xff]
        %v3183 = vld [vmem:[%s3181 + $0x8] sm:$0xff]
        %v3184 = vld [vmem:[%s3181 + $0x10] sm:$0xff]
        %v3185 = vld [vmem:[%s3181 + $0x18] sm:$0xff]
        %v3186 = vld [vmem:[%s3181 + $0x20] sm:$0xff]
        %v3187 = vld [vmem:[%s3181 + $0x28] sm:$0xff]
        %v3188 = vld [vmem:[%s3181 + $0x30] sm:$0xff]
        %v3189 = vld [vmem:[%s3181 + $0x38] sm:$0xff]
        %v3190 = vld [vmem:[%s3181 + $0x40] sm:$0xff]
        %v3191 = vld [vmem:[%s3181 + $0x48] sm:$0xff]
        %v3192 = vld [vmem:[%s3181 + $0x50] sm:$0xff]
        %v3193 = vld [vmem:[%s3181 + $0x58] sm:$0xff]
        %v3194 = vld [vmem:[%s3181 + $0x60] sm:$0xff]
        %v3195 = vld [vmem:[%s3181 + $0x68] sm:$0xff]
        %v3196 = vld [vmem:[%s3181 + $0x70] sm:$0xff]
        %v3197 = vld [vmem:[%s3181 + $0x78] sm:$0xff]
        %v3198 = vld [vmem:[%s3181 + $0x80] sm:$0xff]
        %v3199 = vld [vmem:[%s3181 + $0x88] sm:$0xff]
        %v3200 = vld [vmem:[%s3181 + $0x90] sm:$0xff]
        %v3201 = vld [vmem:[%s3181 + $0x98] sm:$0xff]
        %v3202 = vld [vmem:[%s3181 + $0xa0] sm:$0xff]
        %v3203 = vld [vmem:[%s3181 + $0xa8] sm:$0xff]
        %v3204 = vld [vmem:[%s3181 + $0xb0] sm:$0xff]
        %v3205 = vld [vmem:[%s3181 + $0xb8] sm:$0xff]
        %v3206 = vld [vmem:[%s3181 + $0xc0] sm:$0xff]
        %v3207 = vld [vmem:[%s3181 + $0xc8] sm:$0xff]
        %v3208 = vld [vmem:[%s3181 + $0xd0] sm:$0xff]
        %v3209 = vld [vmem:[%s3181 + $0xd8] sm:$0xff]
        %v3210 = vld [vmem:[%s3181 + $0xe0] sm:$0xff]
        %v3211 = vld [vmem:[%s3181 + $0xe8] sm:$0xff]
        %v3212 = vld [vmem:[%s3181 + $0xf0] sm:$0xff]
        %v3213 = vld [vmem:[%s3181 + $0xf8] sm:$0xff]
        %v3214 = vld [vmem:[%s3181 + $0x100] sm:$0xff]
        %v3215 = vld [vmem:[%s3181 + $0x108] sm:$0xff]
        %v3216 = vld [vmem:[%s3181 + $0x110] sm:$0xff]
        %v3217 = vld [vmem:[%s3181 + $0x118] sm:$0xff]
        %v3218 = vld [vmem:[%s3181 + $0x120] sm:$0xff]
        %v3219 = vld [vmem:[%s3181 + $0x128] sm:$0xff]
        %v3220 = vld [vmem:[%s3181 + $0x130] sm:$0xff]
        %v3221 = vld [vmem:[%s3181 + $0x138] sm:$0xff]
        %v3222 = vld [vmem:[%s3181 + $0x140] sm:$0xff]
        %v3223 = vld [vmem:[%s3181 + $0x148] sm:$0xff]
        %v3224 = vld [vmem:[%s3181 + $0x150] sm:$0xff]
        %v3225 = vld [vmem:[%s3181 + $0x158] sm:$0xff]
        %v3226 = vld [vmem:[%s3181 + $0x160] sm:$0xff]
        %v3227 = vld [vmem:[%s3181 + $0x168] sm:$0xff]
        %v3228 = vld [vmem:[%s3181 + $0x170] sm:$0xff]
        %v3229 = vld [vmem:[%s3181 + $0x178] sm:$0xff]
        %v3230 = vld [vmem:[%s3181 + $0x180] sm:$0xff]
        %v3231 = vld [vmem:[%s3181 + $0x188] sm:$0xff]
        %v3232 = vld [vmem:[%s3181 + $0x190] sm:$0xff]
        %v3233 = vld [vmem:[%s3181 + $0x198] sm:$0xff]
        %v3234 = vld [vmem:[%s3181 + $0x1a0] sm:$0xff]
        %v3235 = vld [vmem:[%s3181 + $0x1a8] sm:$0xff]
        %v3236 = vld [vmem:[%s3181 + $0x1b0] sm:$0xff]
        %v3237 = vld [vmem:[%s3181 + $0x1b8] sm:$0xff]
        %v3238 = vld [vmem:[%s3181 + $0x1c0] sm:$0xff]
        %v3239 = vld [vmem:[%s3181 + $0x1c8] sm:$0xff]
        %v3240 = vld [vmem:[%s3181 + $0x1d0] sm:$0xff]
        %v3241 = vld [vmem:[%s3181 + $0x1d8] sm:$0xff]
        %v3242 = vld [vmem:[%s3181 + $0x1e0] sm:$0xff]
        %v3243 = vld [vmem:[%s3181 + $0x1e8] sm:$0xff]
        %v3244 = vld [vmem:[%s3181 + $0x1f0] sm:$0xff]
        %v3245 = vld [vmem:[%s3181 + $0x1f8] sm:$0xff]
        %v3310 = vunpack.c.l.b16 %v3182
        %v3311 = vunpack.c.h.b16 %v3182
        %v3312 = vunpack.c.l.b16 %v3183
        %v3313 = vunpack.c.h.b16 %v3183
        %v3314 = vunpack.c.l.b16 %v3184
        %v3315 = vunpack.c.h.b16 %v3184
        %v3316 = vunpack.c.l.b16 %v3185
        %v3317 = vunpack.c.h.b16 %v3185
        %v3318 = vunpack.c.l.b16 %v3186
        %v3319 = vunpack.c.h.b16 %v3186
        %v3320 = vunpack.c.l.b16 %v3187
        %v3321 = vunpack.c.h.b16 %v3187
        %v3322 = vunpack.c.l.b16 %v3188
        %v3323 = vunpack.c.h.b16 %v3188
        %v3324 = vunpack.c.l.b16 %v3189
        %v3325 = vunpack.c.h.b16 %v3189
        %v3326 = vunpack.c.l.b16 %v3190
        %v3327 = vunpack.c.h.b16 %v3190
        %v3328 = vunpack.c.l.b16 %v3191
        %v3329 = vunpack.c.h.b16 %v3191
        %v3330 = vunpack.c.l.b16 %v3192
        %v3331 = vunpack.c.h.b16 %v3192
        %v3332 = vunpack.c.l.b16 %v3193
        %v3333 = vunpack.c.h.b16 %v3193
        %v3334 = vunpack.c.l.b16 %v3194
        %v3335 = vunpack.c.h.b16 %v3194
        %v3336 = vunpack.c.l.b16 %v3195
        %v3337 = vunpack.c.h.b16 %v3195
        %v3338 = vunpack.c.l.b16 %v3196
        %v3339 = vunpack.c.h.b16 %v3196
        %v3340 = vunpack.c.l.b16 %v3197
        %v3341 = vunpack.c.h.b16 %v3197
        %v3342 = vunpack.c.l.b16 %v3198
        %v3343 = vunpack.c.h.b16 %v3198
        %v3344 = vunpack.c.l.b16 %v3199
        %v3345 = vunpack.c.h.b16 %v3199
        %v3346 = vunpack.c.l.b16 %v3200
        %v3347 = vunpack.c.h.b16 %v3200
        %v3348 = vunpack.c.l.b16 %v3201
        %v3349 = vunpack.c.h.b16 %v3201
        %v3350 = vunpack.c.l.b16 %v3202
        %v3351 = vunpack.c.h.b16 %v3202
        %v3352 = vunpack.c.l.b16 %v3203
        %v3353 = vunpack.c.h.b16 %v3203
        %v3354 = vunpack.c.l.b16 %v3204
        %v3355 = vunpack.c.h.b16 %v3204
        %v3356 = vunpack.c.l.b16 %v3205
        %v3357 = vunpack.c.h.b16 %v3205
        %v3358 = vunpack.c.l.b16 %v3206
        %v3359 = vunpack.c.h.b16 %v3206
        %v3360 = vunpack.c.l.b16 %v3207
        %v3361 = vunpack.c.h.b16 %v3207
        %v3362 = vunpack.c.l.b16 %v3208
        %v3363 = vunpack.c.h.b16 %v3208
        %v3364 = vunpack.c.l.b16 %v3209
        %v3365 = vunpack.c.h.b16 %v3209
        %v3366 = vunpack.c.l.b16 %v3210
        %v3367 = vunpack.c.h.b16 %v3210
        %v3368 = vunpack.c.l.b16 %v3211
        %v3369 = vunpack.c.h.b16 %v3211
        %v3370 = vunpack.c.l.b16 %v3212
        %v3371 = vunpack.c.h.b16 %v3212
        %v3372 = vunpack.c.l.b16 %v3213
        %v3373 = vunpack.c.h.b16 %v3213
        %v3374 = vunpack.c.l.b16 %v3214
        %v3375 = vunpack.c.h.b16 %v3214
        %v3376 = vunpack.c.l.b16 %v3215
        %v3377 = vunpack.c.h.b16 %v3215
        %v3378 = vunpack.c.l.b16 %v3216
        %v3379 = vunpack.c.h.b16 %v3216
        %v3380 = vunpack.c.l.b16 %v3217
        %v3381 = vunpack.c.h.b16 %v3217
        %v3382 = vunpack.c.l.b16 %v3218
        %v3383 = vunpack.c.h.b16 %v3218
        %v3384 = vunpack.c.l.b16 %v3219
        %v3385 = vunpack.c.h.b16 %v3219
        %v3386 = vunpack.c.l.b16 %v3220
        %v3387 = vunpack.c.h.b16 %v3220
        %v3388 = vunpack.c.l.b16 %v3221
        %v3389 = vunpack.c.h.b16 %v3221
        %v3390 = vunpack.c.l.b16 %v3222
        %v3391 = vunpack.c.h.b16 %v3222
        %v3392 = vunpack.c.l.b16 %v3223
        %v3393 = vunpack.c.h.b16 %v3223
        %v3394 = vunpack.c.l.b16 %v3224
        %v3395 = vunpack.c.h.b16 %v3224
        %v3396 = vunpack.c.l.b16 %v3225
        %v3397 = vunpack.c.h.b16 %v3225
        %v3398 = vunpack.c.l.b16 %v3226
        %v3399 = vunpack.c.h.b16 %v3226
        %v3400 = vunpack.c.l.b16 %v3227
        %v3401 = vunpack.c.h.b16 %v3227
        %v3402 = vunpack.c.l.b16 %v3228
        %v3403 = vunpack.c.h.b16 %v3228
        %v3404 = vunpack.c.l.b16 %v3229
        %v3405 = vunpack.c.h.b16 %v3229
        %v3406 = vunpack.c.l.b16 %v3230
        %v3407 = vunpack.c.h.b16 %v3230
        %v3408 = vunpack.c.l.b16 %v3231
        %v3409 = vunpack.c.h.b16 %v3231
        %v3410 = vunpack.c.l.b16 %v3232
        %v3411 = vunpack.c.h.b16 %v3232
        %v3412 = vunpack.c.l.b16 %v3233
        %v3413 = vunpack.c.h.b16 %v3233
        %v3414 = vunpack.c.l.b16 %v3234
        %v3415 = vunpack.c.h.b16 %v3234
        %v3416 = vunpack.c.l.b16 %v3235
        %v3417 = vunpack.c.h.b16 %v3235
        %v3418 = vunpack.c.l.b16 %v3236
        %v3419 = vunpack.c.h.b16 %v3236
        %v3420 = vunpack.c.l.b16 %v3237
        %v3421 = vunpack.c.h.b16 %v3237
        %v3422 = vunpack.c.l.b16 %v3238
        %v3423 = vunpack.c.h.b16 %v3238
        %v3424 = vunpack.c.l.b16 %v3239
        %v3425 = vunpack.c.h.b16 %v3239
        %v3426 = vunpack.c.l.b16 %v3240
        %v3427 = vunpack.c.h.b16 %v3240
        %v3428 = vunpack.c.l.b16 %v3241
        %v3429 = vunpack.c.h.b16 %v3241
        %v3430 = vunpack.c.l.b16 %v3242
        %v3431 = vunpack.c.h.b16 %v3242
        %v3432 = vunpack.c.l.b16 %v3243
        %v3433 = vunpack.c.h.b16 %v3243
        %v3434 = vunpack.c.l.b16 %v3244
        %v3435 = vunpack.c.h.b16 %v3244
        %v3436 = vunpack.c.l.b16 %v3245
        %v3437 = vunpack.c.h.b16 %v3245
        %v3438 = vpack.c.b16 %v3314, %v3310
        %v3439 = vpack.c.b16 %v3315, %v3311
        %v3440 = vpack.c.b16 %v3316, %v3312
        %v3441 = vpack.c.b16 %v3317, %v3313
        %v3442 = vpack.c.b16 %v3322, %v3318
        %v3443 = vpack.c.b16 %v3323, %v3319
        %v3444 = vpack.c.b16 %v3324, %v3320
        %v3445 = vpack.c.b16 %v3325, %v3321
        %v3446 = vpack.c.b16 %v3330, %v3326
        %v3447 = vpack.c.b16 %v3331, %v3327
        %v3448 = vpack.c.b16 %v3332, %v3328
        %v3449 = vpack.c.b16 %v3333, %v3329
        %v3450 = vpack.c.b16 %v3338, %v3334
        %v3451 = vpack.c.b16 %v3339, %v3335
        %v3452 = vpack.c.b16 %v3340, %v3336
        %v3453 = vpack.c.b16 %v3341, %v3337
        %v3454 = vpack.c.b16 %v3346, %v3342
        %v3455 = vpack.c.b16 %v3347, %v3343
        %v3456 = vpack.c.b16 %v3348, %v3344
        %v3457 = vpack.c.b16 %v3349, %v3345
        %v3458 = vpack.c.b16 %v3354, %v3350
        %v3459 = vpack.c.b16 %v3355, %v3351
        %v3460 = vpack.c.b16 %v3356, %v3352
        %v3461 = vpack.c.b16 %v3357, %v3353
        %v3462 = vpack.c.b16 %v3362, %v3358
        %v3463 = vpack.c.b16 %v3363, %v3359
        %v3464 = vpack.c.b16 %v3364, %v3360
        %v3465 = vpack.c.b16 %v3365, %v3361
        %v3466 = vpack.c.b16 %v3370, %v3366
        %v3467 = vpack.c.b16 %v3371, %v3367
        %v3468 = vpack.c.b16 %v3372, %v3368
        %v3469 = vpack.c.b16 %v3373, %v3369
        %v3470 = vpack.c.b16 %v3378, %v3374
        %v3471 = vpack.c.b16 %v3379, %v3375
        %v3472 = vpack.c.b16 %v3380, %v3376
        %v3473 = vpack.c.b16 %v3381, %v3377
        %v3474 = vpack.c.b16 %v3386, %v3382
        %v3475 = vpack.c.b16 %v3387, %v3383
        %v3476 = vpack.c.b16 %v3388, %v3384
        %v3477 = vpack.c.b16 %v3389, %v3385
        %v3478 = vpack.c.b16 %v3394, %v3390
        %v3479 = vpack.c.b16 %v3395, %v3391
        %v3480 = vpack.c.b16 %v3396, %v3392
        %v3481 = vpack.c.b16 %v3397, %v3393
        %v3482 = vpack.c.b16 %v3402, %v3398
        %v3483 = vpack.c.b16 %v3403, %v3399
        %v3484 = vpack.c.b16 %v3404, %v3400
        %v3485 = vpack.c.b16 %v3405, %v3401
        %v3486 = vpack.c.b16 %v3410, %v3406
        %v3487 = vpack.c.b16 %v3411, %v3407
        %v3488 = vpack.c.b16 %v3412, %v3408
        %v3489 = vpack.c.b16 %v3413, %v3409
        %v3490 = vpack.c.b16 %v3418, %v3414
        %v3491 = vpack.c.b16 %v3419, %v3415
        %v3492 = vpack.c.b16 %v3420, %v3416
        %v3493 = vpack.c.b16 %v3421, %v3417
        %v3494 = vpack.c.b16 %v3426, %v3422
        %v3495 = vpack.c.b16 %v3427, %v3423
        %v3496 = vpack.c.b16 %v3428, %v3424
        %v3497 = vpack.c.b16 %v3429, %v3425
        %v3498 = vpack.c.b16 %v3434, %v3430
        %v3499 = vpack.c.b16 %v3435, %v3431
        %v3500 = vpack.c.b16 %v3436, %v3432
        %v3501 = vpack.c.b16 %v3437, %v3433
        %3566 = vmatpush.bf16.msra.mxu0 %v3466
        %3567 = vmatpush.bf16.msra.mxu0 %v3462
        %3568 = vmatpush.bf16.msra.mxu0 %v3458
        %3569 = vmatpush.bf16.msra.mxu0 %v3454
        %3570 = vmatpush.bf16.msra.mxu0 %v3450
        %3571 = vmatpush.bf16.msra.mxu0 %v3446
        %3572 = vmatpush.bf16.msra.mxu0 %v3442
        %3573 = vmatpush.bf16.msra.mxu0 %v3438
        %3574 = vmatmul.bf16.gmra.mxu0 %v3179
        %v3575 = vpop.f32.mrf.mxu0
        %v3576 = vadd.f32 0.0, %v3575
        %v3577 = vpop.f32.mrf.mxu0
        %3578 = vdwg.mxu0
        %3579 = vmatpush.bf16.msra.mxu0 %v3498
        %3580 = vmatpush.bf16.msra.mxu0 %v3494
        %3581 = vmatpush.bf16.msra.mxu0 %v3490
        %3582 = vmatpush.bf16.msra.mxu0 %v3486
        %3583 = vmatpush.bf16.msra.mxu0 %v3482
        %3584 = vmatpush.bf16.msra.mxu0 %v3478
        %3585 = vmatpush.bf16.msra.mxu0 %v3474
        %3586 = vmatpush.bf16.msra.mxu0 %v3470
        %3587 = vmatmul.bf16.gmra.mxu0 %v3180
        %v3588 = vpop.f32.mrf.mxu0
        %v3589 = vadd.f32 %v3576, %v3588
        %v3590 = vpop.f32.mrf.mxu0
        %3591 = vdwg.mxu0
        %3592 = vmatpush.bf16.msra.mxu0 %v3467
        %3593 = vmatpush.bf16.msra.mxu0 %v3463
        %3594 = vmatpush.bf16.msra.mxu0 %v3459
        %3595 = vmatpush.bf16.msra.mxu0 %v3455
        %3596 = vmatpush.bf16.msra.mxu0 %v3451
        %3597 = vmatpush.bf16.msra.mxu0 %v3447
        %3598 = vmatpush.bf16.msra.mxu0 %v3443
        %3599 = vmatpush.bf16.msra.mxu0 %v3439
        %3600 = vmatmul.bf16.gmra.mxu0 %v3179
        %v3601 = vpop.f32.mrf.mxu0
        %v3602 = vadd.f32 0.0, %v3601
        %v3603 = vpop.f32.mrf.mxu0
        %3604 = vdwg.mxu0
        %3605 = vmatpush.bf16.msra.mxu0 %v3499
        %3606 = vmatpush.bf16.msra.mxu0 %v3495
        %3607 = vmatpush.bf16.msra.mxu0 %v3491
        %3608 = vmatpush.bf16.msra.mxu0 %v3487
        %3609 = vmatpush.bf16.msra.mxu0 %v3483
        %3610 = vmatpush.bf16.msra.mxu0 %v3479
        %3611 = vmatpush.bf16.msra.mxu0 %v3475
        %3612 = vmatpush.bf16.msra.mxu0 %v3471
        %3613 = vmatmul.bf16.gmra.mxu0 %v3180
        %v3614 = vpop.f32.mrf.mxu0
        %v3615 = vadd.f32 %v3602, %v3614
        %v3616 = vpop.f32.mrf.mxu0
        %3617 = vdwg.mxu0
        %3618 = vmatpush.bf16.msra.mxu0 %v3468
        %3619 = vmatpush.bf16.msra.mxu0 %v3464
        %3620 = vmatpush.bf16.msra.mxu0 %v3460
        %3621 = vmatpush.bf16.msra.mxu0 %v3456
        %3622 = vmatpush.bf16.msra.mxu0 %v3452
        %3623 = vmatpush.bf16.msra.mxu0 %v3448
        %3624 = vmatpush.bf16.msra.mxu0 %v3444
        %3625 = vmatpush.bf16.msra.mxu0 %v3440
        %3626 = vmatmul.bf16.gmra.mxu0 %v3179
        %v3627 = vpop.f32.mrf.mxu0
        %v3628 = vadd.f32 0.0, %v3627
        %v3629 = vpop.f32.mrf.mxu0
        %3630 = vdwg.mxu0
        %3631 = vmatpush.bf16.msra.mxu0 %v3500
        %3632 = vmatpush.bf16.msra.mxu0 %v3496
        %3633 = vmatpush.bf16.msra.mxu0 %v3492
        %3634 = vmatpush.bf16.msra.mxu0 %v3488
        %3635 = vmatpush.bf16.msra.mxu0 %v3484
        %3636 = vmatpush.bf16.msra.mxu0 %v3480
        %3637 = vmatpush.bf16.msra.mxu0 %v3476
        %3638 = vmatpush.bf16.msra.mxu0 %v3472
        %3639 = vmatmul.bf16.gmra.mxu0 %v3180
        %v3640 = vpop.f32.mrf.mxu0
        %v3641 = vadd.f32 %v3628, %v3640
        %v3642 = vpop.f32.mrf.mxu0
        %3643 = vdwg.mxu0
        %3644 = vmatpush.bf16.msra.mxu0 %v3469
        %3645 = vmatpush.bf16.msra.mxu0 %v3465
        %3646 = vmatpush.bf16.msra.mxu0 %v3461
        %3647 = vmatpush.bf16.msra.mxu0 %v3457
        %3648 = vmatpush.bf16.msra.mxu0 %v3453
        %3649 = vmatpush.bf16.msra.mxu0 %v3449
        %3650 = vmatpush.bf16.msra.mxu0 %v3445
        %3651 = vmatpush.bf16.msra.mxu0 %v3441
        %3652 = vmatmul.bf16.gmra.mxu0 %v3179
        %v3653 = vpop.f32.mrf.mxu0
        %v3654 = vadd.f32 0.0, %v3653
        %v3655 = vpop.f32.mrf.mxu0
        %3656 = vdwg.mxu0
        %3657 = vmatpush.bf16.msra.mxu0 %v3501
        %3658 = vmatpush.bf16.msra.mxu0 %v3497
        %3659 = vmatpush.bf16.msra.mxu0 %v3493
        %3660 = vmatpush.bf16.msra.mxu0 %v3489
        %3661 = vmatpush.bf16.msra.mxu0 %v3485
        %3662 = vmatpush.bf16.msra.mxu0 %v3481
        %3663 = vmatpush.bf16.msra.mxu0 %v3477
        %3664 = vmatpush.bf16.msra.mxu0 %v3473
        %3665 = vmatmul.bf16.gmra.mxu0 %v3180
        %v3666 = vpop.f32.mrf.mxu0
        %v3667 = vadd.f32 %v3654, %v3666
        %v3668 = vpop.f32.mrf.mxu0
        %3669 = vdwg.mxu0
        %v3734 = vunpack.c.l.b16 %v3084
        %v3735 = vunpack.c.h.b16 %v3084
        %v3736 = vunpack.c.l.b16 %v3085
        %v3737 = vunpack.c.h.b16 %v3085
        %v3738 = vunpack.c.l.b16 %v3086
        %v3739 = vunpack.c.h.b16 %v3086
        %v3740 = vunpack.c.l.b16 %v3087
        %v3741 = vunpack.c.h.b16 %v3087
        %v3742 = vunpack.c.l.b16 %v3088
        %v3743 = vunpack.c.h.b16 %v3088
        %v3744 = vunpack.c.l.b16 %v3089
        %v3745 = vunpack.c.h.b16 %v3089
        %v3746 = vunpack.c.l.b16 %v3090
        %v3747 = vunpack.c.h.b16 %v3090
        %v3748 = vunpack.c.l.b16 %v3091
        %v3749 = vunpack.c.h.b16 %v3091
        %v3750 = vunpack.c.l.b16 %v3092
        %v3751 = vunpack.c.h.b16 %v3092
        %v3752 = vunpack.c.l.b16 %v3093
        %v3753 = vunpack.c.h.b16 %v3093
        %v3754 = vunpack.c.l.b16 %v3094
        %v3755 = vunpack.c.h.b16 %v3094
        %v3756 = vunpack.c.l.b16 %v3095
        %v3757 = vunpack.c.h.b16 %v3095
        %v3758 = vunpack.c.l.b16 %v3096
        %v3759 = vunpack.c.h.b16 %v3096
        %v3760 = vunpack.c.l.b16 %v3097
        %v3761 = vunpack.c.h.b16 %v3097
        %v3762 = vunpack.c.l.b16 %v3098
        %v3763 = vunpack.c.h.b16 %v3098
        %v3764 = vunpack.c.l.b16 %v3099
        %v3765 = vunpack.c.h.b16 %v3099
        %v3766 = vunpack.c.l.b16 %v3100
        %v3767 = vunpack.c.h.b16 %v3100
        %v3768 = vunpack.c.l.b16 %v3101
        %v3769 = vunpack.c.h.b16 %v3101
        %v3770 = vunpack.c.l.b16 %v3102
        %v3771 = vunpack.c.h.b16 %v3102
        %v3772 = vunpack.c.l.b16 %v3103
        %v3773 = vunpack.c.h.b16 %v3103
        %v3774 = vunpack.c.l.b16 %v3104
        %v3775 = vunpack.c.h.b16 %v3104
        %v3776 = vunpack.c.l.b16 %v3105
        %v3777 = vunpack.c.h.b16 %v3105
        %v3778 = vunpack.c.l.b16 %v3106
        %v3779 = vunpack.c.h.b16 %v3106
        %v3780 = vunpack.c.l.b16 %v3107
        %v3781 = vunpack.c.h.b16 %v3107
        %v3782 = vunpack.c.l.b16 %v3108
        %v3783 = vunpack.c.h.b16 %v3108
        %v3784 = vunpack.c.l.b16 %v3109
        %v3785 = vunpack.c.h.b16 %v3109
        %v3786 = vunpack.c.l.b16 %v3110
        %v3787 = vunpack.c.h.b16 %v3110
        %v3788 = vunpack.c.l.b16 %v3111
        %v3789 = vunpack.c.h.b16 %v3111
        %v3790 = vunpack.c.l.b16 %v3112
        %v3791 = vunpack.c.h.b16 %v3112
        %v3792 = vunpack.c.l.b16 %v3113
        %v3793 = vunpack.c.h.b16 %v3113
        %v3794 = vunpack.c.l.b16 %v3114
        %v3795 = vunpack.c.h.b16 %v3114
        %v3796 = vunpack.c.l.b16 %v3115
        %v3797 = vunpack.c.h.b16 %v3115
        %v3798 = vunpack.c.l.b16 %v3116
        %v3799 = vunpack.c.h.b16 %v3116
        %v3800 = vunpack.c.l.b16 %v3117
        %v3801 = vunpack.c.h.b16 %v3117
        %v3802 = vunpack.c.l.b16 %v3118
        %v3803 = vunpack.c.h.b16 %v3118
        %v3804 = vunpack.c.l.b16 %v3119
        %v3805 = vunpack.c.h.b16 %v3119
        %v3806 = vunpack.c.l.b16 %v3120
        %v3807 = vunpack.c.h.b16 %v3120
        %v3808 = vunpack.c.l.b16 %v3121
        %v3809 = vunpack.c.h.b16 %v3121
        %v3810 = vunpack.c.l.b16 %v3122
        %v3811 = vunpack.c.h.b16 %v3122
        %v3812 = vunpack.c.l.b16 %v3123
        %v3813 = vunpack.c.h.b16 %v3123
        %v3814 = vunpack.c.l.b16 %v3124
        %v3815 = vunpack.c.h.b16 %v3124
        %v3816 = vunpack.c.l.b16 %v3125
        %v3817 = vunpack.c.h.b16 %v3125
        %v3818 = vunpack.c.l.b16 %v3126
        %v3819 = vunpack.c.h.b16 %v3126
        %v3820 = vunpack.c.l.b16 %v3127
        %v3821 = vunpack.c.h.b16 %v3127
        %v3822 = vunpack.c.l.b16 %v3128
        %v3823 = vunpack.c.h.b16 %v3128
        %v3824 = vunpack.c.l.b16 %v3129
        %v3825 = vunpack.c.h.b16 %v3129
        %v3826 = vunpack.c.l.b16 %v3130
        %v3827 = vunpack.c.h.b16 %v3130
        %v3828 = vunpack.c.l.b16 %v3131
        %v3829 = vunpack.c.h.b16 %v3131
        %v3830 = vunpack.c.l.b16 %v3132
        %v3831 = vunpack.c.h.b16 %v3132
        %v3832 = vunpack.c.l.b16 %v3133
        %v3833 = vunpack.c.h.b16 %v3133
        %v3834 = vunpack.c.l.b16 %v3134
        %v3835 = vunpack.c.h.b16 %v3134
        %v3836 = vunpack.c.l.b16 %v3135
        %v3837 = vunpack.c.h.b16 %v3135
        %v3838 = vunpack.c.l.b16 %v3136
        %v3839 = vunpack.c.h.b16 %v3136
        %v3840 = vunpack.c.l.b16 %v3137
        %v3841 = vunpack.c.h.b16 %v3137
        %v3842 = vunpack.c.l.b16 %v3138
        %v3843 = vunpack.c.h.b16 %v3138
        %v3844 = vunpack.c.l.b16 %v3139
        %v3845 = vunpack.c.h.b16 %v3139
        %v3846 = vunpack.c.l.b16 %v3140
        %v3847 = vunpack.c.h.b16 %v3140
        %v3848 = vunpack.c.l.b16 %v3141
        %v3849 = vunpack.c.h.b16 %v3141
        %v3850 = vunpack.c.l.b16 %v3142
        %v3851 = vunpack.c.h.b16 %v3142
        %v3852 = vunpack.c.l.b16 %v3143
        %v3853 = vunpack.c.h.b16 %v3143
        %v3854 = vunpack.c.l.b16 %v3144
        %v3855 = vunpack.c.h.b16 %v3144
        %v3856 = vunpack.c.l.b16 %v3145
        %v3857 = vunpack.c.h.b16 %v3145
        %v3858 = vunpack.c.l.b16 %v3146
        %v3859 = vunpack.c.h.b16 %v3146
        %v3860 = vunpack.c.l.b16 %v3147
        %v3861 = vunpack.c.h.b16 %v3147
        %v3862 = vpack.c.b16 %v3738, %v3734
        %v3863 = vpack.c.b16 %v3739, %v3735
        %v3864 = vpack.c.b16 %v3740, %v3736
        %v3865 = vpack.c.b16 %v3741, %v3737
        %v3866 = vpack.c.b16 %v3746, %v3742
        %v3867 = vpack.c.b16 %v3747, %v3743
        %v3868 = vpack.c.b16 %v3748, %v3744
        %v3869 = vpack.c.b16 %v3749, %v3745
        %v3870 = vpack.c.b16 %v3754, %v3750
        %v3871 = vpack.c.b16 %v3755, %v3751
        %v3872 = vpack.c.b16 %v3756, %v3752
        %v3873 = vpack.c.b16 %v3757, %v3753
        %v3874 = vpack.c.b16 %v3762, %v3758
        %v3875 = vpack.c.b16 %v3763, %v3759
        %v3876 = vpack.c.b16 %v3764, %v3760
        %v3877 = vpack.c.b16 %v3765, %v3761
        %v3878 = vpack.c.b16 %v3770, %v3766
        %v3879 = vpack.c.b16 %v3771, %v3767
        %v3880 = vpack.c.b16 %v3772, %v3768
        %v3881 = vpack.c.b16 %v3773, %v3769
        %v3882 = vpack.c.b16 %v3778, %v3774
        %v3883 = vpack.c.b16 %v3779, %v3775
        %v3884 = vpack.c.b16 %v3780, %v3776
        %v3885 = vpack.c.b16 %v3781, %v3777
        %v3886 = vpack.c.b16 %v3786, %v3782
        %v3887 = vpack.c.b16 %v3787, %v3783
        %v3888 = vpack.c.b16 %v3788, %v3784
        %v3889 = vpack.c.b16 %v3789, %v3785
        %v3890 = vpack.c.b16 %v3794, %v3790
        %v3891 = vpack.c.b16 %v3795, %v3791
        %v3892 = vpack.c.b16 %v3796, %v3792
        %v3893 = vpack.c.b16 %v3797, %v3793
        %v3894 = vpack.c.b16 %v3802, %v3798
        %v3895 = vpack.c.b16 %v3803, %v3799
        %v3896 = vpack.c.b16 %v3804, %v3800
        %v3897 = vpack.c.b16 %v3805, %v3801
        %v3898 = vpack.c.b16 %v3810, %v3806
        %v3899 = vpack.c.b16 %v3811, %v3807
        %v3900 = vpack.c.b16 %v3812, %v3808
        %v3901 = vpack.c.b16 %v3813, %v3809
        %v3902 = vpack.c.b16 %v3818, %v3814
        %v3903 = vpack.c.b16 %v3819, %v3815
        %v3904 = vpack.c.b16 %v3820, %v3816
        %v3905 = vpack.c.b16 %v3821, %v3817
        %v3906 = vpack.c.b16 %v3826, %v3822
        %v3907 = vpack.c.b16 %v3827, %v3823
        %v3908 = vpack.c.b16 %v3828, %v3824
        %v3909 = vpack.c.b16 %v3829, %v3825
        %v3910 = vpack.c.b16 %v3834, %v3830
        %v3911 = vpack.c.b16 %v3835, %v3831
        %v3912 = vpack.c.b16 %v3836, %v3832
        %v3913 = vpack.c.b16 %v3837, %v3833
        %v3914 = vpack.c.b16 %v3842, %v3838
        %v3915 = vpack.c.b16 %v3843, %v3839
        %v3916 = vpack.c.b16 %v3844, %v3840
        %v3917 = vpack.c.b16 %v3845, %v3841
        %v3918 = vpack.c.b16 %v3850, %v3846
        %v3919 = vpack.c.b16 %v3851, %v3847
        %v3920 = vpack.c.b16 %v3852, %v3848
        %v3921 = vpack.c.b16 %v3853, %v3849
        %v3922 = vpack.c.b16 %v3858, %v3854
        %v3923 = vpack.c.b16 %v3859, %v3855
        %v3924 = vpack.c.b16 %v3860, %v3856
        %v3925 = vpack.c.b16 %v3861, %v3857
        %3990 = vmatpush.bf16.msra.mxu0 %v3890
        %3991 = vmatpush.bf16.msra.mxu0 %v3886
        %3992 = vmatpush.bf16.msra.mxu0 %v3882
        %3993 = vmatpush.bf16.msra.mxu0 %v3878
        %3994 = vmatpush.bf16.msra.mxu0 %v3874
        %3995 = vmatpush.bf16.msra.mxu0 %v3870
        %3996 = vmatpush.bf16.msra.mxu0 %v3866
        %3997 = vmatpush.bf16.msra.mxu0 %v3862
        %3998 = vmatmul.bf16.gmra.mxu0 %v3082
        %v3999 = vpop.f32.mrf.mxu0
        %v4000 = vadd.f32 %v3589, %v3999
        %v4001 = vpop.f32.mrf.mxu0
        %4002 = vdwg.mxu0
        %4003 = vmatpush.bf16.msra.mxu0 %v3922
        %4004 = vmatpush.bf16.msra.mxu0 %v3918
        %4005 = vmatpush.bf16.msra.mxu0 %v3914
        %4006 = vmatpush.bf16.msra.mxu0 %v3910
        %4007 = vmatpush.bf16.msra.mxu0 %v3906
        %4008 = vmatpush.bf16.msra.mxu0 %v3902
        %4009 = vmatpush.bf16.msra.mxu0 %v3898
        %4010 = vmatpush.bf16.msra.mxu0 %v3894
        %4011 = vmatmul.bf16.gmra.mxu0 %v3083
        %v4012 = vpop.f32.mrf.mxu0
        %v4013 = vadd.f32 %v4000, %v4012
        %v4014 = vpop.f32.mrf.mxu0
        %4015 = vdwg.mxu0
        %4016 = vmatpush.bf16.msra.mxu0 %v3891
        %4017 = vmatpush.bf16.msra.mxu0 %v3887
        %4018 = vmatpush.bf16.msra.mxu0 %v3883
        %4019 = vmatpush.bf16.msra.mxu0 %v3879
        %4020 = vmatpush.bf16.msra.mxu0 %v3875
        %4021 = vmatpush.bf16.msra.mxu0 %v3871
        %4022 = vmatpush.bf16.msra.mxu0 %v3867
        %4023 = vmatpush.bf16.msra.mxu0 %v3863
        %4024 = vmatmul.bf16.gmra.mxu0 %v3082
        %v4025 = vpop.f32.mrf.mxu0
        %v4026 = vadd.f32 %v3615, %v4025
        %v4027 = vpop.f32.mrf.mxu0
        %4028 = vdwg.mxu0
        %4029 = vmatpush.bf16.msra.mxu0 %v3923
        %4030 = vmatpush.bf16.msra.mxu0 %v3919
        %4031 = vmatpush.bf16.msra.mxu0 %v3915
        %4032 = vmatpush.bf16.msra.mxu0 %v3911
        %4033 = vmatpush.bf16.msra.mxu0 %v3907
        %4034 = vmatpush.bf16.msra.mxu0 %v3903
        %4035 = vmatpush.bf16.msra.mxu0 %v3899
        %4036 = vmatpush.bf16.msra.mxu0 %v3895
        %4037 = vmatmul.bf16.gmra.mxu0 %v3083
        %v4038 = vpop.f32.mrf.mxu0
        %v4039 = vadd.f32 %v4026, %v4038
        %v4040 = vpop.f32.mrf.mxu0
        %4041 = vdwg.mxu0
        %4042 = vmatpush.bf16.msra.mxu0 %v3892
        %4043 = vmatpush.bf16.msra.mxu0 %v3888
        %4044 = vmatpush.bf16.msra.mxu0 %v3884
        %4045 = vmatpush.bf16.msra.mxu0 %v3880
        %4046 = vmatpush.bf16.msra.mxu0 %v3876
        %4047 = vmatpush.bf16.msra.mxu0 %v3872
        %4048 = vmatpush.bf16.msra.mxu0 %v3868
        %4049 = vmatpush.bf16.msra.mxu0 %v3864
        %4050 = vmatmul.bf16.gmra.mxu0 %v3082
        %v4051 = vpop.f32.mrf.mxu0
        %v4052 = vadd.f32 %v3641, %v4051
        %v4053 = vpop.f32.mrf.mxu0
        %4054 = vdwg.mxu0
        %4055 = vmatpush.bf16.msra.mxu0 %v3924
        %4056 = vmatpush.bf16.msra.mxu0 %v3920
        %4057 = vmatpush.bf16.msra.mxu0 %v3916
        %4058 = vmatpush.bf16.msra.mxu0 %v3912
        %4059 = vmatpush.bf16.msra.mxu0 %v3908
        %4060 = vmatpush.bf16.msra.mxu0 %v3904
        %4061 = vmatpush.bf16.msra.mxu0 %v3900
        %4062 = vmatpush.bf16.msra.mxu0 %v3896
        %4063 = vmatmul.bf16.gmra.mxu0 %v3083
        %v4064 = vpop.f32.mrf.mxu0
        %v4065 = vadd.f32 %v4052, %v4064
        %v4066 = vpop.f32.mrf.mxu0
        %4067 = vdwg.mxu0
        %4068 = vmatpush.bf16.msra.mxu0 %v3893
        %4069 = vmatpush.bf16.msra.mxu0 %v3889
        %4070 = vmatpush.bf16.msra.mxu0 %v3885
        %4071 = vmatpush.bf16.msra.mxu0 %v3881
        %4072 = vmatpush.bf16.msra.mxu0 %v3877
        %4073 = vmatpush.bf16.msra.mxu0 %v3873
        %4074 = vmatpush.bf16.msra.mxu0 %v3869
        %4075 = vmatpush.bf16.msra.mxu0 %v3865
        %4076 = vmatmul.bf16.gmra.mxu0 %v3082
        %v4077 = vpop.f32.mrf.mxu0
        %v4078 = vadd.f32 %v3667, %v4077
        %v4079 = vpop.f32.mrf.mxu0
        %4080 = vdwg.mxu0
        %4081 = vmatpush.bf16.msra.mxu0 %v3925
        %4082 = vmatpush.bf16.msra.mxu0 %v3921
        %4083 = vmatpush.bf16.msra.mxu0 %v3917
        %4084 = vmatpush.bf16.msra.mxu0 %v3913
        %4085 = vmatpush.bf16.msra.mxu0 %v3909
        %4086 = vmatpush.bf16.msra.mxu0 %v3905
        %4087 = vmatpush.bf16.msra.mxu0 %v3901
        %4088 = vmatpush.bf16.msra.mxu0 %v3897
        %4089 = vmatmul.bf16.gmra.mxu0 %v3083
        %v4090 = vpop.f32.mrf.mxu0
        %v4091 = vadd.f32 %v4078, %v4090
        %v4092 = vpop.f32.mrf.mxu0
        %4093 = vdwg.mxu0
        %s4094 = scalar_lea.vmem %s4, 8
        %v4095 = vld [vmem:[%s4094] sm:$0xf]
        %v4097 = vsel %vm3052, %v4095, 0
        %4099 = vmatpush.bf16.msra.mxu0 0
        %4100 = vmatpush.bf16.msra.mxu0 0
        %4101 = vmatpush.bf16.msra.mxu0 0
        %4102 = vmatpush.bf16.msra.mxu0 0
        %4103 = vmatpush.bf16.msra.mxu0 0
        %4104 = vmatpush.bf16.msra.mxu0 0
        %4105 = vmatpush.bf16.msra.mxu0 0
        %4106 = vmatpush.bf16.msra.mxu0 %v3049
        %4107 = vmatmul.bf16.gmra.mxu0 %v4097
        %v4108 = vpop.f32.mrf.mxu0
        %v4109 = vadd.f32 0.0, %v4108
        %v4110 = vpop.f32.mrf.mxu0
        %4111 = vdwg.mxu0
        %4112 = vmatpush.bf16.msra.mxu0 0
        %4113 = vmatpush.bf16.msra.mxu0 0
        %4114 = vmatpush.bf16.msra.mxu0 0
        %4115 = vmatpush.bf16.msra.mxu0 0
        %4116 = vmatpush.bf16.msra.mxu0 0
        %4117 = vmatpush.bf16.msra.mxu0 0
        %4118 = vmatpush.bf16.msra.mxu0 0
        %4119 = vmatpush.bf16.msra.mxu0 %v3050
        %4120 = vmatmul.bf16.gmra.mxu0 %v4097
        %v4121 = vpop.f32.mrf.mxu0
        %v4122 = vadd.f32 0.0, %v4121
        %v4123 = vpop.f32.mrf.mxu0
        %4124 = vdwg.mxu0
        %v4125 = vpack.c.bf16 %v4109, %v4109
        %v4126 = vpack.c.bf16 %v4122, %v4122
        %s4127 = scalar_lea.vmem %s5, 1024
        %v4128 = vld [vmem:[%s4127] sm:$0xff]
        %v4129 = vld [vmem:[%s4127 + $0x8] sm:$0xff]
        %v4130 = vld [vmem:[%s4127 + $0x10] sm:$0xff]
        %v4131 = vld [vmem:[%s4127 + $0x18] sm:$0xff]
        %v4132 = vld [vmem:[%s4127 + $0x20] sm:$0xff]
        %v4133 = vld [vmem:[%s4127 + $0x28] sm:$0xff]
        %v4134 = vld [vmem:[%s4127 + $0x30] sm:$0xff]
        %v4135 = vld [vmem:[%s4127 + $0x38] sm:$0xff]
        %v4136 = vld [vmem:[%s4127 + $0x40] sm:$0xff]
        %v4137 = vld [vmem:[%s4127 + $0x48] sm:$0xff]
        %v4138 = vld [vmem:[%s4127 + $0x50] sm:$0xff]
        %v4139 = vld [vmem:[%s4127 + $0x58] sm:$0xff]
        %v4140 = vld [vmem:[%s4127 + $0x60] sm:$0xff]
        %v4141 = vld [vmem:[%s4127 + $0x68] sm:$0xff]
        %v4142 = vld [vmem:[%s4127 + $0x70] sm:$0xff]
        %v4143 = vld [vmem:[%s4127 + $0x78] sm:$0xff]
        %v4144 = vld [vmem:[%s4127 + $0x80] sm:$0xff]
        %v4145 = vld [vmem:[%s4127 + $0x88] sm:$0xff]
        %v4146 = vld [vmem:[%s4127 + $0x90] sm:$0xff]
        %v4147 = vld [vmem:[%s4127 + $0x98] sm:$0xff]
        %v4148 = vld [vmem:[%s4127 + $0xa0] sm:$0xff]
        %v4149 = vld [vmem:[%s4127 + $0xa8] sm:$0xff]
        %v4150 = vld [vmem:[%s4127 + $0xb0] sm:$0xff]
        %v4151 = vld [vmem:[%s4127 + $0xb8] sm:$0xff]
        %v4152 = vld [vmem:[%s4127 + $0xc0] sm:$0xff]
        %v4153 = vld [vmem:[%s4127 + $0xc8] sm:$0xff]
        %v4154 = vld [vmem:[%s4127 + $0xd0] sm:$0xff]
        %v4155 = vld [vmem:[%s4127 + $0xd8] sm:$0xff]
        %v4156 = vld [vmem:[%s4127 + $0xe0] sm:$0xff]
        %v4157 = vld [vmem:[%s4127 + $0xe8] sm:$0xff]
        %v4158 = vld [vmem:[%s4127 + $0xf0] sm:$0xff]
        %v4159 = vld [vmem:[%s4127 + $0xf8] sm:$0xff]
        %v4160 = vld [vmem:[%s4127 + $0x100] sm:$0xff]
        %v4161 = vld [vmem:[%s4127 + $0x108] sm:$0xff]
        %v4162 = vld [vmem:[%s4127 + $0x110] sm:$0xff]
        %v4163 = vld [vmem:[%s4127 + $0x118] sm:$0xff]
        %v4164 = vld [vmem:[%s4127 + $0x120] sm:$0xff]
        %v4165 = vld [vmem:[%s4127 + $0x128] sm:$0xff]
        %v4166 = vld [vmem:[%s4127 + $0x130] sm:$0xff]
        %v4167 = vld [vmem:[%s4127 + $0x138] sm:$0xff]
        %v4168 = vld [vmem:[%s4127 + $0x140] sm:$0xff]
        %v4169 = vld [vmem:[%s4127 + $0x148] sm:$0xff]
        %v4170 = vld [vmem:[%s4127 + $0x150] sm:$0xff]
        %v4171 = vld [vmem:[%s4127 + $0x158] sm:$0xff]
        %v4172 = vld [vmem:[%s4127 + $0x160] sm:$0xff]
        %v4173 = vld [vmem:[%s4127 + $0x168] sm:$0xff]
        %v4174 = vld [vmem:[%s4127 + $0x170] sm:$0xff]
        %v4175 = vld [vmem:[%s4127 + $0x178] sm:$0xff]
        %v4176 = vld [vmem:[%s4127 + $0x180] sm:$0xff]
        %v4177 = vld [vmem:[%s4127 + $0x188] sm:$0xff]
        %v4178 = vld [vmem:[%s4127 + $0x190] sm:$0xff]
        %v4179 = vld [vmem:[%s4127 + $0x198] sm:$0xff]
        %v4180 = vld [vmem:[%s4127 + $0x1a0] sm:$0xff]
        %v4181 = vld [vmem:[%s4127 + $0x1a8] sm:$0xff]
        %v4182 = vld [vmem:[%s4127 + $0x1b0] sm:$0xff]
        %v4183 = vld [vmem:[%s4127 + $0x1b8] sm:$0xff]
        %v4184 = vld [vmem:[%s4127 + $0x1c0] sm:$0xff]
        %v4185 = vld [vmem:[%s4127 + $0x1c8] sm:$0xff]
        %v4186 = vld [vmem:[%s4127 + $0x1d0] sm:$0xff]
        %v4187 = vld [vmem:[%s4127 + $0x1d8] sm:$0xff]
        %v4188 = vld [vmem:[%s4127 + $0x1e0] sm:$0xff]
        %v4189 = vld [vmem:[%s4127 + $0x1e8] sm:$0xff]
        %v4190 = vld [vmem:[%s4127 + $0x1f0] sm:$0xff]
        %v4191 = vld [vmem:[%s4127 + $0x1f8] sm:$0xff]
        %v4256 = vunpack.c.l.b16 %v4128
        %v4257 = vunpack.c.h.b16 %v4128
        %v4258 = vunpack.c.l.b16 %v4129
        %v4259 = vunpack.c.h.b16 %v4129
        %v4260 = vunpack.c.l.b16 %v4130
        %v4261 = vunpack.c.h.b16 %v4130
        %v4262 = vunpack.c.l.b16 %v4131
        %v4263 = vunpack.c.h.b16 %v4131
        %v4264 = vunpack.c.l.b16 %v4132
        %v4265 = vunpack.c.h.b16 %v4132
        %v4266 = vunpack.c.l.b16 %v4133
        %v4267 = vunpack.c.h.b16 %v4133
        %v4268 = vunpack.c.l.b16 %v4134
        %v4269 = vunpack.c.h.b16 %v4134
        %v4270 = vunpack.c.l.b16 %v4135
        %v4271 = vunpack.c.h.b16 %v4135
        %v4272 = vunpack.c.l.b16 %v4136
        %v4273 = vunpack.c.h.b16 %v4136
        %v4274 = vunpack.c.l.b16 %v4137
        %v4275 = vunpack.c.h.b16 %v4137
        %v4276 = vunpack.c.l.b16 %v4138
        %v4277 = vunpack.c.h.b16 %v4138
        %v4278 = vunpack.c.l.b16 %v4139
        %v4279 = vunpack.c.h.b16 %v4139
        %v4280 = vunpack.c.l.b16 %v4140
        %v4281 = vunpack.c.h.b16 %v4140
        %v4282 = vunpack.c.l.b16 %v4141
        %v4283 = vunpack.c.h.b16 %v4141
        %v4284 = vunpack.c.l.b16 %v4142
        %v4285 = vunpack.c.h.b16 %v4142
        %v4286 = vunpack.c.l.b16 %v4143
        %v4287 = vunpack.c.h.b16 %v4143
        %v4288 = vunpack.c.l.b16 %v4144
        %v4289 = vunpack.c.h.b16 %v4144
        %v4290 = vunpack.c.l.b16 %v4145
        %v4291 = vunpack.c.h.b16 %v4145
        %v4292 = vunpack.c.l.b16 %v4146
        %v4293 = vunpack.c.h.b16 %v4146
        %v4294 = vunpack.c.l.b16 %v4147
        %v4295 = vunpack.c.h.b16 %v4147
        %v4296 = vunpack.c.l.b16 %v4148
        %v4297 = vunpack.c.h.b16 %v4148
        %v4298 = vunpack.c.l.b16 %v4149
        %v4299 = vunpack.c.h.b16 %v4149
        %v4300 = vunpack.c.l.b16 %v4150
        %v4301 = vunpack.c.h.b16 %v4150
        %v4302 = vunpack.c.l.b16 %v4151
        %v4303 = vunpack.c.h.b16 %v4151
        %v4304 = vunpack.c.l.b16 %v4152
        %v4305 = vunpack.c.h.b16 %v4152
        %v4306 = vunpack.c.l.b16 %v4153
        %v4307 = vunpack.c.h.b16 %v4153
        %v4308 = vunpack.c.l.b16 %v4154
        %v4309 = vunpack.c.h.b16 %v4154
        %v4310 = vunpack.c.l.b16 %v4155
        %v4311 = vunpack.c.h.b16 %v4155
        %v4312 = vunpack.c.l.b16 %v4156
        %v4313 = vunpack.c.h.b16 %v4156
        %v4314 = vunpack.c.l.b16 %v4157
        %v4315 = vunpack.c.h.b16 %v4157
        %v4316 = vunpack.c.l.b16 %v4158
        %v4317 = vunpack.c.h.b16 %v4158
        %v4318 = vunpack.c.l.b16 %v4159
        %v4319 = vunpack.c.h.b16 %v4159
        %v4320 = vunpack.c.l.b16 %v4160
        %v4321 = vunpack.c.h.b16 %v4160
        %v4322 = vunpack.c.l.b16 %v4161
        %v4323 = vunpack.c.h.b16 %v4161
        %v4324 = vunpack.c.l.b16 %v4162
        %v4325 = vunpack.c.h.b16 %v4162
        %v4326 = vunpack.c.l.b16 %v4163
        %v4327 = vunpack.c.h.b16 %v4163
        %v4328 = vunpack.c.l.b16 %v4164
        %v4329 = vunpack.c.h.b16 %v4164
        %v4330 = vunpack.c.l.b16 %v4165
        %v4331 = vunpack.c.h.b16 %v4165
        %v4332 = vunpack.c.l.b16 %v4166
        %v4333 = vunpack.c.h.b16 %v4166
        %v4334 = vunpack.c.l.b16 %v4167
        %v4335 = vunpack.c.h.b16 %v4167
        %v4336 = vunpack.c.l.b16 %v4168
        %v4337 = vunpack.c.h.b16 %v4168
        %v4338 = vunpack.c.l.b16 %v4169
        %v4339 = vunpack.c.h.b16 %v4169
        %v4340 = vunpack.c.l.b16 %v4170
        %v4341 = vunpack.c.h.b16 %v4170
        %v4342 = vunpack.c.l.b16 %v4171
        %v4343 = vunpack.c.h.b16 %v4171
        %v4344 = vunpack.c.l.b16 %v4172
        %v4345 = vunpack.c.h.b16 %v4172
        %v4346 = vunpack.c.l.b16 %v4173
        %v4347 = vunpack.c.h.b16 %v4173
        %v4348 = vunpack.c.l.b16 %v4174
        %v4349 = vunpack.c.h.b16 %v4174
        %v4350 = vunpack.c.l.b16 %v4175
        %v4351 = vunpack.c.h.b16 %v4175
        %v4352 = vunpack.c.l.b16 %v4176
        %v4353 = vunpack.c.h.b16 %v4176
        %v4354 = vunpack.c.l.b16 %v4177
        %v4355 = vunpack.c.h.b16 %v4177
        %v4356 = vunpack.c.l.b16 %v4178
        %v4357 = vunpack.c.h.b16 %v4178
        %v4358 = vunpack.c.l.b16 %v4179
        %v4359 = vunpack.c.h.b16 %v4179
        %v4360 = vunpack.c.l.b16 %v4180
        %v4361 = vunpack.c.h.b16 %v4180
        %v4362 = vunpack.c.l.b16 %v4181
        %v4363 = vunpack.c.h.b16 %v4181
        %v4364 = vunpack.c.l.b16 %v4182
        %v4365 = vunpack.c.h.b16 %v4182
        %v4366 = vunpack.c.l.b16 %v4183
        %v4367 = vunpack.c.h.b16 %v4183
        %v4368 = vunpack.c.l.b16 %v4184
        %v4369 = vunpack.c.h.b16 %v4184
        %v4370 = vunpack.c.l.b16 %v4185
        %v4371 = vunpack.c.h.b16 %v4185
        %v4372 = vunpack.c.l.b16 %v4186
        %v4373 = vunpack.c.h.b16 %v4186
        %v4374 = vunpack.c.l.b16 %v4187
        %v4375 = vunpack.c.h.b16 %v4187
        %v4376 = vunpack.c.l.b16 %v4188
        %v4377 = vunpack.c.h.b16 %v4188
        %v4378 = vunpack.c.l.b16 %v4189
        %v4379 = vunpack.c.h.b16 %v4189
        %v4380 = vunpack.c.l.b16 %v4190
        %v4381 = vunpack.c.h.b16 %v4190
        %v4382 = vunpack.c.l.b16 %v4191
        %v4383 = vunpack.c.h.b16 %v4191
        %v4384 = vpack.c.b16 %v4260, %v4256
        %v4385 = vpack.c.b16 %v4261, %v4257
        %v4386 = vpack.c.b16 %v4262, %v4258
        %v4387 = vpack.c.b16 %v4263, %v4259
        %v4388 = vpack.c.b16 %v4268, %v4264
        %v4389 = vpack.c.b16 %v4269, %v4265
        %v4390 = vpack.c.b16 %v4270, %v4266
        %v4391 = vpack.c.b16 %v4271, %v4267
        %v4392 = vpack.c.b16 %v4276, %v4272
        %v4393 = vpack.c.b16 %v4277, %v4273
        %v4394 = vpack.c.b16 %v4278, %v4274
        %v4395 = vpack.c.b16 %v4279, %v4275
        %v4396 = vpack.c.b16 %v4284, %v4280
        %v4397 = vpack.c.b16 %v4285, %v4281
        %v4398 = vpack.c.b16 %v4286, %v4282
        %v4399 = vpack.c.b16 %v4287, %v4283
        %v4400 = vpack.c.b16 %v4292, %v4288
        %v4401 = vpack.c.b16 %v4293, %v4289
        %v4402 = vpack.c.b16 %v4294, %v4290
        %v4403 = vpack.c.b16 %v4295, %v4291
        %v4404 = vpack.c.b16 %v4300, %v4296
        %v4405 = vpack.c.b16 %v4301, %v4297
        %v4406 = vpack.c.b16 %v4302, %v4298
        %v4407 = vpack.c.b16 %v4303, %v4299
        %v4408 = vpack.c.b16 %v4308, %v4304
        %v4409 = vpack.c.b16 %v4309, %v4305
        %v4410 = vpack.c.b16 %v4310, %v4306
        %v4411 = vpack.c.b16 %v4311, %v4307
        %v4412 = vpack.c.b16 %v4316, %v4312
        %v4413 = vpack.c.b16 %v4317, %v4313
        %v4414 = vpack.c.b16 %v4318, %v4314
        %v4415 = vpack.c.b16 %v4319, %v4315
        %v4416 = vpack.c.b16 %v4324, %v4320
        %v4417 = vpack.c.b16 %v4325, %v4321
        %v4418 = vpack.c.b16 %v4326, %v4322
        %v4419 = vpack.c.b16 %v4327, %v4323
        %v4420 = vpack.c.b16 %v4332, %v4328
        %v4421 = vpack.c.b16 %v4333, %v4329
        %v4422 = vpack.c.b16 %v4334, %v4330
        %v4423 = vpack.c.b16 %v4335, %v4331
        %v4424 = vpack.c.b16 %v4340, %v4336
        %v4425 = vpack.c.b16 %v4341, %v4337
        %v4426 = vpack.c.b16 %v4342, %v4338
        %v4427 = vpack.c.b16 %v4343, %v4339
        %v4428 = vpack.c.b16 %v4348, %v4344
        %v4429 = vpack.c.b16 %v4349, %v4345
        %v4430 = vpack.c.b16 %v4350, %v4346
        %v4431 = vpack.c.b16 %v4351, %v4347
        %v4432 = vpack.c.b16 %v4356, %v4352
        %v4433 = vpack.c.b16 %v4357, %v4353
        %v4434 = vpack.c.b16 %v4358, %v4354
        %v4435 = vpack.c.b16 %v4359, %v4355
        %v4436 = vpack.c.b16 %v4364, %v4360
        %v4437 = vpack.c.b16 %v4365, %v4361
        %v4438 = vpack.c.b16 %v4366, %v4362
        %v4439 = vpack.c.b16 %v4367, %v4363
        %v4440 = vpack.c.b16 %v4372, %v4368
        %v4441 = vpack.c.b16 %v4373, %v4369
        %v4442 = vpack.c.b16 %v4374, %v4370
        %v4443 = vpack.c.b16 %v4375, %v4371
        %v4444 = vpack.c.b16 %v4380, %v4376
        %v4445 = vpack.c.b16 %v4381, %v4377
        %v4446 = vpack.c.b16 %v4382, %v4378
        %v4447 = vpack.c.b16 %v4383, %v4379
        %4512 = vmatpush.bf16.msra.mxu0 %v4412
        %4513 = vmatpush.bf16.msra.mxu0 %v4408
        %4514 = vmatpush.bf16.msra.mxu0 %v4404
        %4515 = vmatpush.bf16.msra.mxu0 %v4400
        %4516 = vmatpush.bf16.msra.mxu0 %v4396
        %4517 = vmatpush.bf16.msra.mxu0 %v4392
        %4518 = vmatpush.bf16.msra.mxu0 %v4388
        %4519 = vmatpush.bf16.msra.mxu0 %v4384
        %4520 = vmatmul.bf16.gmra.mxu0 %v4125
        %v4521 = vpop.f32.mrf.mxu0
        %v4522 = vadd.f32 0.0, %v4521
        %v4523 = vpop.f32.mrf.mxu0
        %4524 = vdwg.mxu0
        %4525 = vmatpush.bf16.msra.mxu0 %v4444
        %4526 = vmatpush.bf16.msra.mxu0 %v4440
        %4527 = vmatpush.bf16.msra.mxu0 %v4436
        %4528 = vmatpush.bf16.msra.mxu0 %v4432
        %4529 = vmatpush.bf16.msra.mxu0 %v4428
        %4530 = vmatpush.bf16.msra.mxu0 %v4424
        %4531 = vmatpush.bf16.msra.mxu0 %v4420
        %4532 = vmatpush.bf16.msra.mxu0 %v4416
        %4533 = vmatmul.bf16.gmra.mxu0 %v4126
        %v4534 = vpop.f32.mrf.mxu0
        %v4535 = vadd.f32 %v4522, %v4534
        %v4536 = vpop.f32.mrf.mxu0
        %4537 = vdwg.mxu0
        %4538 = vmatpush.bf16.msra.mxu0 %v4413
        %4539 = vmatpush.bf16.msra.mxu0 %v4409
        %4540 = vmatpush.bf16.msra.mxu0 %v4405
        %4541 = vmatpush.bf16.msra.mxu0 %v4401
        %4542 = vmatpush.bf16.msra.mxu0 %v4397
        %4543 = vmatpush.bf16.msra.mxu0 %v4393
        %4544 = vmatpush.bf16.msra.mxu0 %v4389
        %4545 = vmatpush.bf16.msra.mxu0 %v4385
        %4546 = vmatmul.bf16.gmra.mxu0 %v4125
        %v4547 = vpop.f32.mrf.mxu0
        %v4548 = vadd.f32 0.0, %v4547
        %v4549 = vpop.f32.mrf.mxu0
        %4550 = vdwg.mxu0
        %4551 = vmatpush.bf16.msra.mxu0 %v4445
        %4552 = vmatpush.bf16.msra.mxu0 %v4441
        %4553 = vmatpush.bf16.msra.mxu0 %v4437
        %4554 = vmatpush.bf16.msra.mxu0 %v4433
        %4555 = vmatpush.bf16.msra.mxu0 %v4429
        %4556 = vmatpush.bf16.msra.mxu0 %v4425
        %4557 = vmatpush.bf16.msra.mxu0 %v4421
        %4558 = vmatpush.bf16.msra.mxu0 %v4417
        %4559 = vmatmul.bf16.gmra.mxu0 %v4126
        %v4560 = vpop.f32.mrf.mxu0
        %v4561 = vadd.f32 %v4548, %v4560
        %v4562 = vpop.f32.mrf.mxu0
        %4563 = vdwg.mxu0
        %4564 = vmatpush.bf16.msra.mxu0 %v4414
        %4565 = vmatpush.bf16.msra.mxu0 %v4410
        %4566 = vmatpush.bf16.msra.mxu0 %v4406
        %4567 = vmatpush.bf16.msra.mxu0 %v4402
        %4568 = vmatpush.bf16.msra.mxu0 %v4398
        %4569 = vmatpush.bf16.msra.mxu0 %v4394
        %4570 = vmatpush.bf16.msra.mxu0 %v4390
        %4571 = vmatpush.bf16.msra.mxu0 %v4386
        %4572 = vmatmul.bf16.gmra.mxu0 %v4125
        %v4573 = vpop.f32.mrf.mxu0
        %v4574 = vadd.f32 0.0, %v4573
        %v4575 = vpop.f32.mrf.mxu0
        %4576 = vdwg.mxu0
        %4577 = vmatpush.bf16.msra.mxu0 %v4446
        %4578 = vmatpush.bf16.msra.mxu0 %v4442
        %4579 = vmatpush.bf16.msra.mxu0 %v4438
        %4580 = vmatpush.bf16.msra.mxu0 %v4434
        %4581 = vmatpush.bf16.msra.mxu0 %v4430
        %4582 = vmatpush.bf16.msra.mxu0 %v4426
        %4583 = vmatpush.bf16.msra.mxu0 %v4422
        %4584 = vmatpush.bf16.msra.mxu0 %v4418
        %4585 = vmatmul.bf16.gmra.mxu0 %v4126
        %v4586 = vpop.f32.mrf.mxu0
        %v4587 = vadd.f32 %v4574, %v4586
        %v4588 = vpop.f32.mrf.mxu0
        %4589 = vdwg.mxu0
        %4590 = vmatpush.bf16.msra.mxu0 %v4415
        %4591 = vmatpush.bf16.msra.mxu0 %v4411
        %4592 = vmatpush.bf16.msra.mxu0 %v4407
        %4593 = vmatpush.bf16.msra.mxu0 %v4403
        %4594 = vmatpush.bf16.msra.mxu0 %v4399
        %4595 = vmatpush.bf16.msra.mxu0 %v4395
        %4596 = vmatpush.bf16.msra.mxu0 %v4391
        %4597 = vmatpush.bf16.msra.mxu0 %v4387
        %4598 = vmatmul.bf16.gmra.mxu0 %v4125
        %v4599 = vpop.f32.mrf.mxu0
        %v4600 = vadd.f32 0.0, %v4599
        %v4601 = vpop.f32.mrf.mxu0
        %4602 = vdwg.mxu0
        %4603 = vmatpush.bf16.msra.mxu0 %v4447
        %4604 = vmatpush.bf16.msra.mxu0 %v4443
        %4605 = vmatpush.bf16.msra.mxu0 %v4439
        %4606 = vmatpush.bf16.msra.mxu0 %v4435
        %4607 = vmatpush.bf16.msra.mxu0 %v4431
        %4608 = vmatpush.bf16.msra.mxu0 %v4427
        %4609 = vmatpush.bf16.msra.mxu0 %v4423
        %4610 = vmatpush.bf16.msra.mxu0 %v4419
        %4611 = vmatmul.bf16.gmra.mxu0 %v4126
        %v4612 = vpop.f32.mrf.mxu0
        %v4613 = vadd.f32 %v4600, %v4612
        %v4614 = vpop.f32.mrf.mxu0
        %4615 = vdwg.mxu0
        %v4616 = vadd.f32 %v4013, %v4535
        %v4617 = vadd.f32 %v4039, %v4561
        %v4618 = vadd.f32 %v4065, %v4587
        %v4619 = vadd.f32 %v4091, %v4613
        %s4620 = scalar_lea.vmem %s4, 12
        %v4621 = vld [vmem:[%s4620] sm:$0xf]
        %v4623 = vsel %vm3052, %v4621, 0
        %4625 = vmatpush.bf16.msra.mxu0 0
        %4626 = vmatpush.bf16.msra.mxu0 0
        %4627 = vmatpush.bf16.msra.mxu0 0
        %4628 = vmatpush.bf16.msra.mxu0 0
        %4629 = vmatpush.bf16.msra.mxu0 0
        %4630 = vmatpush.bf16.msra.mxu0 0
        %4631 = vmatpush.bf16.msra.mxu0 0
        %4632 = vmatpush.bf16.msra.mxu0 %v3049
        %4633 = vmatmul.bf16.gmra.mxu0 %v4623
        %v4634 = vpop.f32.mrf.mxu0
        %v4635 = vadd.f32 0.0, %v4634
        %v4636 = vpop.f32.mrf.mxu0
        %4637 = vdwg.mxu0
        %4638 = vmatpush.bf16.msra.mxu0 0
        %4639 = vmatpush.bf16.msra.mxu0 0
        %4640 = vmatpush.bf16.msra.mxu0 0
        %4641 = vmatpush.bf16.msra.mxu0 0
        %4642 = vmatpush.bf16.msra.mxu0 0
        %4643 = vmatpush.bf16.msra.mxu0 0
        %4644 = vmatpush.bf16.msra.mxu0 0
        %4645 = vmatpush.bf16.msra.mxu0 %v3050
        %4646 = vmatmul.bf16.gmra.mxu0 %v4623
        %v4647 = vpop.f32.mrf.mxu0
        %v4648 = vadd.f32 0.0, %v4647
        %v4649 = vpop.f32.mrf.mxu0
        %4650 = vdwg.mxu0
        %v4651 = vpack.c.bf16 %v4635, %v4635
        %v4652 = vpack.c.bf16 %v4648, %v4648
        %s4653 = scalar_lea.vmem %s5, 1536
        %v4654 = vld [vmem:[%s4653] sm:$0xff]
        %v4655 = vld [vmem:[%s4653 + $0x8] sm:$0xff]
        %v4656 = vld [vmem:[%s4653 + $0x10] sm:$0xff]
        %v4657 = vld [vmem:[%s4653 + $0x18] sm:$0xff]
        %v4658 = vld [vmem:[%s4653 + $0x20] sm:$0xff]
        %v4659 = vld [vmem:[%s4653 + $0x28] sm:$0xff]
        %v4660 = vld [vmem:[%s4653 + $0x30] sm:$0xff]
        %v4661 = vld [vmem:[%s4653 + $0x38] sm:$0xff]
        %v4662 = vld [vmem:[%s4653 + $0x40] sm:$0xff]
        %v4663 = vld [vmem:[%s4653 + $0x48] sm:$0xff]
        %v4664 = vld [vmem:[%s4653 + $0x50] sm:$0xff]
        %v4665 = vld [vmem:[%s4653 + $0x58] sm:$0xff]
        %v4666 = vld [vmem:[%s4653 + $0x60] sm:$0xff]
        %v4667 = vld [vmem:[%s4653 + $0x68] sm:$0xff]
        %v4668 = vld [vmem:[%s4653 + $0x70] sm:$0xff]
        %v4669 = vld [vmem:[%s4653 + $0x78] sm:$0xff]
        %v4670 = vld [vmem:[%s4653 + $0x80] sm:$0xff]
        %v4671 = vld [vmem:[%s4653 + $0x88] sm:$0xff]
        %v4672 = vld [vmem:[%s4653 + $0x90] sm:$0xff]
        %v4673 = vld [vmem:[%s4653 + $0x98] sm:$0xff]
        %v4674 = vld [vmem:[%s4653 + $0xa0] sm:$0xff]
        %v4675 = vld [vmem:[%s4653 + $0xa8] sm:$0xff]
        %v4676 = vld [vmem:[%s4653 + $0xb0] sm:$0xff]
        %v4677 = vld [vmem:[%s4653 + $0xb8] sm:$0xff]
        %v4678 = vld [vmem:[%s4653 + $0xc0] sm:$0xff]
        %v4679 = vld [vmem:[%s4653 + $0xc8] sm:$0xff]
        %v4680 = vld [vmem:[%s4653 + $0xd0] sm:$0xff]
        %v4681 = vld [vmem:[%s4653 + $0xd8] sm:$0xff]
        %v4682 = vld [vmem:[%s4653 + $0xe0] sm:$0xff]
        %v4683 = vld [vmem:[%s4653 + $0xe8] sm:$0xff]
        %v4684 = vld [vmem:[%s4653 + $0xf0] sm:$0xff]
        %v4685 = vld [vmem:[%s4653 + $0xf8] sm:$0xff]
        %v4686 = vld [vmem:[%s4653 + $0x100] sm:$0xff]
        %v4687 = vld [vmem:[%s4653 + $0x108] sm:$0xff]
        %v4688 = vld [vmem:[%s4653 + $0x110] sm:$0xff]
        %v4689 = vld [vmem:[%s4653 + $0x118] sm:$0xff]
        %v4690 = vld [vmem:[%s4653 + $0x120] sm:$0xff]
        %v4691 = vld [vmem:[%s4653 + $0x128] sm:$0xff]
        %v4692 = vld [vmem:[%s4653 + $0x130] sm:$0xff]
        %v4693 = vld [vmem:[%s4653 + $0x138] sm:$0xff]
        %v4694 = vld [vmem:[%s4653 + $0x140] sm:$0xff]
        %v4695 = vld [vmem:[%s4653 + $0x148] sm:$0xff]
        %v4696 = vld [vmem:[%s4653 + $0x150] sm:$0xff]
        %v4697 = vld [vmem:[%s4653 + $0x158] sm:$0xff]
        %v4698 = vld [vmem:[%s4653 + $0x160] sm:$0xff]
        %v4699 = vld [vmem:[%s4653 + $0x168] sm:$0xff]
        %v4700 = vld [vmem:[%s4653 + $0x170] sm:$0xff]
        %v4701 = vld [vmem:[%s4653 + $0x178] sm:$0xff]
        %v4702 = vld [vmem:[%s4653 + $0x180] sm:$0xff]
        %v4703 = vld [vmem:[%s4653 + $0x188] sm:$0xff]
        %v4704 = vld [vmem:[%s4653 + $0x190] sm:$0xff]
        %v4705 = vld [vmem:[%s4653 + $0x198] sm:$0xff]
        %v4706 = vld [vmem:[%s4653 + $0x1a0] sm:$0xff]
        %v4707 = vld [vmem:[%s4653 + $0x1a8] sm:$0xff]
        %v4708 = vld [vmem:[%s4653 + $0x1b0] sm:$0xff]
        %v4709 = vld [vmem:[%s4653 + $0x1b8] sm:$0xff]
        %v4710 = vld [vmem:[%s4653 + $0x1c0] sm:$0xff]
        %v4711 = vld [vmem:[%s4653 + $0x1c8] sm:$0xff]
        %v4712 = vld [vmem:[%s4653 + $0x1d0] sm:$0xff]
        %v4713 = vld [vmem:[%s4653 + $0x1d8] sm:$0xff]
        %v4714 = vld [vmem:[%s4653 + $0x1e0] sm:$0xff]
        %v4715 = vld [vmem:[%s4653 + $0x1e8] sm:$0xff]
        %v4716 = vld [vmem:[%s4653 + $0x1f0] sm:$0xff]
        %v4717 = vld [vmem:[%s4653 + $0x1f8] sm:$0xff]
        %v4782 = vunpack.c.l.b16 %v4654
        %v4783 = vunpack.c.h.b16 %v4654
        %v4784 = vunpack.c.l.b16 %v4655
        %v4785 = vunpack.c.h.b16 %v4655
        %v4786 = vunpack.c.l.b16 %v4656
        %v4787 = vunpack.c.h.b16 %v4656
        %v4788 = vunpack.c.l.b16 %v4657
        %v4789 = vunpack.c.h.b16 %v4657
        %v4790 = vunpack.c.l.b16 %v4658
        %v4791 = vunpack.c.h.b16 %v4658
        %v4792 = vunpack.c.l.b16 %v4659
        %v4793 = vunpack.c.h.b16 %v4659
        %v4794 = vunpack.c.l.b16 %v4660
        %v4795 = vunpack.c.h.b16 %v4660
        %v4796 = vunpack.c.l.b16 %v4661
        %v4797 = vunpack.c.h.b16 %v4661
        %v4798 = vunpack.c.l.b16 %v4662
        %v4799 = vunpack.c.h.b16 %v4662
        %v4800 = vunpack.c.l.b16 %v4663
        %v4801 = vunpack.c.h.b16 %v4663
        %v4802 = vunpack.c.l.b16 %v4664
        %v4803 = vunpack.c.h.b16 %v4664
        %v4804 = vunpack.c.l.b16 %v4665
        %v4805 = vunpack.c.h.b16 %v4665
        %v4806 = vunpack.c.l.b16 %v4666
        %v4807 = vunpack.c.h.b16 %v4666
        %v4808 = vunpack.c.l.b16 %v4667
        %v4809 = vunpack.c.h.b16 %v4667
        %v4810 = vunpack.c.l.b16 %v4668
        %v4811 = vunpack.c.h.b16 %v4668
        %v4812 = vunpack.c.l.b16 %v4669
        %v4813 = vunpack.c.h.b16 %v4669
        %v4814 = vunpack.c.l.b16 %v4670
        %v4815 = vunpack.c.h.b16 %v4670
        %v4816 = vunpack.c.l.b16 %v4671
        %v4817 = vunpack.c.h.b16 %v4671
        %v4818 = vunpack.c.l.b16 %v4672
        %v4819 = vunpack.c.h.b16 %v4672
        %v4820 = vunpack.c.l.b16 %v4673
        %v4821 = vunpack.c.h.b16 %v4673
        %v4822 = vunpack.c.l.b16 %v4674
        %v4823 = vunpack.c.h.b16 %v4674
        %v4824 = vunpack.c.l.b16 %v4675
        %v4825 = vunpack.c.h.b16 %v4675
        %v4826 = vunpack.c.l.b16 %v4676
        %v4827 = vunpack.c.h.b16 %v4676
        %v4828 = vunpack.c.l.b16 %v4677
        %v4829 = vunpack.c.h.b16 %v4677
        %v4830 = vunpack.c.l.b16 %v4678
        %v4831 = vunpack.c.h.b16 %v4678
        %v4832 = vunpack.c.l.b16 %v4679
        %v4833 = vunpack.c.h.b16 %v4679
        %v4834 = vunpack.c.l.b16 %v4680
        %v4835 = vunpack.c.h.b16 %v4680
        %v4836 = vunpack.c.l.b16 %v4681
        %v4837 = vunpack.c.h.b16 %v4681
        %v4838 = vunpack.c.l.b16 %v4682
        %v4839 = vunpack.c.h.b16 %v4682
        %v4840 = vunpack.c.l.b16 %v4683
        %v4841 = vunpack.c.h.b16 %v4683
        %v4842 = vunpack.c.l.b16 %v4684
        %v4843 = vunpack.c.h.b16 %v4684
        %v4844 = vunpack.c.l.b16 %v4685
        %v4845 = vunpack.c.h.b16 %v4685
        %v4846 = vunpack.c.l.b16 %v4686
        %v4847 = vunpack.c.h.b16 %v4686
        %v4848 = vunpack.c.l.b16 %v4687
        %v4849 = vunpack.c.h.b16 %v4687
        %v4850 = vunpack.c.l.b16 %v4688
        %v4851 = vunpack.c.h.b16 %v4688
        %v4852 = vunpack.c.l.b16 %v4689
        %v4853 = vunpack.c.h.b16 %v4689
        %v4854 = vunpack.c.l.b16 %v4690
        %v4855 = vunpack.c.h.b16 %v4690
        %v4856 = vunpack.c.l.b16 %v4691
        %v4857 = vunpack.c.h.b16 %v4691
        %v4858 = vunpack.c.l.b16 %v4692
        %v4859 = vunpack.c.h.b16 %v4692
        %v4860 = vunpack.c.l.b16 %v4693
        %v4861 = vunpack.c.h.b16 %v4693
        %v4862 = vunpack.c.l.b16 %v4694
        %v4863 = vunpack.c.h.b16 %v4694
        %v4864 = vunpack.c.l.b16 %v4695
        %v4865 = vunpack.c.h.b16 %v4695
        %v4866 = vunpack.c.l.b16 %v4696
        %v4867 = vunpack.c.h.b16 %v4696
        %v4868 = vunpack.c.l.b16 %v4697
        %v4869 = vunpack.c.h.b16 %v4697
        %v4870 = vunpack.c.l.b16 %v4698
        %v4871 = vunpack.c.h.b16 %v4698
        %v4872 = vunpack.c.l.b16 %v4699
        %v4873 = vunpack.c.h.b16 %v4699
        %v4874 = vunpack.c.l.b16 %v4700
        %v4875 = vunpack.c.h.b16 %v4700
        %v4876 = vunpack.c.l.b16 %v4701
        %v4877 = vunpack.c.h.b16 %v4701
        %v4878 = vunpack.c.l.b16 %v4702
        %v4879 = vunpack.c.h.b16 %v4702
        %v4880 = vunpack.c.l.b16 %v4703
        %v4881 = vunpack.c.h.b16 %v4703
        %v4882 = vunpack.c.l.b16 %v4704
        %v4883 = vunpack.c.h.b16 %v4704
        %v4884 = vunpack.c.l.b16 %v4705
        %v4885 = vunpack.c.h.b16 %v4705
        %v4886 = vunpack.c.l.b16 %v4706
        %v4887 = vunpack.c.h.b16 %v4706
        %v4888 = vunpack.c.l.b16 %v4707
        %v4889 = vunpack.c.h.b16 %v4707
        %v4890 = vunpack.c.l.b16 %v4708
        %v4891 = vunpack.c.h.b16 %v4708
        %v4892 = vunpack.c.l.b16 %v4709
        %v4893 = vunpack.c.h.b16 %v4709
        %v4894 = vunpack.c.l.b16 %v4710
        %v4895 = vunpack.c.h.b16 %v4710
        %v4896 = vunpack.c.l.b16 %v4711
        %v4897 = vunpack.c.h.b16 %v4711
        %v4898 = vunpack.c.l.b16 %v4712
        %v4899 = vunpack.c.h.b16 %v4712
        %v4900 = vunpack.c.l.b16 %v4713
        %v4901 = vunpack.c.h.b16 %v4713
        %v4902 = vunpack.c.l.b16 %v4714
        %v4903 = vunpack.c.h.b16 %v4714
        %v4904 = vunpack.c.l.b16 %v4715
        %v4905 = vunpack.c.h.b16 %v4715
        %v4906 = vunpack.c.l.b16 %v4716
        %v4907 = vunpack.c.h.b16 %v4716
        %v4908 = vunpack.c.l.b16 %v4717
        %v4909 = vunpack.c.h.b16 %v4717
        %v4910 = vpack.c.b16 %v4786, %v4782
        %v4911 = vpack.c.b16 %v4787, %v4783
        %v4912 = vpack.c.b16 %v4788, %v4784
        %v4913 = vpack.c.b16 %v4789, %v4785
        %v4914 = vpack.c.b16 %v4794, %v4790
        %v4915 = vpack.c.b16 %v4795, %v4791
        %v4916 = vpack.c.b16 %v4796, %v4792
        %v4917 = vpack.c.b16 %v4797, %v4793
        %v4918 = vpack.c.b16 %v4802, %v4798
        %v4919 = vpack.c.b16 %v4803, %v4799
        %v4920 = vpack.c.b16 %v4804, %v4800
        %v4921 = vpack.c.b16 %v4805, %v4801
        %v4922 = vpack.c.b16 %v4810, %v4806
        %v4923 = vpack.c.b16 %v4811, %v4807
        %v4924 = vpack.c.b16 %v4812, %v4808
        %v4925 = vpack.c.b16 %v4813, %v4809
        %v4926 = vpack.c.b16 %v4818, %v4814
        %v4927 = vpack.c.b16 %v4819, %v4815
        %v4928 = vpack.c.b16 %v4820, %v4816
        %v4929 = vpack.c.b16 %v4821, %v4817
        %v4930 = vpack.c.b16 %v4826, %v4822
        %v4931 = vpack.c.b16 %v4827, %v4823
        %v4932 = vpack.c.b16 %v4828, %v4824
        %v4933 = vpack.c.b16 %v4829, %v4825
        %v4934 = vpack.c.b16 %v4834, %v4830
        %v4935 = vpack.c.b16 %v4835, %v4831
        %v4936 = vpack.c.b16 %v4836, %v4832
        %v4937 = vpack.c.b16 %v4837, %v4833
        %v4938 = vpack.c.b16 %v4842, %v4838
        %v4939 = vpack.c.b16 %v4843, %v4839
        %v4940 = vpack.c.b16 %v4844, %v4840
        %v4941 = vpack.c.b16 %v4845, %v4841
        %v4942 = vpack.c.b16 %v4850, %v4846
        %v4943 = vpack.c.b16 %v4851, %v4847
        %v4944 = vpack.c.b16 %v4852, %v4848
        %v4945 = vpack.c.b16 %v4853, %v4849
        %v4946 = vpack.c.b16 %v4858, %v4854
        %v4947 = vpack.c.b16 %v4859, %v4855
        %v4948 = vpack.c.b16 %v4860, %v4856
        %v4949 = vpack.c.b16 %v4861, %v4857
        %v4950 = vpack.c.b16 %v4866, %v4862
        %v4951 = vpack.c.b16 %v4867, %v4863
        %v4952 = vpack.c.b16 %v4868, %v4864
        %v4953 = vpack.c.b16 %v4869, %v4865
        %v4954 = vpack.c.b16 %v4874, %v4870
        %v4955 = vpack.c.b16 %v4875, %v4871
        %v4956 = vpack.c.b16 %v4876, %v4872
        %v4957 = vpack.c.b16 %v4877, %v4873
        %v4958 = vpack.c.b16 %v4882, %v4878
        %v4959 = vpack.c.b16 %v4883, %v4879
        %v4960 = vpack.c.b16 %v4884, %v4880
        %v4961 = vpack.c.b16 %v4885, %v4881
        %v4962 = vpack.c.b16 %v4890, %v4886
        %v4963 = vpack.c.b16 %v4891, %v4887
        %v4964 = vpack.c.b16 %v4892, %v4888
        %v4965 = vpack.c.b16 %v4893, %v4889
        %v4966 = vpack.c.b16 %v4898, %v4894
        %v4967 = vpack.c.b16 %v4899, %v4895
        %v4968 = vpack.c.b16 %v4900, %v4896
        %v4969 = vpack.c.b16 %v4901, %v4897
        %v4970 = vpack.c.b16 %v4906, %v4902
        %v4971 = vpack.c.b16 %v4907, %v4903
        %v4972 = vpack.c.b16 %v4908, %v4904
        %v4973 = vpack.c.b16 %v4909, %v4905
        %5038 = vmatpush.bf16.msra.mxu0 %v4938
        %5039 = vmatpush.bf16.msra.mxu0 %v4934
        %5040 = vmatpush.bf16.msra.mxu0 %v4930
        %5041 = vmatpush.bf16.msra.mxu0 %v4926
        %5042 = vmatpush.bf16.msra.mxu0 %v4922
        %5043 = vmatpush.bf16.msra.mxu0 %v4918
        %5044 = vmatpush.bf16.msra.mxu0 %v4914
        %5045 = vmatpush.bf16.msra.mxu0 %v4910
        %5046 = vmatmul.bf16.gmra.mxu0 %v4651
        %v5047 = vpop.f32.mrf.mxu0
        %v5048 = vadd.f32 0.0, %v5047
        %v5049 = vpop.f32.mrf.mxu0
        %5050 = vdwg.mxu0
        %5051 = vmatpush.bf16.msra.mxu0 %v4970
        %5052 = vmatpush.bf16.msra.mxu0 %v4966
        %5053 = vmatpush.bf16.msra.mxu0 %v4962
        %5054 = vmatpush.bf16.msra.mxu0 %v4958
        %5055 = vmatpush.bf16.msra.mxu0 %v4954
        %5056 = vmatpush.bf16.msra.mxu0 %v4950
        %5057 = vmatpush.bf16.msra.mxu0 %v4946
        %5058 = vmatpush.bf16.msra.mxu0 %v4942
        %5059 = vmatmul.bf16.gmra.mxu0 %v4652
        %v5060 = vpop.f32.mrf.mxu0
        %v5061 = vadd.f32 %v5048, %v5060
        %v5062 = vpop.f32.mrf.mxu0
        %5063 = vdwg.mxu0
        %5064 = vmatpush.bf16.msra.mxu0 %v4939
        %5065 = vmatpush.bf16.msra.mxu0 %v4935
        %5066 = vmatpush.bf16.msra.mxu0 %v4931
        %5067 = vmatpush.bf16.msra.mxu0 %v4927
        %5068 = vmatpush.bf16.msra.mxu0 %v4923
        %5069 = vmatpush.bf16.msra.mxu0 %v4919
        %5070 = vmatpush.bf16.msra.mxu0 %v4915
        %5071 = vmatpush.bf16.msra.mxu0 %v4911
        %5072 = vmatmul.bf16.gmra.mxu0 %v4651
        %v5073 = vpop.f32.mrf.mxu0
        %v5074 = vadd.f32 0.0, %v5073
        %v5075 = vpop.f32.mrf.mxu0
        %5076 = vdwg.mxu0
        %5077 = vmatpush.bf16.msra.mxu0 %v4971
        %5078 = vmatpush.bf16.msra.mxu0 %v4967
        %5079 = vmatpush.bf16.msra.mxu0 %v4963
        %5080 = vmatpush.bf16.msra.mxu0 %v4959
        %5081 = vmatpush.bf16.msra.mxu0 %v4955
        %5082 = vmatpush.bf16.msra.mxu0 %v4951
        %5083 = vmatpush.bf16.msra.mxu0 %v4947
        %5084 = vmatpush.bf16.msra.mxu0 %v4943
        %5085 = vmatmul.bf16.gmra.mxu0 %v4652
        %v5086 = vpop.f32.mrf.mxu0
        %v5087 = vadd.f32 %v5074, %v5086
        %v5088 = vpop.f32.mrf.mxu0
        %5089 = vdwg.mxu0
        %5090 = vmatpush.bf16.msra.mxu0 %v4940
        %5091 = vmatpush.bf16.msra.mxu0 %v4936
        %5092 = vmatpush.bf16.msra.mxu0 %v4932
        %5093 = vmatpush.bf16.msra.mxu0 %v4928
        %5094 = vmatpush.bf16.msra.mxu0 %v4924
        %5095 = vmatpush.bf16.msra.mxu0 %v4920
        %5096 = vmatpush.bf16.msra.mxu0 %v4916
        %5097 = vmatpush.bf16.msra.mxu0 %v4912
        %5098 = vmatmul.bf16.gmra.mxu0 %v4651
        %v5099 = vpop.f32.mrf.mxu0
        %v5100 = vadd.f32 0.0, %v5099
        %v5101 = vpop.f32.mrf.mxu0
        %5102 = vdwg.mxu0
        %5103 = vmatpush.bf16.msra.mxu0 %v4972
        %5104 = vmatpush.bf16.msra.mxu0 %v4968
        %5105 = vmatpush.bf16.msra.mxu0 %v4964
        %5106 = vmatpush.bf16.msra.mxu0 %v4960
        %5107 = vmatpush.bf16.msra.mxu0 %v4956
        %5108 = vmatpush.bf16.msra.mxu0 %v4952
        %5109 = vmatpush.bf16.msra.mxu0 %v4948
        %5110 = vmatpush.bf16.msra.mxu0 %v4944
        %5111 = vmatmul.bf16.gmra.mxu0 %v4652
        %v5112 = vpop.f32.mrf.mxu0
        %v5113 = vadd.f32 %v5100, %v5112
        %v5114 = vpop.f32.mrf.mxu0
        %5115 = vdwg.mxu0
        %5116 = vmatpush.bf16.msra.mxu0 %v4941
        %5117 = vmatpush.bf16.msra.mxu0 %v4937
        %5118 = vmatpush.bf16.msra.mxu0 %v4933
        %5119 = vmatpush.bf16.msra.mxu0 %v4929
        %5120 = vmatpush.bf16.msra.mxu0 %v4925
        %5121 = vmatpush.bf16.msra.mxu0 %v4921
        %5122 = vmatpush.bf16.msra.mxu0 %v4917
        %5123 = vmatpush.bf16.msra.mxu0 %v4913
        %5124 = vmatmul.bf16.gmra.mxu0 %v4651
        %v5125 = vpop.f32.mrf.mxu0
        %v5126 = vadd.f32 0.0, %v5125
        %v5127 = vpop.f32.mrf.mxu0
        %5128 = vdwg.mxu0
        %5129 = vmatpush.bf16.msra.mxu0 %v4973
        %5130 = vmatpush.bf16.msra.mxu0 %v4969
        %5131 = vmatpush.bf16.msra.mxu0 %v4965
        %5132 = vmatpush.bf16.msra.mxu0 %v4961
        %5133 = vmatpush.bf16.msra.mxu0 %v4957
        %5134 = vmatpush.bf16.msra.mxu0 %v4953
        %5135 = vmatpush.bf16.msra.mxu0 %v4949
        %5136 = vmatpush.bf16.msra.mxu0 %v4945
        %5137 = vmatmul.bf16.gmra.mxu0 %v4652
        %v5138 = vpop.f32.mrf.mxu0
        %v5139 = vadd.f32 %v5126, %v5138
        %v5140 = vpop.f32.mrf.mxu0
        %5141 = vdwg.mxu0
        %v5142 = vadd.f32 %v4616, %v5061
        %v5143 = vadd.f32 %v4617, %v5087
        %v5144 = vadd.f32 %v4618, %v5113
        %v5145 = vadd.f32 %v4619, %v5139
        %s5146 = scalar_lea.vmem %s4, 16
        %v5147 = vld [vmem:[%s5146] sm:$0xf]
        %v5149 = vsel %vm3052, %v5147, 0
        %5151 = vmatpush.bf16.msra.mxu0 0
        %5152 = vmatpush.bf16.msra.mxu0 0
        %5153 = vmatpush.bf16.msra.mxu0 0
        %5154 = vmatpush.bf16.msra.mxu0 0
        %5155 = vmatpush.bf16.msra.mxu0 0
        %5156 = vmatpush.bf16.msra.mxu0 0
        %5157 = vmatpush.bf16.msra.mxu0 0
        %5158 = vmatpush.bf16.msra.mxu0 %v3049
        %5159 = vmatmul.bf16.gmra.mxu0 %v5149
        %v5160 = vpop.f32.mrf.mxu0
        %v5161 = vadd.f32 0.0, %v5160
        %v5162 = vpop.f32.mrf.mxu0
        %5163 = vdwg.mxu0
        %5164 = vmatpush.bf16.msra.mxu0 0
        %5165 = vmatpush.bf16.msra.mxu0 0
        %5166 = vmatpush.bf16.msra.mxu0 0
        %5167 = vmatpush.bf16.msra.mxu0 0
        %5168 = vmatpush.bf16.msra.mxu0 0
        %5169 = vmatpush.bf16.msra.mxu0 0
        %5170 = vmatpush.bf16.msra.mxu0 0
        %5171 = vmatpush.bf16.msra.mxu0 %v3050
        %5172 = vmatmul.bf16.gmra.mxu0 %v5149
        %v5173 = vpop.f32.mrf.mxu0
        %v5174 = vadd.f32 0.0, %v5173
        %v5175 = vpop.f32.mrf.mxu0
        %5176 = vdwg.mxu0
        %v5177 = vpack.c.bf16 %v5161, %v5161
        %v5178 = vpack.c.bf16 %v5174, %v5174
        %s5179 = scalar_lea.vmem %s5, 2048
        %v5180 = vld [vmem:[%s5179] sm:$0xff]
        %v5181 = vld [vmem:[%s5179 + $0x8] sm:$0xff]
        %v5182 = vld [vmem:[%s5179 + $0x10] sm:$0xff]
        %v5183 = vld [vmem:[%s5179 + $0x18] sm:$0xff]
        %v5184 = vld [vmem:[%s5179 + $0x20] sm:$0xff]
        %v5185 = vld [vmem:[%s5179 + $0x28] sm:$0xff]
        %v5186 = vld [vmem:[%s5179 + $0x30] sm:$0xff]
        %v5187 = vld [vmem:[%s5179 + $0x38] sm:$0xff]
        %v5188 = vld [vmem:[%s5179 + $0x40] sm:$0xff]
        %v5189 = vld [vmem:[%s5179 + $0x48] sm:$0xff]
        %v5190 = vld [vmem:[%s5179 + $0x50] sm:$0xff]
        %v5191 = vld [vmem:[%s5179 + $0x58] sm:$0xff]
        %v5192 = vld [vmem:[%s5179 + $0x60] sm:$0xff]
        %v5193 = vld [vmem:[%s5179 + $0x68] sm:$0xff]
        %v5194 = vld [vmem:[%s5179 + $0x70] sm:$0xff]
        %v5195 = vld [vmem:[%s5179 + $0x78] sm:$0xff]
        %v5196 = vld [vmem:[%s5179 + $0x80] sm:$0xff]
        %v5197 = vld [vmem:[%s5179 + $0x88] sm:$0xff]
        %v5198 = vld [vmem:[%s5179 + $0x90] sm:$0xff]
        %v5199 = vld [vmem:[%s5179 + $0x98] sm:$0xff]
        %v5200 = vld [vmem:[%s5179 + $0xa0] sm:$0xff]
        %v5201 = vld [vmem:[%s5179 + $0xa8] sm:$0xff]
        %v5202 = vld [vmem:[%s5179 + $0xb0] sm:$0xff]
        %v5203 = vld [vmem:[%s5179 + $0xb8] sm:$0xff]
        %v5204 = vld [vmem:[%s5179 + $0xc0] sm:$0xff]
        %v5205 = vld [vmem:[%s5179 + $0xc8] sm:$0xff]
        %v5206 = vld [vmem:[%s5179 + $0xd0] sm:$0xff]
        %v5207 = vld [vmem:[%s5179 + $0xd8] sm:$0xff]
        %v5208 = vld [vmem:[%s5179 + $0xe0] sm:$0xff]
        %v5209 = vld [vmem:[%s5179 + $0xe8] sm:$0xff]
        %v5210 = vld [vmem:[%s5179 + $0xf0] sm:$0xff]
        %v5211 = vld [vmem:[%s5179 + $0xf8] sm:$0xff]
        %v5212 = vld [vmem:[%s5179 + $0x100] sm:$0xff]
        %v5213 = vld [vmem:[%s5179 + $0x108] sm:$0xff]
        %v5214 = vld [vmem:[%s5179 + $0x110] sm:$0xff]
        %v5215 = vld [vmem:[%s5179 + $0x118] sm:$0xff]
        %v5216 = vld [vmem:[%s5179 + $0x120] sm:$0xff]
        %v5217 = vld [vmem:[%s5179 + $0x128] sm:$0xff]
        %v5218 = vld [vmem:[%s5179 + $0x130] sm:$0xff]
        %v5219 = vld [vmem:[%s5179 + $0x138] sm:$0xff]
        %v5220 = vld [vmem:[%s5179 + $0x140] sm:$0xff]
        %v5221 = vld [vmem:[%s5179 + $0x148] sm:$0xff]
        %v5222 = vld [vmem:[%s5179 + $0x150] sm:$0xff]
        %v5223 = vld [vmem:[%s5179 + $0x158] sm:$0xff]
        %v5224 = vld [vmem:[%s5179 + $0x160] sm:$0xff]
        %v5225 = vld [vmem:[%s5179 + $0x168] sm:$0xff]
        %v5226 = vld [vmem:[%s5179 + $0x170] sm:$0xff]
        %v5227 = vld [vmem:[%s5179 + $0x178] sm:$0xff]
        %v5228 = vld [vmem:[%s5179 + $0x180] sm:$0xff]
        %v5229 = vld [vmem:[%s5179 + $0x188] sm:$0xff]
        %v5230 = vld [vmem:[%s5179 + $0x190] sm:$0xff]
        %v5231 = vld [vmem:[%s5179 + $0x198] sm:$0xff]
        %v5232 = vld [vmem:[%s5179 + $0x1a0] sm:$0xff]
        %v5233 = vld [vmem:[%s5179 + $0x1a8] sm:$0xff]
        %v5234 = vld [vmem:[%s5179 + $0x1b0] sm:$0xff]
        %v5235 = vld [vmem:[%s5179 + $0x1b8] sm:$0xff]
        %v5236 = vld [vmem:[%s5179 + $0x1c0] sm:$0xff]
        %v5237 = vld [vmem:[%s5179 + $0x1c8] sm:$0xff]
        %v5238 = vld [vmem:[%s5179 + $0x1d0] sm:$0xff]
        %v5239 = vld [vmem:[%s5179 + $0x1d8] sm:$0xff]
        %v5240 = vld [vmem:[%s5179 + $0x1e0] sm:$0xff]
        %v5241 = vld [vmem:[%s5179 + $0x1e8] sm:$0xff]
        %v5242 = vld [vmem:[%s5179 + $0x1f0] sm:$0xff]
        %v5243 = vld [vmem:[%s5179 + $0x1f8] sm:$0xff]
        %v5308 = vunpack.c.l.b16 %v5180
        %v5309 = vunpack.c.h.b16 %v5180
        %v5310 = vunpack.c.l.b16 %v5181
        %v5311 = vunpack.c.h.b16 %v5181
        %v5312 = vunpack.c.l.b16 %v5182
        %v5313 = vunpack.c.h.b16 %v5182
        %v5314 = vunpack.c.l.b16 %v5183
        %v5315 = vunpack.c.h.b16 %v5183
        %v5316 = vunpack.c.l.b16 %v5184
        %v5317 = vunpack.c.h.b16 %v5184
        %v5318 = vunpack.c.l.b16 %v5185
        %v5319 = vunpack.c.h.b16 %v5185
        %v5320 = vunpack.c.l.b16 %v5186
        %v5321 = vunpack.c.h.b16 %v5186
        %v5322 = vunpack.c.l.b16 %v5187
        %v5323 = vunpack.c.h.b16 %v5187
        %v5324 = vunpack.c.l.b16 %v5188
        %v5325 = vunpack.c.h.b16 %v5188
        %v5326 = vunpack.c.l.b16 %v5189
        %v5327 = vunpack.c.h.b16 %v5189
        %v5328 = vunpack.c.l.b16 %v5190
        %v5329 = vunpack.c.h.b16 %v5190
        %v5330 = vunpack.c.l.b16 %v5191
        %v5331 = vunpack.c.h.b16 %v5191
        %v5332 = vunpack.c.l.b16 %v5192
        %v5333 = vunpack.c.h.b16 %v5192
        %v5334 = vunpack.c.l.b16 %v5193
        %v5335 = vunpack.c.h.b16 %v5193
        %v5336 = vunpack.c.l.b16 %v5194
        %v5337 = vunpack.c.h.b16 %v5194
        %v5338 = vunpack.c.l.b16 %v5195
        %v5339 = vunpack.c.h.b16 %v5195
        %v5340 = vunpack.c.l.b16 %v5196
        %v5341 = vunpack.c.h.b16 %v5196
        %v5342 = vunpack.c.l.b16 %v5197
        %v5343 = vunpack.c.h.b16 %v5197
        %v5344 = vunpack.c.l.b16 %v5198
        %v5345 = vunpack.c.h.b16 %v5198
        %v5346 = vunpack.c.l.b16 %v5199
        %v5347 = vunpack.c.h.b16 %v5199
        %v5348 = vunpack.c.l.b16 %v5200
        %v5349 = vunpack.c.h.b16 %v5200
        %v5350 = vunpack.c.l.b16 %v5201
        %v5351 = vunpack.c.h.b16 %v5201
        %v5352 = vunpack.c.l.b16 %v5202
        %v5353 = vunpack.c.h.b16 %v5202
        %v5354 = vunpack.c.l.b16 %v5203
        %v5355 = vunpack.c.h.b16 %v5203
        %v5356 = vunpack.c.l.b16 %v5204
        %v5357 = vunpack.c.h.b16 %v5204
        %v5358 = vunpack.c.l.b16 %v5205
        %v5359 = vunpack.c.h.b16 %v5205
        %v5360 = vunpack.c.l.b16 %v5206
        %v5361 = vunpack.c.h.b16 %v5206
        %v5362 = vunpack.c.l.b16 %v5207
        %v5363 = vunpack.c.h.b16 %v5207
        %v5364 = vunpack.c.l.b16 %v5208
        %v5365 = vunpack.c.h.b16 %v5208
        %v5366 = vunpack.c.l.b16 %v5209
        %v5367 = vunpack.c.h.b16 %v5209
        %v5368 = vunpack.c.l.b16 %v5210
        %v5369 = vunpack.c.h.b16 %v5210
        %v5370 = vunpack.c.l.b16 %v5211
        %v5371 = vunpack.c.h.b16 %v5211
        %v5372 = vunpack.c.l.b16 %v5212
        %v5373 = vunpack.c.h.b16 %v5212
        %v5374 = vunpack.c.l.b16 %v5213
        %v5375 = vunpack.c.h.b16 %v5213
        %v5376 = vunpack.c.l.b16 %v5214
        %v5377 = vunpack.c.h.b16 %v5214
        %v5378 = vunpack.c.l.b16 %v5215
        %v5379 = vunpack.c.h.b16 %v5215
        %v5380 = vunpack.c.l.b16 %v5216
        %v5381 = vunpack.c.h.b16 %v5216
        %v5382 = vunpack.c.l.b16 %v5217
        %v5383 = vunpack.c.h.b16 %v5217
        %v5384 = vunpack.c.l.b16 %v5218
        %v5385 = vunpack.c.h.b16 %v5218
        %v5386 = vunpack.c.l.b16 %v5219
        %v5387 = vunpack.c.h.b16 %v5219
        %v5388 = vunpack.c.l.b16 %v5220
        %v5389 = vunpack.c.h.b16 %v5220
        %v5390 = vunpack.c.l.b16 %v5221
        %v5391 = vunpack.c.h.b16 %v5221
        %v5392 = vunpack.c.l.b16 %v5222
        %v5393 = vunpack.c.h.b16 %v5222
        %v5394 = vunpack.c.l.b16 %v5223
        %v5395 = vunpack.c.h.b16 %v5223
        %v5396 = vunpack.c.l.b16 %v5224
        %v5397 = vunpack.c.h.b16 %v5224
        %v5398 = vunpack.c.l.b16 %v5225
        %v5399 = vunpack.c.h.b16 %v5225
        %v5400 = vunpack.c.l.b16 %v5226
        %v5401 = vunpack.c.h.b16 %v5226
        %v5402 = vunpack.c.l.b16 %v5227
        %v5403 = vunpack.c.h.b16 %v5227
        %v5404 = vunpack.c.l.b16 %v5228
        %v5405 = vunpack.c.h.b16 %v5228
        %v5406 = vunpack.c.l.b16 %v5229
        %v5407 = vunpack.c.h.b16 %v5229
        %v5408 = vunpack.c.l.b16 %v5230
        %v5409 = vunpack.c.h.b16 %v5230
        %v5410 = vunpack.c.l.b16 %v5231
        %v5411 = vunpack.c.h.b16 %v5231
        %v5412 = vunpack.c.l.b16 %v5232
        %v5413 = vunpack.c.h.b16 %v5232
        %v5414 = vunpack.c.l.b16 %v5233
        %v5415 = vunpack.c.h.b16 %v5233
        %v5416 = vunpack.c.l.b16 %v5234
        %v5417 = vunpack.c.h.b16 %v5234
        %v5418 = vunpack.c.l.b16 %v5235
        %v5419 = vunpack.c.h.b16 %v5235
        %v5420 = vunpack.c.l.b16 %v5236
        %v5421 = vunpack.c.h.b16 %v5236
        %v5422 = vunpack.c.l.b16 %v5237
        %v5423 = vunpack.c.h.b16 %v5237
        %v5424 = vunpack.c.l.b16 %v5238
        %v5425 = vunpack.c.h.b16 %v5238
        %v5426 = vunpack.c.l.b16 %v5239
        %v5427 = vunpack.c.h.b16 %v5239
        %v5428 = vunpack.c.l.b16 %v5240
        %v5429 = vunpack.c.h.b16 %v5240
        %v5430 = vunpack.c.l.b16 %v5241
        %v5431 = vunpack.c.h.b16 %v5241
        %v5432 = vunpack.c.l.b16 %v5242
        %v5433 = vunpack.c.h.b16 %v5242
        %v5434 = vunpack.c.l.b16 %v5243
        %v5435 = vunpack.c.h.b16 %v5243
        %v5436 = vpack.c.b16 %v5312, %v5308
        %v5437 = vpack.c.b16 %v5313, %v5309
        %v5438 = vpack.c.b16 %v5314, %v5310
        %v5439 = vpack.c.b16 %v5315, %v5311
        %v5440 = vpack.c.b16 %v5320, %v5316
        %v5441 = vpack.c.b16 %v5321, %v5317
        %v5442 = vpack.c.b16 %v5322, %v5318
        %v5443 = vpack.c.b16 %v5323, %v5319
        %v5444 = vpack.c.b16 %v5328, %v5324
        %v5445 = vpack.c.b16 %v5329, %v5325
        %v5446 = vpack.c.b16 %v5330, %v5326
        %v5447 = vpack.c.b16 %v5331, %v5327
        %v5448 = vpack.c.b16 %v5336, %v5332
        %v5449 = vpack.c.b16 %v5337, %v5333
        %v5450 = vpack.c.b16 %v5338, %v5334
        %v5451 = vpack.c.b16 %v5339, %v5335
        %v5452 = vpack.c.b16 %v5344, %v5340
        %v5453 = vpack.c.b16 %v5345, %v5341
        %v5454 = vpack.c.b16 %v5346, %v5342
        %v5455 = vpack.c.b16 %v5347, %v5343
        %v5456 = vpack.c.b16 %v5352, %v5348
        %v5457 = vpack.c.b16 %v5353, %v5349
        %v5458 = vpack.c.b16 %v5354, %v5350
        %v5459 = vpack.c.b16 %v5355, %v5351
        %v5460 = vpack.c.b16 %v5360, %v5356
        %v5461 = vpack.c.b16 %v5361, %v5357
        %v5462 = vpack.c.b16 %v5362, %v5358
        %v5463 = vpack.c.b16 %v5363, %v5359
        %v5464 = vpack.c.b16 %v5368, %v5364
        %v5465 = vpack.c.b16 %v5369, %v5365
        %v5466 = vpack.c.b16 %v5370, %v5366
        %v5467 = vpack.c.b16 %v5371, %v5367
        %v5468 = vpack.c.b16 %v5376, %v5372
        %v5469 = vpack.c.b16 %v5377, %v5373
        %v5470 = vpack.c.b16 %v5378, %v5374
        %v5471 = vpack.c.b16 %v5379, %v5375
        %v5472 = vpack.c.b16 %v5384, %v5380
        %v5473 = vpack.c.b16 %v5385, %v5381
        %v5474 = vpack.c.b16 %v5386, %v5382
        %v5475 = vpack.c.b16 %v5387, %v5383
        %v5476 = vpack.c.b16 %v5392, %v5388
        %v5477 = vpack.c.b16 %v5393, %v5389
        %v5478 = vpack.c.b16 %v5394, %v5390
        %v5479 = vpack.c.b16 %v5395, %v5391
        %v5480 = vpack.c.b16 %v5400, %v5396
        %v5481 = vpack.c.b16 %v5401, %v5397
        %v5482 = vpack.c.b16 %v5402, %v5398
        %v5483 = vpack.c.b16 %v5403, %v5399
        %v5484 = vpack.c.b16 %v5408, %v5404
        %v5485 = vpack.c.b16 %v5409, %v5405
        %v5486 = vpack.c.b16 %v5410, %v5406
        %v5487 = vpack.c.b16 %v5411, %v5407
        %v5488 = vpack.c.b16 %v5416, %v5412
        %v5489 = vpack.c.b16 %v5417, %v5413
        %v5490 = vpack.c.b16 %v5418, %v5414
        %v5491 = vpack.c.b16 %v5419, %v5415
        %v5492 = vpack.c.b16 %v5424, %v5420
        %v5493 = vpack.c.b16 %v5425, %v5421
        %v5494 = vpack.c.b16 %v5426, %v5422
        %v5495 = vpack.c.b16 %v5427, %v5423
        %v5496 = vpack.c.b16 %v5432, %v5428
        %v5497 = vpack.c.b16 %v5433, %v5429
        %v5498 = vpack.c.b16 %v5434, %v5430
        %v5499 = vpack.c.b16 %v5435, %v5431
        %5564 = vmatpush.bf16.msra.mxu0 %v5464
        %5565 = vmatpush.bf16.msra.mxu0 %v5460
        %5566 = vmatpush.bf16.msra.mxu0 %v5456
        %5567 = vmatpush.bf16.msra.mxu0 %v5452
        %5568 = vmatpush.bf16.msra.mxu0 %v5448
        %5569 = vmatpush.bf16.msra.mxu0 %v5444
        %5570 = vmatpush.bf16.msra.mxu0 %v5440
        %5571 = vmatpush.bf16.msra.mxu0 %v5436
        %5572 = vmatmul.bf16.gmra.mxu0 %v5177
        %v5573 = vpop.f32.mrf.mxu0
        %v5574 = vadd.f32 0.0, %v5573
        %v5575 = vpop.f32.mrf.mxu0
        %5576 = vdwg.mxu0
        %5577 = vmatpush.bf16.msra.mxu0 %v5496
        %5578 = vmatpush.bf16.msra.mxu0 %v5492
        %5579 = vmatpush.bf16.msra.mxu0 %v5488
        %5580 = vmatpush.bf16.msra.mxu0 %v5484
        %5581 = vmatpush.bf16.msra.mxu0 %v5480
        %5582 = vmatpush.bf16.msra.mxu0 %v5476
        %5583 = vmatpush.bf16.msra.mxu0 %v5472
        %5584 = vmatpush.bf16.msra.mxu0 %v5468
        %5585 = vmatmul.bf16.gmra.mxu0 %v5178
        %v5586 = vpop.f32.mrf.mxu0
        %v5587 = vadd.f32 %v5574, %v5586
        %v5588 = vpop.f32.mrf.mxu0
        %5589 = vdwg.mxu0
        %5590 = vmatpush.bf16.msra.mxu0 %v5465
        %5591 = vmatpush.bf16.msra.mxu0 %v5461
        %5592 = vmatpush.bf16.msra.mxu0 %v5457
        %5593 = vmatpush.bf16.msra.mxu0 %v5453
        %5594 = vmatpush.bf16.msra.mxu0 %v5449
        %5595 = vmatpush.bf16.msra.mxu0 %v5445
        %5596 = vmatpush.bf16.msra.mxu0 %v5441
        %5597 = vmatpush.bf16.msra.mxu0 %v5437
        %5598 = vmatmul.bf16.gmra.mxu0 %v5177
        %v5599 = vpop.f32.mrf.mxu0
        %v5600 = vadd.f32 0.0, %v5599
        %v5601 = vpop.f32.mrf.mxu0
        %5602 = vdwg.mxu0
        %5603 = vmatpush.bf16.msra.mxu0 %v5497
        %5604 = vmatpush.bf16.msra.mxu0 %v5493
        %5605 = vmatpush.bf16.msra.mxu0 %v5489
        %5606 = vmatpush.bf16.msra.mxu0 %v5485
        %5607 = vmatpush.bf16.msra.mxu0 %v5481
        %5608 = vmatpush.bf16.msra.mxu0 %v5477
        %5609 = vmatpush.bf16.msra.mxu0 %v5473
        %5610 = vmatpush.bf16.msra.mxu0 %v5469
        %5611 = vmatmul.bf16.gmra.mxu0 %v5178
        %v5612 = vpop.f32.mrf.mxu0
        %v5613 = vadd.f32 %v5600, %v5612
        %v5614 = vpop.f32.mrf.mxu0
        %5615 = vdwg.mxu0
        %5616 = vmatpush.bf16.msra.mxu0 %v5466
        %5617 = vmatpush.bf16.msra.mxu0 %v5462
        %5618 = vmatpush.bf16.msra.mxu0 %v5458
        %5619 = vmatpush.bf16.msra.mxu0 %v5454
        %5620 = vmatpush.bf16.msra.mxu0 %v5450
        %5621 = vmatpush.bf16.msra.mxu0 %v5446
        %5622 = vmatpush.bf16.msra.mxu0 %v5442
        %5623 = vmatpush.bf16.msra.mxu0 %v5438
        %5624 = vmatmul.bf16.gmra.mxu0 %v5177
        %v5625 = vpop.f32.mrf.mxu0
        %v5626 = vadd.f32 0.0, %v5625
        %v5627 = vpop.f32.mrf.mxu0
        %5628 = vdwg.mxu0
        %5629 = vmatpush.bf16.msra.mxu0 %v5498
        %5630 = vmatpush.bf16.msra.mxu0 %v5494
        %5631 = vmatpush.bf16.msra.mxu0 %v5490
        %5632 = vmatpush.bf16.msra.mxu0 %v5486
        %5633 = vmatpush.bf16.msra.mxu0 %v5482
        %5634 = vmatpush.bf16.msra.mxu0 %v5478
        %5635 = vmatpush.bf16.msra.mxu0 %v5474
        %5636 = vmatpush.bf16.msra.mxu0 %v5470
        %5637 = vmatmul.bf16.gmra.mxu0 %v5178
        %v5638 = vpop.f32.mrf.mxu0
        %v5639 = vadd.f32 %v5626, %v5638
        %v5640 = vpop.f32.mrf.mxu0
        %5641 = vdwg.mxu0
        %5642 = vmatpush.bf16.msra.mxu0 %v5467
        %5643 = vmatpush.bf16.msra.mxu0 %v5463
        %5644 = vmatpush.bf16.msra.mxu0 %v5459
        %5645 = vmatpush.bf16.msra.mxu0 %v5455
        %5646 = vmatpush.bf16.msra.mxu0 %v5451
        %5647 = vmatpush.bf16.msra.mxu0 %v5447
        %5648 = vmatpush.bf16.msra.mxu0 %v5443
        %5649 = vmatpush.bf16.msra.mxu0 %v5439
        %5650 = vmatmul.bf16.gmra.mxu0 %v5177
        %v5651 = vpop.f32.mrf.mxu0
        %v5652 = vadd.f32 0.0, %v5651
        %v5653 = vpop.f32.mrf.mxu0
        %5654 = vdwg.mxu0
        %5655 = vmatpush.bf16.msra.mxu0 %v5499
        %5656 = vmatpush.bf16.msra.mxu0 %v5495
        %5657 = vmatpush.bf16.msra.mxu0 %v5491
        %5658 = vmatpush.bf16.msra.mxu0 %v5487
        %5659 = vmatpush.bf16.msra.mxu0 %v5483
        %5660 = vmatpush.bf16.msra.mxu0 %v5479
        %5661 = vmatpush.bf16.msra.mxu0 %v5475
        %5662 = vmatpush.bf16.msra.mxu0 %v5471
        %5663 = vmatmul.bf16.gmra.mxu0 %v5178
        %v5664 = vpop.f32.mrf.mxu0
        %v5665 = vadd.f32 %v5652, %v5664
        %v5666 = vpop.f32.mrf.mxu0
        %5667 = vdwg.mxu0
        %v5668 = vadd.f32 %v5142, %v5587
        %v5669 = vadd.f32 %v5143, %v5613
        %v5670 = vadd.f32 %v5144, %v5639
        %v5671 = vadd.f32 %v5145, %v5665
        %v5672 = vld [vmem:[%s6] sm:$0xf]
        %v5674 = vperm.slane %v5672, 0
        %v5675 = vperm.slane %v5672, 1
        %v5676 = vperm.slane %v5672, 2
        %v5677 = vperm.slane %v5672, 3
        %v5682 = vadd.f32 %v5668, %v5674
        %v5683 = vadd.f32 %v5669, %v5675
        %v5684 = vadd.f32 %v5670, %v5676
        %v5685 = vadd.f32 %v5671, %v5677
        %v5686 = vmax.f32 %v5682, 0.0
        %v5687 = vmax.f32 %v5683, 0.0
        %v5688 = vmax.f32 %v5684, 0.0
        %v5689 = vmax.f32 %v5685, 0.0
        %v5690 = vpack.c.bf16 %v5686, %v5686
        %v5691 = vpack.c.bf16 %v5687, %v5687
        %v5692 = vpack.c.bf16 %v5688, %v5688
        %v5693 = vpack.c.bf16 %v5689, %v5689
        %v5694 = vld [vmem:[%s7] sm:$0x3]
        %vm5695 = vcmask 64512
        %v5697 = vsel %vm5695, %v5694, 0
        %vm5699 = vcmask 1043456
        %v5701 = vsel %vm5699, %v5690, 0
        %v5704 = vsel %vm5699, %v5691, 0
        %v5707 = vsel %vm5699, %v5692, 0
        %v5710 = vsel %vm5699, %v5693, 0
        %5712 = vmatpush.bf16.msra.mxu0 0
        %5713 = vmatpush.bf16.msra.mxu0 0
        %5714 = vmatpush.bf16.msra.mxu0 0
        %5715 = vmatpush.bf16.msra.mxu0 0
        %5716 = vmatpush.bf16.msra.mxu0 0
        %5717 = vmatpush.bf16.msra.mxu0 0
        %5718 = vmatpush.bf16.msra.mxu0 0
        %5719 = vmatpush.bf16.msra.mxu0 %v5701
        %5720 = vmatmul.bf16.gmra.mxu0 %v5697
        %v5721 = vpop.f32.mrf.mxu0
        %v5722 = vadd.f32 0.0, %v5721
        %v5723 = vpop.f32.mrf.mxu0
        %5724 = vdwg.mxu0
        %5725 = vmatpush.bf16.msra.mxu0 0
        %5726 = vmatpush.bf16.msra.mxu0 0
        %5727 = vmatpush.bf16.msra.mxu0 0
        %5728 = vmatpush.bf16.msra.mxu0 0
        %5729 = vmatpush.bf16.msra.mxu0 0
        %5730 = vmatpush.bf16.msra.mxu0 0
        %5731 = vmatpush.bf16.msra.mxu0 0
        %5732 = vmatpush.bf16.msra.mxu0 %v5704
        %5733 = vmatmul.bf16.gmra.mxu0 %v5697
        %v5734 = vpop.f32.mrf.mxu0
        %v5735 = vadd.f32 0.0, %v5734
        %v5736 = vpop.f32.mrf.mxu0
        %5737 = vdwg.mxu0
        %5738 = vmatpush.bf16.msra.mxu0 0
        %5739 = vmatpush.bf16.msra.mxu0 0
        %5740 = vmatpush.bf16.msra.mxu0 0
        %5741 = vmatpush.bf16.msra.mxu0 0
        %5742 = vmatpush.bf16.msra.mxu0 0
        %5743 = vmatpush.bf16.msra.mxu0 0
        %5744 = vmatpush.bf16.msra.mxu0 0
        %5745 = vmatpush.bf16.msra.mxu0 %v5707
        %5746 = vmatmul.bf16.gmra.mxu0 %v5697
        %v5747 = vpop.f32.mrf.mxu0
        %v5748 = vadd.f32 0.0, %v5747
        %v5749 = vpop.f32.mrf.mxu0
        %5750 = vdwg.mxu0
        %5751 = vmatpush.bf16.msra.mxu0 0
        %5752 = vmatpush.bf16.msra.mxu0 0
        %5753 = vmatpush.bf16.msra.mxu0 0
        %5754 = vmatpush.bf16.msra.mxu0 0
        %5755 = vmatpush.bf16.msra.mxu0 0
        %5756 = vmatpush.bf16.msra.mxu0 0
        %5757 = vmatpush.bf16.msra.mxu0 0
        %5758 = vmatpush.bf16.msra.mxu0 %v5710
        %5759 = vmatmul.bf16.gmra.mxu0 %v5697
        %v5760 = vpop.f32.mrf.mxu0
        %v5761 = vadd.f32 0.0, %v5760
        %v5762 = vpop.f32.mrf.mxu0
        %5763 = vdwg.mxu0
        %s5764 = scalar_lea.vmem %s7, 2
        %v5765 = vld [vmem:[%s5764] sm:$0x3]
        %v5767 = vsel %vm5695, %v5765, 0
        %5769 = vmatpush.bf16.msra.mxu0 0
        %5770 = vmatpush.bf16.msra.mxu0 0
        %5771 = vmatpush.bf16.msra.mxu0 0
        %5772 = vmatpush.bf16.msra.mxu0 0
        %5773 = vmatpush.bf16.msra.mxu0 0
        %5774 = vmatpush.bf16.msra.mxu0 0
        %5775 = vmatpush.bf16.msra.mxu0 0
        %5776 = vmatpush.bf16.msra.mxu0 %v5701
        %5777 = vmatmul.bf16.gmra.mxu0 %v5767
        %v5778 = vpop.f32.mrf.mxu0
        %v5779 = vadd.f32 0.0, %v5778
        %v5780 = vpop.f32.mrf.mxu0
        %5781 = vdwg.mxu0
        %5782 = vmatpush.bf16.msra.mxu0 0
        %5783 = vmatpush.bf16.msra.mxu0 0
        %5784 = vmatpush.bf16.msra.mxu0 0
        %5785 = vmatpush.bf16.msra.mxu0 0
        %5786 = vmatpush.bf16.msra.mxu0 0
        %5787 = vmatpush.bf16.msra.mxu0 0
        %5788 = vmatpush.bf16.msra.mxu0 0
        %5789 = vmatpush.bf16.msra.mxu0 %v5704
        %5790 = vmatmul.bf16.gmra.mxu0 %v5767
        %v5791 = vpop.f32.mrf.mxu0
        %v5792 = vadd.f32 0.0, %v5791
        %v5793 = vpop.f32.mrf.mxu0
        %5794 = vdwg.mxu0
        %5795 = vmatpush.bf16.msra.mxu0 0
        %5796 = vmatpush.bf16.msra.mxu0 0
        %5797 = vmatpush.bf16.msra.mxu0 0
        %5798 = vmatpush.bf16.msra.mxu0 0
        %5799 = vmatpush.bf16.msra.mxu0 0
        %5800 = vmatpush.bf16.msra.mxu0 0
        %5801 = vmatpush.bf16.msra.mxu0 0
        %5802 = vmatpush.bf16.msra.mxu0 %v5707
        %5803 = vmatmul.bf16.gmra.mxu0 %v5767
        %v5804 = vpop.f32.mrf.mxu0
        %v5805 = vadd.f32 0.0, %v5804
        %v5806 = vpop.f32.mrf.mxu0
        %5807 = vdwg.mxu0
        %5808 = vmatpush.bf16.msra.mxu0 0
        %5809 = vmatpush.bf16.msra.mxu0 0
        %5810 = vmatpush.bf16.msra.mxu0 0
        %5811 = vmatpush.bf16.msra.mxu0 0
        %5812 = vmatpush.bf16.msra.mxu0 0
        %5813 = vmatpush.bf16.msra.mxu0 0
        %5814 = vmatpush.bf16.msra.mxu0 0
        %5815 = vmatpush.bf16.msra.mxu0 %v5710
        %5816 = vmatmul.bf16.gmra.mxu0 %v5767
        %v5817 = vpop.f32.mrf.mxu0
        %v5818 = vadd.f32 0.0, %v5817
        %v5819 = vpop.f32.mrf.mxu0
        %5820 = vdwg.mxu0
        %v5821 = vmax.f32 %v5722, %v5779
        %v5822 = vmax.f32 %v5735, %v5792
        %v5823 = vmax.f32 %v5748, %v5805
        %v5824 = vmax.f32 %v5761, %v5818
        %v5825 = vmax.f32 %v5821, %v5823
        %v5826 = vmax.f32 %v5822, %v5824
        %v5827 = vpack.c.bf16 %v5825, %v5825
        %v5828 = vpack.c.bf16 %v5826, %v5826
        %v5829 = vld [vmem:[%s8] sm:$0x1]
        %vm5830 = vcmask 31744
        %v5832 = vsel %vm5830, %v5829, 0
        %vm5834 = vcmask 1041408
        %v5836 = vsel %vm5834, %v5827, 0
        %v5839 = vsel %vm5834, %v5828, 0
        %5841 = vmatpush.bf16.msra.mxu0 0
        %5842 = vmatpush.bf16.msra.mxu0 0
        %5843 = vmatpush.bf16.msra.mxu0 0
        %5844 = vmatpush.bf16.msra.mxu0 0
        %5845 = vmatpush.bf16.msra.mxu0 0
        %5846 = vmatpush.bf16.msra.mxu0 0
        %5847 = vmatpush.bf16.msra.mxu0 0
        %5848 = vmatpush.bf16.msra.mxu0 %v5836
        %5849 = vmatmul.bf16.gmra.mxu0 %v5832
        %v5850 = vpop.f32.mrf.mxu0
        %v5851 = vadd.f32 0.0, %v5850
        %v5852 = vpop.f32.mrf.mxu0
        %5853 = vdwg.mxu0
        %5854 = vmatpush.bf16.msra.mxu0 0
        %5855 = vmatpush.bf16.msra.mxu0 0
        %5856 = vmatpush.bf16.msra.mxu0 0
        %5857 = vmatpush.bf16.msra.mxu0 0
        %5858 = vmatpush.bf16.msra.mxu0 0
        %5859 = vmatpush.bf16.msra.mxu0 0
        %5860 = vmatpush.bf16.msra.mxu0 0
        %5861 = vmatpush.bf16.msra.mxu0 %v5839
        %5862 = vmatmul.bf16.gmra.mxu0 %v5832
        %v5863 = vpop.f32.mrf.mxu0
        %v5864 = vadd.f32 0.0, %v5863
        %v5865 = vpop.f32.mrf.mxu0
        %5866 = vdwg.mxu0
        %v5867 = vpack.c.bf16 %v5851, %v5851
        %v5868 = vpack.c.bf16 %v5864, %v5864
        %v5869 = vld [vmem:[%s9] sm:$0xf]
        %v5870 = vld [vmem:[%s9 + $0x4] sm:$0xf]
        %v5871 = vld [vmem:[%s9 + $0x8] sm:$0xf]
        %v5872 = vld [vmem:[%s9 + $0xc] sm:$0xf]
        %v5873 = vld [vmem:[%s9 + $0x10] sm:$0xf]
        %v5874 = vld [vmem:[%s9 + $0x14] sm:$0xf]
        %v5875 = vld [vmem:[%s9 + $0x18] sm:$0xf]
        %v5876 = vld [vmem:[%s9 + $0x1c] sm:$0xf]
        %v5877 = vld [vmem:[%s9 + $0x20] sm:$0xf]
        %v5878 = vld [vmem:[%s9 + $0x24] sm:$0xf]
        %v5879 = vld [vmem:[%s9 + $0x28] sm:$0xf]
        %v5880 = vld [vmem:[%s9 + $0x2c] sm:$0xf]
        %v5881 = vld [vmem:[%s9 + $0x30] sm:$0xf]
        %v5882 = vld [vmem:[%s9 + $0x34] sm:$0xf]
        %v5883 = vld [vmem:[%s9 + $0x38] sm:$0xf]
        %v5884 = vld [vmem:[%s9 + $0x3c] sm:$0xf]
        %v5885 = vld [vmem:[%s9 + $0x40] sm:$0xf]
        %v5886 = vld [vmem:[%s9 + $0x44] sm:$0xf]
        %v5887 = vld [vmem:[%s9 + $0x48] sm:$0xf]
        %v5888 = vld [vmem:[%s9 + $0x4c] sm:$0xf]
        %v5889 = vld [vmem:[%s9 + $0x50] sm:$0xf]
        %v5890 = vld [vmem:[%s9 + $0x54] sm:$0xf]
        %v5891 = vld [vmem:[%s9 + $0x58] sm:$0xf]
        %v5892 = vld [vmem:[%s9 + $0x5c] sm:$0xf]
        %v5893 = vld [vmem:[%s9 + $0x60] sm:$0xf]
        %v5894 = vld [vmem:[%s9 + $0x64] sm:$0xf]
        %v5895 = vld [vmem:[%s9 + $0x68] sm:$0xf]
        %v5896 = vld [vmem:[%s9 + $0x6c] sm:$0xf]
        %v5897 = vld [vmem:[%s9 + $0x70] sm:$0xf]
        %v5898 = vld [vmem:[%s9 + $0x74] sm:$0xf]
        %v5899 = vld [vmem:[%s9 + $0x78] sm:$0xf]
        %v5900 = vld [vmem:[%s9 + $0x7c] sm:$0xf]
        %s5901 = scalar_lea.vmem %s8, 1
        %v5902 = vld [vmem:[%s5901] sm:$0x1]
        %v5904 = vsel %vm5830, %v5902, 0
        %5906 = vmatpush.bf16.msra.mxu0 0
        %5907 = vmatpush.bf16.msra.mxu0 0
        %5908 = vmatpush.bf16.msra.mxu0 0
        %5909 = vmatpush.bf16.msra.mxu0 0
        %5910 = vmatpush.bf16.msra.mxu0 0
        %5911 = vmatpush.bf16.msra.mxu0 0
        %5912 = vmatpush.bf16.msra.mxu0 0
        %5913 = vmatpush.bf16.msra.mxu0 %v5836
        %5914 = vmatmul.bf16.gmra.mxu0 %v5904
        %v5915 = vpop.f32.mrf.mxu0
        %v5916 = vadd.f32 0.0, %v5915
        %v5917 = vpop.f32.mrf.mxu0
        %5918 = vdwg.mxu0
        %5919 = vmatpush.bf16.msra.mxu0 0
        %5920 = vmatpush.bf16.msra.mxu0 0
        %5921 = vmatpush.bf16.msra.mxu0 0
        %5922 = vmatpush.bf16.msra.mxu0 0
        %5923 = vmatpush.bf16.msra.mxu0 0
        %5924 = vmatpush.bf16.msra.mxu0 0
        %5925 = vmatpush.bf16.msra.mxu0 0
        %5926 = vmatpush.bf16.msra.mxu0 %v5839
        %5927 = vmatmul.bf16.gmra.mxu0 %v5904
        %v5928 = vpop.f32.mrf.mxu0
        %v5929 = vadd.f32 0.0, %v5928
        %v5930 = vpop.f32.mrf.mxu0
        %5931 = vdwg.mxu0
        %v5932 = vpack.c.bf16 %v5916, %v5916
        %v5933 = vpack.c.bf16 %v5929, %v5929
        %s5934 = scalar_lea.vmem %s9, 128
        %v5935 = vld [vmem:[%s5934] sm:$0xf]
        %v5936 = vld [vmem:[%s5934 + $0x4] sm:$0xf]
        %v5937 = vld [vmem:[%s5934 + $0x8] sm:$0xf]
        %v5938 = vld [vmem:[%s5934 + $0xc] sm:$0xf]
        %v5939 = vld [vmem:[%s5934 + $0x10] sm:$0xf]
        %v5940 = vld [vmem:[%s5934 + $0x14] sm:$0xf]
        %v5941 = vld [vmem:[%s5934 + $0x18] sm:$0xf]
        %v5942 = vld [vmem:[%s5934 + $0x1c] sm:$0xf]
        %v5943 = vld [vmem:[%s5934 + $0x20] sm:$0xf]
        %v5944 = vld [vmem:[%s5934 + $0x24] sm:$0xf]
        %v5945 = vld [vmem:[%s5934 + $0x28] sm:$0xf]
        %v5946 = vld [vmem:[%s5934 + $0x2c] sm:$0xf]
        %v5947 = vld [vmem:[%s5934 + $0x30] sm:$0xf]
        %v5948 = vld [vmem:[%s5934 + $0x34] sm:$0xf]
        %v5949 = vld [vmem:[%s5934 + $0x38] sm:$0xf]
        %v5950 = vld [vmem:[%s5934 + $0x3c] sm:$0xf]
        %v5951 = vld [vmem:[%s5934 + $0x40] sm:$0xf]
        %v5952 = vld [vmem:[%s5934 + $0x44] sm:$0xf]
        %v5953 = vld [vmem:[%s5934 + $0x48] sm:$0xf]
        %v5954 = vld [vmem:[%s5934 + $0x4c] sm:$0xf]
        %v5955 = vld [vmem:[%s5934 + $0x50] sm:$0xf]
        %v5956 = vld [vmem:[%s5934 + $0x54] sm:$0xf]
        %v5957 = vld [vmem:[%s5934 + $0x58] sm:$0xf]
        %v5958 = vld [vmem:[%s5934 + $0x5c] sm:$0xf]
        %v5959 = vld [vmem:[%s5934 + $0x60] sm:$0xf]
        %v5960 = vld [vmem:[%s5934 + $0x64] sm:$0xf]
        %v5961 = vld [vmem:[%s5934 + $0x68] sm:$0xf]
        %v5962 = vld [vmem:[%s5934 + $0x6c] sm:$0xf]
        %v5963 = vld [vmem:[%s5934 + $0x70] sm:$0xf]
        %v5964 = vld [vmem:[%s5934 + $0x74] sm:$0xf]
        %v5965 = vld [vmem:[%s5934 + $0x78] sm:$0xf]
        %v5966 = vld [vmem:[%s5934 + $0x7c] sm:$0xf]
        %v5999 = vunpack.c.l.b16 %v5935
        %v6000 = vunpack.c.l.b16 %v5936
        %v6001 = vunpack.c.l.b16 %v5937
        %v6002 = vunpack.c.l.b16 %v5938
        %v6003 = vunpack.c.l.b16 %v5939
        %v6004 = vunpack.c.l.b16 %v5940
        %v6005 = vunpack.c.l.b16 %v5941
        %v6006 = vunpack.c.l.b16 %v5942
        %v6007 = vunpack.c.l.b16 %v5943
        %v6008 = vunpack.c.l.b16 %v5944
        %v6009 = vunpack.c.l.b16 %v5945
        %v6010 = vunpack.c.l.b16 %v5946
        %v6011 = vunpack.c.l.b16 %v5947
        %v6012 = vunpack.c.l.b16 %v5948
        %v6013 = vunpack.c.l.b16 %v5949
        %v6014 = vunpack.c.l.b16 %v5950
        %v6015 = vunpack.c.l.b16 %v5951
        %v6016 = vunpack.c.l.b16 %v5952
        %v6017 = vunpack.c.l.b16 %v5953
        %v6018 = vunpack.c.l.b16 %v5954
        %v6019 = vunpack.c.l.b16 %v5955
        %v6020 = vunpack.c.l.b16 %v5956
        %v6021 = vunpack.c.l.b16 %v5957
        %v6022 = vunpack.c.l.b16 %v5958
        %v6023 = vunpack.c.l.b16 %v5959
        %v6024 = vunpack.c.l.b16 %v5960
        %v6025 = vunpack.c.l.b16 %v5961
        %v6026 = vunpack.c.l.b16 %v5962
        %v6027 = vunpack.c.l.b16 %v5963
        %v6028 = vunpack.c.l.b16 %v5964
        %v6029 = vunpack.c.l.b16 %v5965
        %v6030 = vunpack.c.l.b16 %v5966
        %v6031 = vpack.c.b16 %v6000, %v5999
        %v6032 = vpack.c.b16 %v6002, %v6001
        %v6033 = vpack.c.b16 %v6004, %v6003
        %v6034 = vpack.c.b16 %v6006, %v6005
        %v6035 = vpack.c.b16 %v6008, %v6007
        %v6036 = vpack.c.b16 %v6010, %v6009
        %v6037 = vpack.c.b16 %v6012, %v6011
        %v6038 = vpack.c.b16 %v6014, %v6013
        %v6039 = vpack.c.b16 %v6016, %v6015
        %v6040 = vpack.c.b16 %v6018, %v6017
        %v6041 = vpack.c.b16 %v6020, %v6019
        %v6042 = vpack.c.b16 %v6022, %v6021
        %v6043 = vpack.c.b16 %v6024, %v6023
        %v6044 = vpack.c.b16 %v6026, %v6025
        %v6045 = vpack.c.b16 %v6028, %v6027
        %v6046 = vpack.c.b16 %v6030, %v6029
        %6063 = vmatpush.bf16.msra.mxu0 %v6038
        %6064 = vmatpush.bf16.msra.mxu0 %v6037
        %6065 = vmatpush.bf16.msra.mxu0 %v6036
        %6066 = vmatpush.bf16.msra.mxu0 %v6035
        %6067 = vmatpush.bf16.msra.mxu0 %v6034
        %6068 = vmatpush.bf16.msra.mxu0 %v6033
        %6069 = vmatpush.bf16.msra.mxu0 %v6032
        %6070 = vmatpush.bf16.msra.mxu0 %v6031
        %6071 = vmatmul.bf16.gmra.mxu0 %v5932
        %v6072 = vpop.f32.mrf.mxu0
        %v6073 = vadd.f32 0.0, %v6072
        %v6074 = vpop.f32.mrf.mxu0
        %6075 = vdwg.mxu0
        %6076 = vmatpush.bf16.msra.mxu0 %v6046
        %6077 = vmatpush.bf16.msra.mxu0 %v6045
        %6078 = vmatpush.bf16.msra.mxu0 %v6044
        %6079 = vmatpush.bf16.msra.mxu0 %v6043
        %6080 = vmatpush.bf16.msra.mxu0 %v6042
        %6081 = vmatpush.bf16.msra.mxu0 %v6041
        %6082 = vmatpush.bf16.msra.mxu0 %v6040
        %6083 = vmatpush.bf16.msra.mxu0 %v6039
        %6084 = vmatmul.bf16.gmra.mxu0 %v5933
        %v6085 = vpop.f32.mrf.mxu0
        %v6086 = vadd.f32 %v6073, %v6085
        %v6087 = vpop.f32.mrf.mxu0
        %6088 = vdwg.mxu0
        %v6121 = vunpack.c.l.b16 %v5869
        %v6122 = vunpack.c.l.b16 %v5870
        %v6123 = vunpack.c.l.b16 %v5871
        %v6124 = vunpack.c.l.b16 %v5872
        %v6125 = vunpack.c.l.b16 %v5873
        %v6126 = vunpack.c.l.b16 %v5874
        %v6127 = vunpack.c.l.b16 %v5875
        %v6128 = vunpack.c.l.b16 %v5876
        %v6129 = vunpack.c.l.b16 %v5877
        %v6130 = vunpack.c.l.b16 %v5878
        %v6131 = vunpack.c.l.b16 %v5879
        %v6132 = vunpack.c.l.b16 %v5880
        %v6133 = vunpack.c.l.b16 %v5881
        %v6134 = vunpack.c.l.b16 %v5882
        %v6135 = vunpack.c.l.b16 %v5883
        %v6136 = vunpack.c.l.b16 %v5884
        %v6137 = vunpack.c.l.b16 %v5885
        %v6138 = vunpack.c.l.b16 %v5886
        %v6139 = vunpack.c.l.b16 %v5887
        %v6140 = vunpack.c.l.b16 %v5888
        %v6141 = vunpack.c.l.b16 %v5889
        %v6142 = vunpack.c.l.b16 %v5890
        %v6143 = vunpack.c.l.b16 %v5891
        %v6144 = vunpack.c.l.b16 %v5892
        %v6145 = vunpack.c.l.b16 %v5893
        %v6146 = vunpack.c.l.b16 %v5894
        %v6147 = vunpack.c.l.b16 %v5895
        %v6148 = vunpack.c.l.b16 %v5896
        %v6149 = vunpack.c.l.b16 %v5897
        %v6150 = vunpack.c.l.b16 %v5898
        %v6151 = vunpack.c.l.b16 %v5899
        %v6152 = vunpack.c.l.b16 %v5900
        %v6153 = vpack.c.b16 %v6122, %v6121
        %v6154 = vpack.c.b16 %v6124, %v6123
        %v6155 = vpack.c.b16 %v6126, %v6125
        %v6156 = vpack.c.b16 %v6128, %v6127
        %v6157 = vpack.c.b16 %v6130, %v6129
        %v6158 = vpack.c.b16 %v6132, %v6131
        %v6159 = vpack.c.b16 %v6134, %v6133
        %v6160 = vpack.c.b16 %v6136, %v6135
        %v6161 = vpack.c.b16 %v6138, %v6137
        %v6162 = vpack.c.b16 %v6140, %v6139
        %v6163 = vpack.c.b16 %v6142, %v6141
        %v6164 = vpack.c.b16 %v6144, %v6143
        %v6165 = vpack.c.b16 %v6146, %v6145
        %v6166 = vpack.c.b16 %v6148, %v6147
        %v6167 = vpack.c.b16 %v6150, %v6149
        %v6168 = vpack.c.b16 %v6152, %v6151
        %6185 = vmatpush.bf16.msra.mxu0 %v6160
        %6186 = vmatpush.bf16.msra.mxu0 %v6159
        %6187 = vmatpush.bf16.msra.mxu0 %v6158
        %6188 = vmatpush.bf16.msra.mxu0 %v6157
        %6189 = vmatpush.bf16.msra.mxu0 %v6156
        %6190 = vmatpush.bf16.msra.mxu0 %v6155
        %6191 = vmatpush.bf16.msra.mxu0 %v6154
        %6192 = vmatpush.bf16.msra.mxu0 %v6153
        %6193 = vmatmul.bf16.gmra.mxu0 %v5867
        %v6194 = vpop.f32.mrf.mxu0
        %v6195 = vadd.f32 %v6086, %v6194
        %v6196 = vpop.f32.mrf.mxu0
        %6197 = vdwg.mxu0
        %6198 = vmatpush.bf16.msra.mxu0 %v6168
        %6199 = vmatpush.bf16.msra.mxu0 %v6167
        %6200 = vmatpush.bf16.msra.mxu0 %v6166
        %6201 = vmatpush.bf16.msra.mxu0 %v6165
        %6202 = vmatpush.bf16.msra.mxu0 %v6164
        %6203 = vmatpush.bf16.msra.mxu0 %v6163
        %6204 = vmatpush.bf16.msra.mxu0 %v6162
        %6205 = vmatpush.bf16.msra.mxu0 %v6161
        %6206 = vmatmul.bf16.gmra.mxu0 %v5868
        %v6207 = vpop.f32.mrf.mxu0
        %v6208 = vadd.f32 %v6195, %v6207
        %v6209 = vpop.f32.mrf.mxu0
        %6210 = vdwg.mxu0
        %s6211 = scalar_lea.vmem %s8, 2
        %v6212 = vld [vmem:[%s6211] sm:$0x1]
        %v6214 = vsel %vm5830, %v6212, 0
        %6216 = vmatpush.bf16.msra.mxu0 0
        %6217 = vmatpush.bf16.msra.mxu0 0
        %6218 = vmatpush.bf16.msra.mxu0 0
        %6219 = vmatpush.bf16.msra.mxu0 0
        %6220 = vmatpush.bf16.msra.mxu0 0
        %6221 = vmatpush.bf16.msra.mxu0 0
        %6222 = vmatpush.bf16.msra.mxu0 0
        %6223 = vmatpush.bf16.msra.mxu0 %v5836
        %6224 = vmatmul.bf16.gmra.mxu0 %v6214
        %v6225 = vpop.f32.mrf.mxu0
        %v6226 = vadd.f32 0.0, %v6225
        %v6227 = vpop.f32.mrf.mxu0
        %6228 = vdwg.mxu0
        %6229 = vmatpush.bf16.msra.mxu0 0
        %6230 = vmatpush.bf16.msra.mxu0 0
        %6231 = vmatpush.bf16.msra.mxu0 0
        %6232 = vmatpush.bf16.msra.mxu0 0
        %6233 = vmatpush.bf16.msra.mxu0 0
        %6234 = vmatpush.bf16.msra.mxu0 0
        %6235 = vmatpush.bf16.msra.mxu0 0
        %6236 = vmatpush.bf16.msra.mxu0 %v5839
        %6237 = vmatmul.bf16.gmra.mxu0 %v6214
        %v6238 = vpop.f32.mrf.mxu0
        %v6239 = vadd.f32 0.0, %v6238
        %v6240 = vpop.f32.mrf.mxu0
        %6241 = vdwg.mxu0
        %v6242 = vpack.c.bf16 %v6226, %v6226
        %v6243 = vpack.c.bf16 %v6239, %v6239
        %s6244 = scalar_lea.vmem %s9, 256
        %v6245 = vld [vmem:[%s6244] sm:$0xf]
        %v6246 = vld [vmem:[%s6244 + $0x4] sm:$0xf]
        %v6247 = vld [vmem:[%s6244 + $0x8] sm:$0xf]
        %v6248 = vld [vmem:[%s6244 + $0xc] sm:$0xf]
        %v6249 = vld [vmem:[%s6244 + $0x10] sm:$0xf]
        %v6250 = vld [vmem:[%s6244 + $0x14] sm:$0xf]
        %v6251 = vld [vmem:[%s6244 + $0x18] sm:$0xf]
        %v6252 = vld [vmem:[%s6244 + $0x1c] sm:$0xf]
        %v6253 = vld [vmem:[%s6244 + $0x20] sm:$0xf]
        %v6254 = vld [vmem:[%s6244 + $0x24] sm:$0xf]
        %v6255 = vld [vmem:[%s6244 + $0x28] sm:$0xf]
        %v6256 = vld [vmem:[%s6244 + $0x2c] sm:$0xf]
        %v6257 = vld [vmem:[%s6244 + $0x30] sm:$0xf]
        %v6258 = vld [vmem:[%s6244 + $0x34] sm:$0xf]
        %v6259 = vld [vmem:[%s6244 + $0x38] sm:$0xf]
        %v6260 = vld [vmem:[%s6244 + $0x3c] sm:$0xf]
        %v6261 = vld [vmem:[%s6244 + $0x40] sm:$0xf]
        %v6262 = vld [vmem:[%s6244 + $0x44] sm:$0xf]
        %v6263 = vld [vmem:[%s6244 + $0x48] sm:$0xf]
        %v6264 = vld [vmem:[%s6244 + $0x4c] sm:$0xf]
        %v6265 = vld [vmem:[%s6244 + $0x50] sm:$0xf]
        %v6266 = vld [vmem:[%s6244 + $0x54] sm:$0xf]
        %v6267 = vld [vmem:[%s6244 + $0x58] sm:$0xf]
        %v6268 = vld [vmem:[%s6244 + $0x5c] sm:$0xf]
        %v6269 = vld [vmem:[%s6244 + $0x60] sm:$0xf]
        %v6270 = vld [vmem:[%s6244 + $0x64] sm:$0xf]
        %v6271 = vld [vmem:[%s6244 + $0x68] sm:$0xf]
        %v6272 = vld [vmem:[%s6244 + $0x6c] sm:$0xf]
        %v6273 = vld [vmem:[%s6244 + $0x70] sm:$0xf]
        %v6274 = vld [vmem:[%s6244 + $0x74] sm:$0xf]
        %v6275 = vld [vmem:[%s6244 + $0x78] sm:$0xf]
        %v6276 = vld [vmem:[%s6244 + $0x7c] sm:$0xf]
        %v6309 = vunpack.c.l.b16 %v6245
        %v6310 = vunpack.c.l.b16 %v6246
        %v6311 = vunpack.c.l.b16 %v6247
        %v6312 = vunpack.c.l.b16 %v6248
        %v6313 = vunpack.c.l.b16 %v6249
        %v6314 = vunpack.c.l.b16 %v6250
        %v6315 = vunpack.c.l.b16 %v6251
        %v6316 = vunpack.c.l.b16 %v6252
        %v6317 = vunpack.c.l.b16 %v6253
        %v6318 = vunpack.c.l.b16 %v6254
        %v6319 = vunpack.c.l.b16 %v6255
        %v6320 = vunpack.c.l.b16 %v6256
        %v6321 = vunpack.c.l.b16 %v6257
        %v6322 = vunpack.c.l.b16 %v6258
        %v6323 = vunpack.c.l.b16 %v6259
        %v6324 = vunpack.c.l.b16 %v6260
        %v6325 = vunpack.c.l.b16 %v6261
        %v6326 = vunpack.c.l.b16 %v6262
        %v6327 = vunpack.c.l.b16 %v6263
        %v6328 = vunpack.c.l.b16 %v6264
        %v6329 = vunpack.c.l.b16 %v6265
        %v6330 = vunpack.c.l.b16 %v6266
        %v6331 = vunpack.c.l.b16 %v6267
        %v6332 = vunpack.c.l.b16 %v6268
        %v6333 = vunpack.c.l.b16 %v6269
        %v6334 = vunpack.c.l.b16 %v6270
        %v6335 = vunpack.c.l.b16 %v6271
        %v6336 = vunpack.c.l.b16 %v6272
        %v6337 = vunpack.c.l.b16 %v6273
        %v6338 = vunpack.c.l.b16 %v6274
        %v6339 = vunpack.c.l.b16 %v6275
        %v6340 = vunpack.c.l.b16 %v6276
        %v6341 = vpack.c.b16 %v6310, %v6309
        %v6342 = vpack.c.b16 %v6312, %v6311
        %v6343 = vpack.c.b16 %v6314, %v6313
        %v6344 = vpack.c.b16 %v6316, %v6315
        %v6345 = vpack.c.b16 %v6318, %v6317
        %v6346 = vpack.c.b16 %v6320, %v6319
        %v6347 = vpack.c.b16 %v6322, %v6321
        %v6348 = vpack.c.b16 %v6324, %v6323
        %v6349 = vpack.c.b16 %v6326, %v6325
        %v6350 = vpack.c.b16 %v6328, %v6327
        %v6351 = vpack.c.b16 %v6330, %v6329
        %v6352 = vpack.c.b16 %v6332, %v6331
        %v6353 = vpack.c.b16 %v6334, %v6333
        %v6354 = vpack.c.b16 %v6336, %v6335
        %v6355 = vpack.c.b16 %v6338, %v6337
        %v6356 = vpack.c.b16 %v6340, %v6339
        %6373 = vmatpush.bf16.msra.mxu0 %v6348
        %6374 = vmatpush.bf16.msra.mxu0 %v6347
        %6375 = vmatpush.bf16.msra.mxu0 %v6346
        %6376 = vmatpush.bf16.msra.mxu0 %v6345
        %6377 = vmatpush.bf16.msra.mxu0 %v6344
        %6378 = vmatpush.bf16.msra.mxu0 %v6343
        %6379 = vmatpush.bf16.msra.mxu0 %v6342
        %6380 = vmatpush.bf16.msra.mxu0 %v6341
        %6381 = vmatmul.bf16.gmra.mxu0 %v6242
        %v6382 = vpop.f32.mrf.mxu0
        %v6383 = vadd.f32 0.0, %v6382
        %v6384 = vpop.f32.mrf.mxu0
        %6385 = vdwg.mxu0
        %6386 = vmatpush.bf16.msra.mxu0 %v6356
        %6387 = vmatpush.bf16.msra.mxu0 %v6355
        %6388 = vmatpush.bf16.msra.mxu0 %v6354
        %6389 = vmatpush.bf16.msra.mxu0 %v6353
        %6390 = vmatpush.bf16.msra.mxu0 %v6352
        %6391 = vmatpush.bf16.msra.mxu0 %v6351
        %6392 = vmatpush.bf16.msra.mxu0 %v6350
        %6393 = vmatpush.bf16.msra.mxu0 %v6349
        %6394 = vmatmul.bf16.gmra.mxu0 %v6243
        %v6395 = vpop.f32.mrf.mxu0
        %v6396 = vadd.f32 %v6383, %v6395
        %v6397 = vpop.f32.mrf.mxu0
        %6398 = vdwg.mxu0
        %v6399 = vadd.f32 %v6208, %v6396
        %s6400 = scalar_lea.vmem %s8, 3
        %v6401 = vld [vmem:[%s6400] sm:$0x1]
        %v6403 = vsel %vm5830, %v6401, 0
        %6405 = vmatpush.bf16.msra.mxu0 0
        %6406 = vmatpush.bf16.msra.mxu0 0
        %6407 = vmatpush.bf16.msra.mxu0 0
        %6408 = vmatpush.bf16.msra.mxu0 0
        %6409 = vmatpush.bf16.msra.mxu0 0
        %6410 = vmatpush.bf16.msra.mxu0 0
        %6411 = vmatpush.bf16.msra.mxu0 0
        %6412 = vmatpush.bf16.msra.mxu0 %v5836
        %6413 = vmatmul.bf16.gmra.mxu0 %v6403
        %v6414 = vpop.f32.mrf.mxu0
        %v6415 = vadd.f32 0.0, %v6414
        %v6416 = vpop.f32.mrf.mxu0
        %6417 = vdwg.mxu0
        %6418 = vmatpush.bf16.msra.mxu0 0
        %6419 = vmatpush.bf16.msra.mxu0 0
        %6420 = vmatpush.bf16.msra.mxu0 0
        %6421 = vmatpush.bf16.msra.mxu0 0
        %6422 = vmatpush.bf16.msra.mxu0 0
        %6423 = vmatpush.bf16.msra.mxu0 0
        %6424 = vmatpush.bf16.msra.mxu0 0
        %6425 = vmatpush.bf16.msra.mxu0 %v5839
        %6426 = vmatmul.bf16.gmra.mxu0 %v6403
        %v6427 = vpop.f32.mrf.mxu0
        %v6428 = vadd.f32 0.0, %v6427
        %v6429 = vpop.f32.mrf.mxu0
        %6430 = vdwg.mxu0
        %v6431 = vpack.c.bf16 %v6415, %v6415
        %v6432 = vpack.c.bf16 %v6428, %v6428
        %s6433 = scalar_lea.vmem %s9, 384
        %v6434 = vld [vmem:[%s6433] sm:$0xf]
        %v6435 = vld [vmem:[%s6433 + $0x4] sm:$0xf]
        %v6436 = vld [vmem:[%s6433 + $0x8] sm:$0xf]
        %v6437 = vld [vmem:[%s6433 + $0xc] sm:$0xf]
        %v6438 = vld [vmem:[%s6433 + $0x10] sm:$0xf]
        %v6439 = vld [vmem:[%s6433 + $0x14] sm:$0xf]
        %v6440 = vld [vmem:[%s6433 + $0x18] sm:$0xf]
        %v6441 = vld [vmem:[%s6433 + $0x1c] sm:$0xf]
        %v6442 = vld [vmem:[%s6433 + $0x20] sm:$0xf]
        %v6443 = vld [vmem:[%s6433 + $0x24] sm:$0xf]
        %v6444 = vld [vmem:[%s6433 + $0x28] sm:$0xf]
        %v6445 = vld [vmem:[%s6433 + $0x2c] sm:$0xf]
        %v6446 = vld [vmem:[%s6433 + $0x30] sm:$0xf]
        %v6447 = vld [vmem:[%s6433 + $0x34] sm:$0xf]
        %v6448 = vld [vmem:[%s6433 + $0x38] sm:$0xf]
        %v6449 = vld [vmem:[%s6433 + $0x3c] sm:$0xf]
        %v6450 = vld [vmem:[%s6433 + $0x40] sm:$0xf]
        %v6451 = vld [vmem:[%s6433 + $0x44] sm:$0xf]
        %v6452 = vld [vmem:[%s6433 + $0x48] sm:$0xf]
        %v6453 = vld [vmem:[%s6433 + $0x4c] sm:$0xf]
        %v6454 = vld [vmem:[%s6433 + $0x50] sm:$0xf]
        %v6455 = vld [vmem:[%s6433 + $0x54] sm:$0xf]
        %v6456 = vld [vmem:[%s6433 + $0x58] sm:$0xf]
        %v6457 = vld [vmem:[%s6433 + $0x5c] sm:$0xf]
        %v6458 = vld [vmem:[%s6433 + $0x60] sm:$0xf]
        %v6459 = vld [vmem:[%s6433 + $0x64] sm:$0xf]
        %v6460 = vld [vmem:[%s6433 + $0x68] sm:$0xf]
        %v6461 = vld [vmem:[%s6433 + $0x6c] sm:$0xf]
        %v6462 = vld [vmem:[%s6433 + $0x70] sm:$0xf]
        %v6463 = vld [vmem:[%s6433 + $0x74] sm:$0xf]
        %v6464 = vld [vmem:[%s6433 + $0x78] sm:$0xf]
        %v6465 = vld [vmem:[%s6433 + $0x7c] sm:$0xf]
        %v6498 = vunpack.c.l.b16 %v6434
        %v6499 = vunpack.c.l.b16 %v6435
        %v6500 = vunpack.c.l.b16 %v6436
        %v6501 = vunpack.c.l.b16 %v6437
        %v6502 = vunpack.c.l.b16 %v6438
        %v6503 = vunpack.c.l.b16 %v6439
        %v6504 = vunpack.c.l.b16 %v6440
        %v6505 = vunpack.c.l.b16 %v6441
        %v6506 = vunpack.c.l.b16 %v6442
        %v6507 = vunpack.c.l.b16 %v6443
        %v6508 = vunpack.c.l.b16 %v6444
        %v6509 = vunpack.c.l.b16 %v6445
        %v6510 = vunpack.c.l.b16 %v6446
        %v6511 = vunpack.c.l.b16 %v6447
        %v6512 = vunpack.c.l.b16 %v6448
        %v6513 = vunpack.c.l.b16 %v6449
        %v6514 = vunpack.c.l.b16 %v6450
        %v6515 = vunpack.c.l.b16 %v6451
        %v6516 = vunpack.c.l.b16 %v6452
        %v6517 = vunpack.c.l.b16 %v6453
        %v6518 = vunpack.c.l.b16 %v6454
        %v6519 = vunpack.c.l.b16 %v6455
        %v6520 = vunpack.c.l.b16 %v6456
        %v6521 = vunpack.c.l.b16 %v6457
        %v6522 = vunpack.c.l.b16 %v6458
        %v6523 = vunpack.c.l.b16 %v6459
        %v6524 = vunpack.c.l.b16 %v6460
        %v6525 = vunpack.c.l.b16 %v6461
        %v6526 = vunpack.c.l.b16 %v6462
        %v6527 = vunpack.c.l.b16 %v6463
        %v6528 = vunpack.c.l.b16 %v6464
        %v6529 = vunpack.c.l.b16 %v6465
        %v6530 = vpack.c.b16 %v6499, %v6498
        %v6531 = vpack.c.b16 %v6501, %v6500
        %v6532 = vpack.c.b16 %v6503, %v6502
        %v6533 = vpack.c.b16 %v6505, %v6504
        %v6534 = vpack.c.b16 %v6507, %v6506
        %v6535 = vpack.c.b16 %v6509, %v6508
        %v6536 = vpack.c.b16 %v6511, %v6510
        %v6537 = vpack.c.b16 %v6513, %v6512
        %v6538 = vpack.c.b16 %v6515, %v6514
        %v6539 = vpack.c.b16 %v6517, %v6516
        %v6540 = vpack.c.b16 %v6519, %v6518
        %v6541 = vpack.c.b16 %v6521, %v6520
        %v6542 = vpack.c.b16 %v6523, %v6522
        %v6543 = vpack.c.b16 %v6525, %v6524
        %v6544 = vpack.c.b16 %v6527, %v6526
        %v6545 = vpack.c.b16 %v6529, %v6528
        %6562 = vmatpush.bf16.msra.mxu0 %v6537
        %6563 = vmatpush.bf16.msra.mxu0 %v6536
        %6564 = vmatpush.bf16.msra.mxu0 %v6535
        %6565 = vmatpush.bf16.msra.mxu0 %v6534
        %6566 = vmatpush.bf16.msra.mxu0 %v6533
        %6567 = vmatpush.bf16.msra.mxu0 %v6532
        %6568 = vmatpush.bf16.msra.mxu0 %v6531
        %6569 = vmatpush.bf16.msra.mxu0 %v6530
        %6570 = vmatmul.bf16.gmra.mxu0 %v6431
        %v6571 = vpop.f32.mrf.mxu0
        %v6572 = vadd.f32 0.0, %v6571
        %v6573 = vpop.f32.mrf.mxu0
        %6574 = vdwg.mxu0
        %6575 = vmatpush.bf16.msra.mxu0 %v6545
        %6576 = vmatpush.bf16.msra.mxu0 %v6544
        %6577 = vmatpush.bf16.msra.mxu0 %v6543
        %6578 = vmatpush.bf16.msra.mxu0 %v6542
        %6579 = vmatpush.bf16.msra.mxu0 %v6541
        %6580 = vmatpush.bf16.msra.mxu0 %v6540
        %6581 = vmatpush.bf16.msra.mxu0 %v6539
        %6582 = vmatpush.bf16.msra.mxu0 %v6538
        %6583 = vmatmul.bf16.gmra.mxu0 %v6432
        %v6584 = vpop.f32.mrf.mxu0
        %v6585 = vadd.f32 %v6572, %v6584
        %v6586 = vpop.f32.mrf.mxu0
        %6587 = vdwg.mxu0
        %v6588 = vadd.f32 %v6399, %v6585
        %s6589 = scalar_lea.vmem %s8, 4
        %v6590 = vld [vmem:[%s6589] sm:$0x1]
        %v6592 = vsel %vm5830, %v6590, 0
        %6594 = vmatpush.bf16.msra.mxu0 0
        %6595 = vmatpush.bf16.msra.mxu0 0
        %6596 = vmatpush.bf16.msra.mxu0 0
        %6597 = vmatpush.bf16.msra.mxu0 0
        %6598 = vmatpush.bf16.msra.mxu0 0
        %6599 = vmatpush.bf16.msra.mxu0 0
        %6600 = vmatpush.bf16.msra.mxu0 0
        %6601 = vmatpush.bf16.msra.mxu0 %v5836
        %6602 = vmatmul.bf16.gmra.mxu0 %v6592
        %v6603 = vpop.f32.mrf.mxu0
        %v6604 = vadd.f32 0.0, %v6603
        %v6605 = vpop.f32.mrf.mxu0
        %6606 = vdwg.mxu0
        %6607 = vmatpush.bf16.msra.mxu0 0
        %6608 = vmatpush.bf16.msra.mxu0 0
        %6609 = vmatpush.bf16.msra.mxu0 0
        %6610 = vmatpush.bf16.msra.mxu0 0
        %6611 = vmatpush.bf16.msra.mxu0 0
        %6612 = vmatpush.bf16.msra.mxu0 0
        %6613 = vmatpush.bf16.msra.mxu0 0
        %6614 = vmatpush.bf16.msra.mxu0 %v5839
        %6615 = vmatmul.bf16.gmra.mxu0 %v6592
        %v6616 = vpop.f32.mrf.mxu0
        %v6617 = vadd.f32 0.0, %v6616
        %v6618 = vpop.f32.mrf.mxu0
        %6619 = vdwg.mxu0
        %v6620 = vpack.c.bf16 %v6604, %v6604
        %v6621 = vpack.c.bf16 %v6617, %v6617
        %s6622 = scalar_lea.vmem %s9, 512
        %v6623 = vld [vmem:[%s6622] sm:$0xf]
        %v6624 = vld [vmem:[%s6622 + $0x4] sm:$0xf]
        %v6625 = vld [vmem:[%s6622 + $0x8] sm:$0xf]
        %v6626 = vld [vmem:[%s6622 + $0xc] sm:$0xf]
        %v6627 = vld [vmem:[%s6622 + $0x10] sm:$0xf]
        %v6628 = vld [vmem:[%s6622 + $0x14] sm:$0xf]
        %v6629 = vld [vmem:[%s6622 + $0x18] sm:$0xf]
        %v6630 = vld [vmem:[%s6622 + $0x1c] sm:$0xf]
        %v6631 = vld [vmem:[%s6622 + $0x20] sm:$0xf]
        %v6632 = vld [vmem:[%s6622 + $0x24] sm:$0xf]
        %v6633 = vld [vmem:[%s6622 + $0x28] sm:$0xf]
        %v6634 = vld [vmem:[%s6622 + $0x2c] sm:$0xf]
        %v6635 = vld [vmem:[%s6622 + $0x30] sm:$0xf]
        %v6636 = vld [vmem:[%s6622 + $0x34] sm:$0xf]
        %v6637 = vld [vmem:[%s6622 + $0x38] sm:$0xf]
        %v6638 = vld [vmem:[%s6622 + $0x3c] sm:$0xf]
        %v6639 = vld [vmem:[%s6622 + $0x40] sm:$0xf]
        %v6640 = vld [vmem:[%s6622 + $0x44] sm:$0xf]
        %v6641 = vld [vmem:[%s6622 + $0x48] sm:$0xf]
        %v6642 = vld [vmem:[%s6622 + $0x4c] sm:$0xf]
        %v6643 = vld [vmem:[%s6622 + $0x50] sm:$0xf]
        %v6644 = vld [vmem:[%s6622 + $0x54] sm:$0xf]
        %v6645 = vld [vmem:[%s6622 + $0x58] sm:$0xf]
        %v6646 = vld [vmem:[%s6622 + $0x5c] sm:$0xf]
        %v6647 = vld [vmem:[%s6622 + $0x60] sm:$0xf]
        %v6648 = vld [vmem:[%s6622 + $0x64] sm:$0xf]
        %v6649 = vld [vmem:[%s6622 + $0x68] sm:$0xf]
        %v6650 = vld [vmem:[%s6622 + $0x6c] sm:$0xf]
        %v6651 = vld [vmem:[%s6622 + $0x70] sm:$0xf]
        %v6652 = vld [vmem:[%s6622 + $0x74] sm:$0xf]
        %v6653 = vld [vmem:[%s6622 + $0x78] sm:$0xf]
        %v6654 = vld [vmem:[%s6622 + $0x7c] sm:$0xf]
        %v6687 = vunpack.c.l.b16 %v6623
        %v6688 = vunpack.c.l.b16 %v6624
        %v6689 = vunpack.c.l.b16 %v6625
        %v6690 = vunpack.c.l.b16 %v6626
        %v6691 = vunpack.c.l.b16 %v6627
        %v6692 = vunpack.c.l.b16 %v6628
        %v6693 = vunpack.c.l.b16 %v6629
        %v6694 = vunpack.c.l.b16 %v6630
        %v6695 = vunpack.c.l.b16 %v6631
        %v6696 = vunpack.c.l.b16 %v6632
        %v6697 = vunpack.c.l.b16 %v6633
        %v6698 = vunpack.c.l.b16 %v6634
        %v6699 = vunpack.c.l.b16 %v6635
        %v6700 = vunpack.c.l.b16 %v6636
        %v6701 = vunpack.c.l.b16 %v6637
        %v6702 = vunpack.c.l.b16 %v6638
        %v6703 = vunpack.c.l.b16 %v6639
        %v6704 = vunpack.c.l.b16 %v6640
        %v6705 = vunpack.c.l.b16 %v6641
        %v6706 = vunpack.c.l.b16 %v6642
        %v6707 = vunpack.c.l.b16 %v6643
        %v6708 = vunpack.c.l.b16 %v6644
        %v6709 = vunpack.c.l.b16 %v6645
        %v6710 = vunpack.c.l.b16 %v6646
        %v6711 = vunpack.c.l.b16 %v6647
        %v6712 = vunpack.c.l.b16 %v6648
        %v6713 = vunpack.c.l.b16 %v6649
        %v6714 = vunpack.c.l.b16 %v6650
        %v6715 = vunpack.c.l.b16 %v6651
        %v6716 = vunpack.c.l.b16 %v6652
        %v6717 = vunpack.c.l.b16 %v6653
        %v6718 = vunpack.c.l.b16 %v6654
        %v6719 = vpack.c.b16 %v6688, %v6687
        %v6720 = vpack.c.b16 %v6690, %v6689
        %v6721 = vpack.c.b16 %v6692, %v6691
        %v6722 = vpack.c.b16 %v6694, %v6693
        %v6723 = vpack.c.b16 %v6696, %v6695
        %v6724 = vpack.c.b16 %v6698, %v6697
        %v6725 = vpack.c.b16 %v6700, %v6699
        %v6726 = vpack.c.b16 %v6702, %v6701
        %v6727 = vpack.c.b16 %v6704, %v6703
        %v6728 = vpack.c.b16 %v6706, %v6705
        %v6729 = vpack.c.b16 %v6708, %v6707
        %v6730 = vpack.c.b16 %v6710, %v6709
        %v6731 = vpack.c.b16 %v6712, %v6711
        %v6732 = vpack.c.b16 %v6714, %v6713
        %v6733 = vpack.c.b16 %v6716, %v6715
        %v6734 = vpack.c.b16 %v6718, %v6717
        %6751 = vmatpush.bf16.msra.mxu0 %v6726
        %6752 = vmatpush.bf16.msra.mxu0 %v6725
        %6753 = vmatpush.bf16.msra.mxu0 %v6724
        %6754 = vmatpush.bf16.msra.mxu0 %v6723
        %6755 = vmatpush.bf16.msra.mxu0 %v6722
        %6756 = vmatpush.bf16.msra.mxu0 %v6721
        %6757 = vmatpush.bf16.msra.mxu0 %v6720
        %6758 = vmatpush.bf16.msra.mxu0 %v6719
        %6759 = vmatmul.bf16.gmra.mxu0 %v6620
        %v6760 = vpop.f32.mrf.mxu0
        %v6761 = vadd.f32 0.0, %v6760
        %v6762 = vpop.f32.mrf.mxu0
        %6763 = vdwg.mxu0
        %6764 = vmatpush.bf16.msra.mxu0 %v6734
        %6765 = vmatpush.bf16.msra.mxu0 %v6733
        %6766 = vmatpush.bf16.msra.mxu0 %v6732
        %6767 = vmatpush.bf16.msra.mxu0 %v6731
        %6768 = vmatpush.bf16.msra.mxu0 %v6730
        %6769 = vmatpush.bf16.msra.mxu0 %v6729
        %6770 = vmatpush.bf16.msra.mxu0 %v6728
        %6771 = vmatpush.bf16.msra.mxu0 %v6727
        %6772 = vmatmul.bf16.gmra.mxu0 %v6621
        %v6773 = vpop.f32.mrf.mxu0
        %v6774 = vadd.f32 %v6761, %v6773
        %v6775 = vpop.f32.mrf.mxu0
        %6776 = vdwg.mxu0
        %v6777 = vadd.f32 %v6588, %v6774
        %v6778 = vld [vmem:[%s10] sm:$0x1]
        %v6780 = vperm.slane %v6778, 0
        %v6782 = vadd.f32 %v6777, %v6780
        %v6783 = vmax.f32 %v6782, 0.0
        %v6784 = vld [vmem:[%s11] sm:$0xff]
        %v6785 = vld [vmem:[%s11 + $0x8] sm:$0xff]
        %s6786 = scalar_lea.vmem %s11, 16
        %v6787 = vld [vmem:[%s6786] sm:$0xff]
        %v6788 = vld [vmem:[%s6786 + $0x8] sm:$0xff]
        %v6790 = vrot.slane %v6783, 1
        %v6791 = vsel %vm3052, %v6790, 0
        %6793 = vmatpush.msra.mxu0 0.0
        %6794 = vmatpush.msra.mxu0 0.0
        %6795 = vmatpush.msra.mxu0 0.0
        %6796 = vmatpush.msra.mxu0 0.0
        %6797 = vmatpush.msra.mxu0 0.0
        %6798 = vmatpush.msra.mxu0 0.0
        %6799 = vmatpush.msra.mxu0 0.0
        %6800 = vmatpush.msra.mxu0 0.0
        %6801 = vmatpush.msra.mxu0 0.0
        %6802 = vmatpush.msra.mxu0 0.0
        %6803 = vmatpush.msra.mxu0 0.0
        %6804 = vmatpush.msra.mxu0 0.0
        %6805 = vmatpush.msra.mxu0 0.0
        %6806 = vmatpush.msra.mxu0 0.0
        %6807 = vmatpush.msra.mxu0 %v6788
        %6808 = vmatpush.msra.mxu0 %v6787
        %6809 = vmatmul.f32.gmra.mxu0 %v6791
        %v6810 = vpop.f32.mrf.mxu0
        %v6811 = vadd.f32 0.0, %v6810
        %6812 = vdwg.mxu0
        %v6813 = vsel %vm3052, %v6783, 0
        %6815 = vmatpush.msra.mxu0 0.0
        %6816 = vmatpush.msra.mxu0 0.0
        %6817 = vmatpush.msra.mxu0 0.0
        %6818 = vmatpush.msra.mxu0 0.0
        %6819 = vmatpush.msra.mxu0 0.0
        %6820 = vmatpush.msra.mxu0 0.0
        %6821 = vmatpush.msra.mxu0 0.0
        %6822 = vmatpush.msra.mxu0 0.0
        %6823 = vmatpush.msra.mxu0 0.0
        %6824 = vmatpush.msra.mxu0 0.0
        %6825 = vmatpush.msra.mxu0 0.0
        %6826 = vmatpush.msra.mxu0 0.0
        %6827 = vmatpush.msra.mxu0 0.0
        %6828 = vmatpush.msra.mxu0 0.0
        %6829 = vmatpush.msra.mxu0 %v6785
        %6830 = vmatpush.msra.mxu0 %v6784
        %6831 = vmatmul.f32.gmra.mxu0 %v6813
        %v6832 = vpop.f32.mrf.mxu0
        %v6833 = vadd.f32 %v6811, %v6832
        %6834 = vdwg.mxu0
        %v6835 = vld [vmem:[%s12] sm:$0x1]
        %v6836 = vadd.f32 %v6833, %v6835
        %vm6837 = vcmask 57344
        %6838 = vst.msk [vmem:[%s449] sm:$0x1] %vm6837, %v6836
        %s6839 = sand.u32 %s314, 1
        %s6840 = scalar_lea.sflag [#allocation4], %s6839
        %s6841 = sand.u32 %s314, 1
        %s6842 = scalar_lea.vmem [#allocation5], %s6841
        // Predicated region
        $region77: #{forward.1} parent=71 // pred_check
          %p6843 = pneg %p324
        $region78: #{forward.1} parent=71 // pred_check_branch
          %6845 = sbr.rel (%p6843) target = $region80
        $region79: #{forward.1} parent=71 // pred_region
          %6847 = vsyncadd %s6840, 0
          %s6848 = scalar_lea.hbm %s13, %s28
          %s6850 = sshll.u32 %s6842, 4
          %s6851 = int_to_ptr.vmem [resolvable:$true] %s6850
          %s6852 = sshll.u32 %s6848, 4
          %s6853 = int_to_ptr.hbm [resolvable:$true] %s6852
          %6855 = dma.vmem_to_hbm [thread:$0]  %s6851, 16, %s6853, %s6840
        $region80: #{forward.1} parent=71 // pred_fallthru
          _
      $region72: #{forward.1} parent=5 // pred_fallthru
        _
      %p6856 = scmp.le.s32.totalorder 2, %s23
      // Predicated region
      $region81: #{forward.1} parent=5 // pred_check
        %p6857 = pneg %p6856
      $region82: #{forward.1} parent=5 // pred_check_branch
        %6859 = sbr.rel (%p6857) target = $region84
      $region83: #{forward.1} parent=5 // pred_region
        %s6860 = ssub.s32 %s23, 2
        // Predicated region
        $region85: #{forward.1} parent=83 // pred_check
          %p6861 = pneg %p330
        $region86: #{forward.1} parent=83 // pred_check_branch
          %6863 = sbr.rel (%p6861) target = $region88
        $region87: #{forward.1} parent=83 // pred_region
          %s6864 = sand.u32 %s315, 1
          %s6865 = scalar_lea.sflag [#allocation4], %s6864
          %s6866 = sand.u32 %s315, 1
          %s6867 = scalar_lea.vmem [#allocation5], %s6866
          %6869 = dma.done %s6865, 16
        $region88: #{forward.1} parent=83 // pred_fallthru
          _
      $region84: #{forward.1} parent=5 // pred_fallthru
        _
    $region6: #{forward.1} parent=1 // loop_footer
      %s27 = sadd.s32 1, %s23
    $region7: #{forward.1} parent=1 // loop_footer_branch
      %22 = sbr.rel target = $region3
    $region8: #{forward.1} parent=1 // loop_exit
      _
    %6870 = vsyncpa [#allocation3], 1
    %s6871 = scalar_lea.sflag [#allocation3], 1
    %6872 = vsyncpa %s6871, 1
    %6873 = vsyncpa [#allocation4], 1
    %s6874 = scalar_lea.sflag [#allocation4], 1
    %6875 = vsyncpa %s6874, 1

</llo_original>
